<compile_context>
chip_gen: v7x
topology: tpu7x:2x2x1
jax: 0.10.0
libtpu: 0.0.40
codegen_flags: <defaults>
</compile_context>

<pallas_src>
import functools

import numpy as np
import jax
import jax.numpy as jnp
from jax.experimental import pallas as pl
from jax.experimental.pallas import tpu as pltpu
from jax.scipy.special import logsumexp

# ----------------------------- config (small, consistent with the module) --------------
NUM_CLASSES = 5
NUM_TAGS = NUM_CLASSES + 1          # CRF / linear_ner output size
WORD_VOCAB, POS_VOCAB, CHAR_VOCAB = 50, 20, 30
WORD_DIM, TAG_DIM, CHAR_DIM = 16, 16, 16
CHAR_CNN_OUT = 8
CNN_K = 5
HIDDEN = 32                         # rnn_hidden_size
H2 = 2 * HIDDEN                     # 64  (fwd|bwd stacked hidden)
GATE_W = 8 * HIDDEN                 # 256 (both-direction interleaved gate width)
LINEAR1_OUT = 128
LANE = 128                          # lane-dense padded width for the kernel output
B, S, CLEN = 2, 8, 12               # batch, seq len, chars per word
LOUT = CLEN - CNN_K + 1             # 8 conv output positions
CHAR_PAD = 16                       # per-position CNN output block (8 real + 8 zero lanes)
D0 = WORD_DIM + TAG_DIM + CHAR_CNN_OUT   # 40


# ----------------------------- the fused Pallas kernel ---------------------------------
def fused_kernel(word_ref, tag_ref, char_ref, w_in_ref, w_hh_ref, w_cnn_ref,
                 w_head_ref, bias_ref, o_ref, xg_scr):
    """Fused forward: char CNN -> 2-layer fused-direction BiLSTM -> MLP head.

    Row convention everywhere: r = t*B + b (time-major).
    Gate lanes (width 8H=256): [i_f, i_b, f_f, f_b, g_f, g_b, o_f, o_b], H=32 each.
    """
    f32 = jnp.float32
    dot = functools.partial(jnp.dot, preferred_element_type=f32)
    H = HIDDEN

    # ---- char CNN: ONE (16,192)@(192,128) matmul; cols = [conv pos l=0..7] x [16-lane block].
    y = dot(char_ref[...], w_cnn_ref[...])                          # (T*B, 128)
    cf = y[:, 0:CHAR_PAD]
    for l in range(1, LOUT):                                        # global max-pool over l
        cf = jnp.maximum(cf, y[:, l * CHAR_PAD:(l + 1) * CHAR_PAD])
    cf = cf + bias_ref[4:5, 0:CHAR_PAD]                             # bias after pool (exact)

    # ---- layer-0 input projection: [word | tag | char] weight row blocks, M=16 matmuls.
    xg_scr[...] = (dot(word_ref[...], w_in_ref[0:16, :])
                   + dot(tag_ref[...], w_in_ref[16:32, :])
                   + dot(cf, w_in_ref[32:48, :])
                   + bias_ref[0:1, :])                              # (16, 512)

    def bilstm_layer(whh):
        # Fused fwd+bwd recurrence over the projections currently in xg_scr.
        # Step s runs fwd time s and bwd time S-1-s together; one (2,64)@(64,256) MXU push.
        h = jnp.zeros((B, H2), f32)
        c = jnp.zeros((B, H2), f32)
        hs = []
        for s in range(S):                                          # static unroll, S = 8
            gf = xg_scr[2 * s:2 * s + 2, 0:GATE_W]                  # fwd contrib @ time s
            gb = xg_scr[2 * (S - 1 - s):2 * (S - 1 - s) + 2, GATE_W:2 * GATE_W]
            g = gf + gb + dot(h, whh)                               # (B, 256) interleaved gates
            sg = jax.nn.sigmoid(g)
            tg = jnp.tanh(g)
            c = sg[:, 2 * H:4 * H] * c + sg[:, 0:2 * H] * tg[:, 4 * H:6 * H]
            h = sg[:, 6 * H:8 * H] * jnp.tanh(c)
            hs.append(h)                                            # history stays in vregs
        # re-align to time order: row block t = [h_fwd(t) | h_bwd(t)]
        rows = [jnp.concatenate([hs[t][:, 0:H], hs[S - 1 - t][:, H:H2]], axis=1)
                for t in range(S)]
        return jnp.concatenate(rows, axis=0)                        # (T*B, 2H)

    h0 = bilstm_layer(w_hh_ref[0:H2, :])

    # ---- layer-1 input projection (one M=16 matmul); scratch reused (same-ref ordering).
    xg_scr[...] = dot(h0, w_in_ref[48:112, :]) + bias_ref[1:2, :]
    h1 = bilstm_layer(w_hh_ref[H2:2 * H2, :])

    # ---- MLP head (dropouts = identity); output (16,128) lane+sublane dense.
    hid = dot(h1, w_head_ref[0:H2, :]) + bias_ref[2:3, 0:LANE]
    o_ref[...] = dot(hid, w_head_ref[H2:H2 + LINEAR1_OUT, :]) + bias_ref[3:4, 0:LANE]


def fused_forward(word_tm, tag_tm, char_tm, kp):
    return pl.pallas_call(
        fused_kernel,
        out_shape=jax.ShapeDtypeStruct((S * B, LANE), jnp.float32),
        scratch_shapes=[pltpu.VMEM((S * B, 2 * GATE_W), jnp.float32)],
    )(word_tm, tag_tm, char_tm, kp["w_in"], kp["w_hh"], kp["w_cnn"],
      kp["w_head"], kp["bias"])


# ----------------------------- CRF (plain JAX; tiny sequential DP, unrolled) ------------
# TODO(synk): CRF Viterbi / forward DP kept in plain JAX (num_tags=6, strictly sequential);
#             scans are fully unrolled so the XLA tail is a handful of fused ops.
def crf_decode(emissions, start_t, end_t, trans):
    """torchcrf._viterbi_decode with an all-ones mask (decode() called without mask)."""
    em = jnp.transpose(emissions, (1, 0, 2)).astype(jnp.float32)   # (T, B, K)
    score0 = start_t[None, :] + em[0]                              # (B, K)

    def fwd(score, e_t):
        nxt = score[:, :, None] + trans[None, :, :] + e_t[:, None, :]
        return jnp.max(nxt, axis=1), jnp.argmax(nxt, axis=1)

    score, hist = jax.lax.scan(fwd, score0, em[1:], unroll=True)   # hist: (T-1, B, K)
    score = score + end_t[None, :]
    last = jnp.argmax(score, axis=1)                               # (B,)

    def bwd(next_tag, idx_t):
        tag = jnp.take_along_axis(idx_t, next_tag[:, None], axis=1)[:, 0]
        return tag, tag

    _, tags_prefix = jax.lax.scan(bwd, last, hist, reverse=True, unroll=True)
    tags = jnp.concatenate([tags_prefix, last[None, :]], axis=0)   # (T, B)
    return tags.T                                                  # (B, T)


def crf_neg_log_likelihood(emissions, tags, mask, start_t, end_t, trans):
    """-1 * CRF(emissions, tags, mask, reduction='token_mean') as in torchcrf."""
    em = jnp.transpose(emissions, (1, 0, 2)).astype(jnp.float32)   # (T, B, K)
    tg = tags.T                                                    # (T, B)
    mk = mask.T.astype(jnp.float32)                                # (T, B)
    Bb = em.shape[1]
    barange = jnp.arange(Bb)

    # numerator: score of the given tag path
    score = start_t[tg[0]] + em[0, barange, tg[0]]

    def num_step(s, inp):
        e_t, t_t, t_prev, m_t = inp
        s = s + (trans[t_prev, t_t] + e_t[barange, t_t]) * m_t
        return s, None

    score, _ = jax.lax.scan(num_step, score, (em[1:], tg[1:], tg[:-1], mk[1:]), unroll=True)
    seq_ends = jnp.sum(mask.astype(jnp.int32), axis=1) - 1
    last_tags = tg[seq_ends, barange]
    numerator = score + end_t[last_tags]

    # denominator: forward algorithm (log partition)
    dscore = start_t[None, :] + em[0]

    def den_step(s, inp):
        e_t, m_t = inp
        nxt = s[:, :, None] + trans[None, :, :] + e_t[:, None, :]
        nxt = logsumexp(nxt, axis=1)
        return jnp.where(m_t[:, None] > 0, nxt, s), None

    dscore, _ = jax.lax.scan(den_step, dscore, (em[1:], mk[1:]), unroll=True)
    dscore = dscore + end_t[None, :]
    denominator = logsumexp(dscore, axis=1)

    llh = numerator - denominator
    return -(jnp.sum(llh) / jnp.sum(mk))


# ----------------------------- parameter init (deterministic, synthetic) ----------------
def init_params(key):
    def u(k, shape, scale=0.1):
        return jax.random.uniform(k, shape, jnp.float32, -scale, scale)

    ks = iter(jax.random.split(key, 40))
    p = {}
    p["word_embed"] = u(next(ks), (WORD_VOCAB, WORD_DIM), 1.0)
    p["pos_embed"] = u(next(ks), (POS_VOCAB, TAG_DIM), 1.0)
    p["char_embed"] = u(next(ks), (CHAR_VOCAB, CHAR_DIM), 1.0)
    # conv1d: weight (O, Cin, K), bias (O,)
    p["conv_w"] = u(next(ks), (CHAR_CNN_OUT, CHAR_DIM, CNN_K))
    p["conv_b"] = u(next(ks), (CHAR_CNN_OUT,))
    # 2-layer bidirectional LSTM; PyTorch param shapes, gate order i,f,g,o
    lstm = {}
    in_sizes = [D0, 2 * HIDDEN]
    for layer in range(2):
        for dirn in ("fwd", "bwd"):
            lstm[(layer, dirn)] = dict(
                w_ih=u(next(ks), (4 * HIDDEN, in_sizes[layer])),
                w_hh=u(next(ks), (4 * HIDDEN, HIDDEN)),
                b_ih=u(next(ks), (4 * HIDDEN,)),
                b_hh=u(next(ks), (4 * HIDDEN,)),
            )
    p["lstm"] = lstm
    p["lin1_w"] = u(next(ks), (LINEAR1_OUT, 2 * HIDDEN))
    p["lin1_b"] = u(next(ks), (LINEAR1_OUT,))
    p["lin2_w"] = u(next(ks), (NUM_TAGS, LINEAR1_OUT))
    p["lin2_b"] = u(next(ks), (NUM_TAGS,))
    # CRF params (torchcrf: uniform(-0.1, 0.1))
    p["crf_start"] = u(next(ks), (NUM_TAGS,))
    p["crf_end"] = u(next(ks), (NUM_TAGS,))
    p["crf_trans"] = u(next(ks), (NUM_TAGS, NUM_TAGS))
    return p


def prepare_kernel_params(p):
    """One-time host-side layout prep: interleaved-gate LSTM weights, im2col-folded conv
    weight (PyTorch `.view` quirk baked into the row index), and packed operand blobs."""
    H = HIDDEN

    def interleave_ih(w_f, w_b):
        # torch (4H, D) fwd/bwd -> (D, 512): cols [0:256] fwd contribution placed in fwd
        # slots of the interleaved layout, cols [256:512] bwd contribution in bwd slots.
        w_f = np.asarray(w_f, np.float32); w_b = np.asarray(w_b, np.float32)
        d = w_f.shape[1]
        out = np.zeros((d, 2 * GATE_W), np.float32)
        for q in range(4):                                   # gate order i,f,g,o
            out[:, q * 2 * H:q * 2 * H + H] = w_f[q * H:(q + 1) * H, :].T
            out[:, GATE_W + q * 2 * H + H:GATE_W + (q + 1) * 2 * H] = w_b[q * H:(q + 1) * H, :].T
        return out

    def interleave_hh(w_f, w_b):
        # block matrix (2H, 8H): rows 0:H = h_fwd -> fwd slots, rows H:2H = h_bwd -> bwd slots.
        w_f = np.asarray(w_f, np.float32); w_b = np.asarray(w_b, np.float32)
        out = np.zeros((H2, GATE_W), np.float32)
        for q in range(4):
            out[0:H, q * 2 * H:q * 2 * H + H] = w_f[q * H:(q + 1) * H, :].T
            out[H:H2, q * 2 * H + H:(q + 1) * 2 * H] = w_b[q * H:(q + 1) * H, :].T
        return out

    def interleave_b(b_f, b_b):
        b_f = np.asarray(b_f, np.float32); b_b = np.asarray(b_b, np.float32)
        out = np.zeros((2 * GATE_W,), np.float32)
        for q in range(4):
            out[q * 2 * H:q * 2 * H + H] = b_f[q * H:(q + 1) * H]
            out[GATE_W + q * 2 * H + H:GATE_W + (q + 1) * 2 * H] = b_b[q * H:(q + 1) * H]
        return out

    l0f, l0b = p["lstm"][(0, "fwd")], p["lstm"][(0, "bwd")]
    l1f, l1b = p["lstm"][(1, "fwd")], p["lstm"][(1, "bwd")]

    # layer-0 W_ih (40,512) repacked to (48,512): rows [word 16 | tag 16 | char 8 + 8 zero]
    w0 = interleave_ih(l0f["w_ih"], l0b["w_ih"])
    w0p = np.zeros((48, 2 * GATE_W), np.float32)
    w0p[0:D0] = w0
    w1 = interleave_ih(l1f["w_ih"], l1b["w_ih"])                    # (64, 512)
    w_in = np.concatenate([w0p, w1], axis=0)                        # (112, 512)

    w_hh = np.concatenate([interleave_hh(l0f["w_hh"], l0b["w_hh"]),
                           interleave_hh(l1f["w_hh"], l1b["w_hh"])], axis=0)   # (128, 256)

    # conv1d folded to one (CLEN*CHAR_DIM, LOUT*CHAR_PAD) = (192,128) matrix.  Row index
    # bakes in the PyTorch `.view(B*S, CHAR_DIM, CLEN)` reinterpretation of the contiguous
    # per-word (CLEN, CHAR_DIM) block: viewed[c, j] = flat[c*CLEN + j].
    cw = np.asarray(p["conv_w"], np.float32)                        # (O, Cin, K)
    w_cnn = np.zeros((CLEN * CHAR_DIM, LOUT * CHAR_PAD), np.float32)
    for o in range(CHAR_CNN_OUT):
        for c in range(CHAR_DIM):
            for k in range(CNN_K):
                for l in range(LOUT):
                    w_cnn[c * CLEN + l + k, l * CHAR_PAD + o] = cw[o, c, k]

    # head: [linear1.T (64,128) ; linear_ner.T zero-padded to (128,128)]
    w_head = np.zeros((H2 + LINEAR1_OUT, LANE), np.float32)
    w_head[0:H2] = np.asarray(p["lin1_w"], np.float32).T
    w_head[H2:H2 + LINEAR1_OUT, 0:NUM_TAGS] = np.asarray(p["lin2_w"], np.float32).T

    # bias blob (8, 512): rows = [b0 (ih+hh, interleaved), b1, lin1_b, lin2_b(pad), cnn_b(pad)]
    bias = np.zeros((8, 2 * GATE_W), np.float32)
    bias[0] = interleave_b(np.asarray(l0f["b_ih"]) + np.asarray(l0f["b_hh"]),
                           np.asarray(l0b["b_ih"]) + np.asarray(l0b["b_hh"]))
    bias[1] = interleave_b(np.asarray(l1f["b_ih"]) + np.asarray(l1f["b_hh"]),
                           np.asarray(l1b["b_ih"]) + np.asarray(l1b["b_hh"]))
    bias[2, 0:LINEAR1_OUT] = np.asarray(p["lin1_b"], np.float32)
    bias[3, 0:NUM_TAGS] = np.asarray(p["lin2_b"], np.float32)
    bias[4, 0:CHAR_CNN_OUT] = np.asarray(p["conv_b"], np.float32)

    return {"w_in": jnp.asarray(w_in), "w_hh": jnp.asarray(w_hh),
            "w_cnn": jnp.asarray(w_cnn), "w_head": jnp.asarray(w_head),
            "bias": jnp.asarray(bias)}


# ----------------------------- forward pass ---------------------------------------------
def entity_extraction_forward(params, kparams, x_word, x_pos, x_char, mask, y_word,
                              train=True):
    batch_size, seq_len = x_word.shape

    # Embedding gathers done directly in time-major order (row r = t*B + b) so the kernel
    # needs no transpose/concat glue.  Dropouts are identity (inference mode).
    word_tm = params["word_embed"][x_word.T].reshape(seq_len * batch_size,
                                                     WORD_DIM).astype(jnp.float32)
    tag_tm = params["pos_embed"][x_pos.T].reshape(seq_len * batch_size,
                                                  TAG_DIM).astype(jnp.float32)
    # PyTorch quirk `char_out.view(B*S, CHAR_DIM, CLEN)` is a reshape of each word's
    # contiguous (CLEN, CHAR_DIM) block; we pass that raw flat block and the
    # reinterpretation is baked into the folded conv weight in prepare_kernel_params.
    char_tm = params["char_embed"][jnp.transpose(x_char, (1, 0, 2))].reshape(
        seq_len * batch_size, CLEN * CHAR_DIM).astype(jnp.float32)

    # Single fused Pallas kernel: char CNN -> 2-layer BiLSTM -> MLP head.
    out_flat = fused_forward(word_tm, tag_tm, char_tm, kparams)      # (T*B, 128)
    ner_out = out_flat.reshape(seq_len, batch_size, LANE).transpose(1, 0, 2)[:, :, :NUM_TAGS]

    # CRF
    crf_decoded = crf_decode(ner_out, params["crf_start"], params["crf_end"],
                             params["crf_trans"])
    crf_loss = None
    if train:
        crf_loss = crf_neg_log_likelihood(ner_out, y_word, mask,
                                          params["crf_start"], params["crf_end"],
                                          params["crf_trans"])
    return ner_out, crf_decoded, crf_loss


# ----------------------------- main ------------------------------------------------------
if __name__ == "__main__":
    key = jax.random.PRNGKey(0)
    kp_, k1, k2, k3, k4 = jax.random.split(key, 5)

    params = init_params(kp_)
    kparams = prepare_kernel_params(params)            # one-time layout prep (hoisted)

    x_word = jax.random.randint(k1, (B, S), 0, WORD_VOCAB, dtype=jnp.int32)
    x_pos = jax.random.randint(k2, (B, S), 0, POS_VOCAB, dtype=jnp.int32)
    x_char = jax.random.randint(k3, (B, S, CLEN), 0, CHAR_VOCAB, dtype=jnp.int32)
    lengths = jnp.array([S, S - 2], dtype=jnp.int32)
    mask = jnp.arange(S)[None, :] < lengths[:, None]                # (B, S) bool, col 0 True
    y_word = jax.random.randint(k4, (B, S), 0, NUM_TAGS, dtype=jnp.int32)

    fwd = jax.jit(functools.partial(entity_extraction_forward, train=True))
    ner_out, decoded, loss = fwd(params, kparams, x_word, x_pos, x_char, mask, y_word)

    jax.block_until_ready(ner_out)
    jax.block_until_ready(decoded)
    jax.block_until_ready(loss)

    assert ner_out.shape == (B, S, NUM_TAGS)
    assert decoded.shape == (B, S)
    assert loss.shape == ()
    assert bool(jnp.isfinite(loss))
    print("KERNEL_OK")
</pallas_src>

<mosaic_0001>
module attributes {stable_mosaic.version = 11 : i64} {
  func.func @fused_kernel(%arg0: memref<16x16xf32, #tpu.memory_space<vmem>>, %arg1: memref<16x16xf32, #tpu.memory_space<vmem>>, %arg2: memref<16x192xf32, #tpu.memory_space<vmem>>, %arg3: memref<112x512xf32, #tpu.memory_space<vmem>>, %arg4: memref<128x256xf32, #tpu.memory_space<vmem>>, %arg5: memref<192x128xf32, #tpu.memory_space<vmem>>, %arg6: memref<192x128xf32, #tpu.memory_space<vmem>>, %arg7: memref<8x512xf32, #tpu.memory_space<vmem>>, %arg8: memref<16x128xf32, #tpu.memory_space<vmem>>, %arg9: memref<16x512xf32, #tpu.memory_space<vmem>>) attributes {dimension_semantics = [], scalar_prefetch = 0 : i64, scratch_operands = 1 : i64, tpu.core_type = #tpu.core_type<tc>} {
    %c0 = arith.constant 0 : index
    %c0_0 = arith.constant 0 : index
    %0 = vector.load %arg2[%c0, %c0_0] : memref<16x192xf32, #tpu.memory_space<vmem>>, vector<16x192xf32>
    %c0_1 = arith.constant 0 : index
    %c0_2 = arith.constant 0 : index
    %1 = vector.load %arg5[%c0_1, %c0_2] : memref<192x128xf32, #tpu.memory_space<vmem>>, vector<192x128xf32>
    %cst = arith.constant dense<0.000000e+00> : vector<16x128xf32>
    %2 = tpu.matmul %0, %1, %cst {dimension_numbers = #tpu.dot_dimension_numbers<[1], [0], [0], [1], [0, 0, 1, 1], [], []>} : vector<16x192xf32>, vector<192x128xf32>, vector<16x128xf32> -> vector<16x128xf32>
    %3 = vector.extract_strided_slice %2 {offsets = [0, 0], sizes = [16, 16], strides = [1, 1]} : vector<16x128xf32> to vector<16x16xf32>
    %4 = vector.extract_strided_slice %2 {offsets = [0, 16], sizes = [16, 16], strides = [1, 1]} : vector<16x128xf32> to vector<16x16xf32>
    %5 = arith.maximumf %3, %4 : vector<16x16xf32>
    %6 = vector.extract_strided_slice %2 {offsets = [0, 32], sizes = [16, 16], strides = [1, 1]} : vector<16x128xf32> to vector<16x16xf32>
    %7 = arith.maximumf %5, %6 : vector<16x16xf32>
    %8 = vector.extract_strided_slice %2 {offsets = [0, 48], sizes = [16, 16], strides = [1, 1]} : vector<16x128xf32> to vector<16x16xf32>
    %9 = arith.maximumf %7, %8 : vector<16x16xf32>
    %10 = vector.extract_strided_slice %2 {offsets = [0, 64], sizes = [16, 16], strides = [1, 1]} : vector<16x128xf32> to vector<16x16xf32>
    %11 = arith.maximumf %9, %10 : vector<16x16xf32>
    %12 = vector.extract_strided_slice %2 {offsets = [0, 80], sizes = [16, 16], strides = [1, 1]} : vector<16x128xf32> to vector<16x16xf32>
    %13 = arith.maximumf %11, %12 : vector<16x16xf32>
    %14 = vector.extract_strided_slice %2 {offsets = [0, 96], sizes = [16, 16], strides = [1, 1]} : vector<16x128xf32> to vector<16x16xf32>
    %15 = arith.maximumf %13, %14 : vector<16x16xf32>
    %16 = vector.extract_strided_slice %2 {offsets = [0, 112], sizes = [16, 16], strides = [1, 1]} : vector<16x128xf32> to vector<16x16xf32>
    %17 = arith.maximumf %15, %16 : vector<16x16xf32>
    %c4 = arith.constant 4 : index
    %c0_3 = arith.constant 0 : index
    %18 = vector.load %arg7[%c4, %c0_3] : memref<8x512xf32, #tpu.memory_space<vmem>>, vector<1x16xf32>
    %19 = vector.broadcast %18 : vector<1x16xf32> to vector<16x16xf32>
    %20 = arith.addf %17, %19 : vector<16x16xf32>
    %c0_4 = arith.constant 0 : index
    %c0_5 = arith.constant 0 : index
    %21 = vector.load %arg0[%c0_4, %c0_5] : memref<16x16xf32, #tpu.memory_space<vmem>>, vector<16x16xf32>
    %c0_6 = arith.constant 0 : index
    %c0_7 = arith.constant 0 : index
    %22 = vector.load %arg3[%c0_6, %c0_7] : memref<112x512xf32, #tpu.memory_space<vmem>>, vector<16x512xf32>
    %cst_8 = arith.constant dense<0.000000e+00> : vector<16x512xf32>
    %23 = tpu.matmul %21, %22, %cst_8 {dimension_numbers = #tpu.dot_dimension_numbers<[1], [0], [0], [1], [0, 0, 1, 1], [], []>} : vector<16x16xf32>, vector<16x512xf32>, vector<16x512xf32> -> vector<16x512xf32>
    %c0_9 = arith.constant 0 : index
    %c0_10 = arith.constant 0 : index
    %24 = vector.load %arg1[%c0_9, %c0_10] : memref<16x16xf32, #tpu.memory_space<vmem>>, vector<16x16xf32>
    %c16 = arith.constant 16 : index
    %c0_11 = arith.constant 0 : index
    %25 = vector.load %arg3[%c16, %c0_11] : memref<112x512xf32, #tpu.memory_space<vmem>>, vector<16x512xf32>
    %cst_12 = arith.constant dense<0.000000e+00> : vector<16x512xf32>
    %26 = tpu.matmul %24, %25, %cst_12 {dimension_numbers = #tpu.dot_dimension_numbers<[1], [0], [0], [1], [0, 0, 1, 1], [], []>} : vector<16x16xf32>, vector<16x512xf32>, vector<16x512xf32> -> vector<16x512xf32>
    %27 = arith.addf %23, %26 : vector<16x512xf32>
    %c32 = arith.constant 32 : index
    %c0_13 = arith.constant 0 : index
    %28 = vector.load %arg3[%c32, %c0_13] : memref<112x512xf32, #tpu.memory_space<vmem>>, vector<16x512xf32>
    %cst_14 = arith.constant dense<0.000000e+00> : vector<16x512xf32>
    %29 = tpu.matmul %20, %28, %cst_14 {dimension_numbers = #tpu.dot_dimension_numbers<[1], [0], [0], [1], [0, 0, 1, 1], [], []>} : vector<16x16xf32>, vector<16x512xf32>, vector<16x512xf32> -> vector<16x512xf32>
    %30 = arith.addf %27, %29 : vector<16x512xf32>
    %c0_15 = arith.constant 0 : index
    %c0_16 = arith.constant 0 : index
    %31 = vector.load %arg7[%c0_15, %c0_16] : memref<8x512xf32, #tpu.memory_space<vmem>>, vector<1x512xf32>
    %32 = vector.broadcast %31 : vector<1x512xf32> to vector<16x512xf32>
    %33 = arith.addf %30, %32 : vector<16x512xf32>
    %c0_17 = arith.constant 0 : index
    %c0_18 = arith.constant 0 : index
    %34 = vector.load %arg9[%c0_17, %c0_18] : memref<16x512xf32, #tpu.memory_space<vmem>>, vector<16x512xf32>
    tpu.vector_store %arg9[%c0_17, %c0_18], %33 {strides = array<i32>} : memref<16x512xf32, #tpu.memory_space<vmem>>, vector<16x512xf32>,
    %c0_19 = arith.constant 0 : index
    %c0_20 = arith.constant 0 : index
    %35 = vector.load %arg4[%c0_19, %c0_20] : memref<128x256xf32, #tpu.memory_space<vmem>>, vector<64x256xf32>
    %cst_21 = arith.constant 0.000000e+00 : f32
    %36 = vector.broadcast %cst_21 : f32 to vector<2x64xf32>
    %cst_22 = arith.constant 0.000000e+00 : f32
    %37 = vector.broadcast %cst_22 : f32 to vector<2x64xf32>
    %c0_23 = arith.constant 0 : index
    %c0_24 = arith.constant 0 : index
    %38 = vector.load %arg9[%c0_23, %c0_24] : memref<16x512xf32, #tpu.memory_space<vmem>>, vector<2x256xf32>
    %c14 = arith.constant 14 : index
    %c256 = arith.constant 256 : index
    %39 = vector.load %arg9[%c14, %c256] : memref<16x512xf32, #tpu.memory_space<vmem>>, vector<2x256xf32>
    %40 = arith.addf %38, %39 : vector<2x256xf32>
    %cst_25 = arith.constant dense<0.000000e+00> : vector<2x256xf32>
    %41 = tpu.matmul %36, %35, %cst_25 {dimension_numbers = #tpu.dot_dimension_numbers<[1], [0], [0], [1], [0, 0, 1, 1], [], []>} : vector<2x64xf32>, vector<64x256xf32>, vector<2x256xf32> -> vector<2x256xf32>
    %42 = arith.addf %40, %41 : vector<2x256xf32>
    %43 = arith.negf %42 : vector<2x256xf32>
    %44 = math.exp %43 : vector<2x256xf32>
    %cst_26 = arith.constant 1.000000e+00 : f32
    %45 = vector.broadcast %cst_26 : f32 to vector<2x256xf32>
    %46 = arith.addf %45, %44 : vector<2x256xf32>
    %47 = arith.divf %45, %46 : vector<2x256xf32>
    %48 = math.tanh %42 : vector<2x256xf32>
    %49 = vector.extract_strided_slice %47 {offsets = [0, 64], sizes = [2, 64], strides = [1, 1]} : vector<2x256xf32> to vector<2x64xf32>
    %50 = arith.mulf %49, %37 : vector<2x64xf32>
    %51 = vector.extract_strided_slice %47 {offsets = [0, 0], sizes = [2, 64], strides = [1, 1]} : vector<2x256xf32> to vector<2x64xf32>
    %52 = vector.extract_strided_slice %48 {offsets = [0, 128], sizes = [2, 64], strides = [1, 1]} : vector<2x256xf32> to vector<2x64xf32>
    %53 = arith.mulf %51, %52 : vector<2x64xf32>
    %54 = arith.addf %50, %53 : vector<2x64xf32>
    %55 = vector.extract_strided_slice %47 {offsets = [0, 192], sizes = [2, 64], strides = [1, 1]} : vector<2x256xf32> to vector<2x64xf32>
    %56 = math.tanh %54 : vector<2x64xf32>
    %57 = arith.mulf %55, %56 : vector<2x64xf32>
    %c2 = arith.constant 2 : index
    %c0_27 = arith.constant 0 : index
    %58 = vector.load %arg9[%c2, %c0_27] : memref<16x512xf32, #tpu.memory_space<vmem>>, vector<2x256xf32>
    %c12 = arith.constant 12 : index
    %c256_28 = arith.constant 256 : index
    %59 = vector.load %arg9[%c12, %c256_28] : memref<16x512xf32, #tpu.memory_space<vmem>>, vector<2x256xf32>
    %60 = arith.addf %58, %59 : vector<2x256xf32>
    %cst_29 = arith.constant dense<0.000000e+00> : vector<2x256xf32>
    %61 = tpu.matmul %57, %35, %cst_29 {dimension_numbers = #tpu.dot_dimension_numbers<[1], [0], [0], [1], [0, 0, 1, 1], [], []>} : vector<2x64xf32>, vector<64x256xf32>, vector<2x256xf32> -> vector<2x256xf32>
    %62 = arith.addf %60, %61 : vector<2x256xf32>
    %63 = arith.negf %62 : vector<2x256xf32>
    %64 = math.exp %63 : vector<2x256xf32>
    %cst_30 = arith.constant 1.000000e+00 : f32
    %65 = vector.broadcast %cst_30 : f32 to vector<2x256xf32>
    %66 = arith.addf %65, %64 : vector<2x256xf32>
    %67 = arith.divf %65, %66 : vector<2x256xf32>
    %68 = math.tanh %62 : vector<2x256xf32>
    %69 = vector.extract_strided_slice %67 {offsets = [0, 64], sizes = [2, 64], strides = [1, 1]} : vector<2x256xf32> to vector<2x64xf32>
    %70 = arith.mulf %69, %54 : vector<2x64xf32>
    %71 = vector.extract_strided_slice %67 {offsets = [0, 0], sizes = [2, 64], strides = [1, 1]} : vector<2x256xf32> to vector<2x64xf32>
    %72 = vector.extract_strided_slice %68 {offsets = [0, 128], sizes = [2, 64], strides = [1, 1]} : vector<2x256xf32> to vector<2x64xf32>
    %73 = arith.mulf %71, %72 : vector<2x64xf32>
    %74 = arith.addf %70, %73 : vector<2x64xf32>
    %75 = vector.extract_strided_slice %67 {offsets = [0, 192], sizes = [2, 64], strides = [1, 1]} : vector<2x256xf32> to vector<2x64xf32>
    %76 = math.tanh %74 : vector<2x64xf32>
    %77 = arith.mulf %75, %76 : vector<2x64xf32>
    %c4_31 = arith.constant 4 : index
    %c0_32 = arith.constant 0 : index
    %78 = vector.load %arg9[%c4_31, %c0_32] : memref<16x512xf32, #tpu.memory_space<vmem>>, vector<2x256xf32>
    %c10 = arith.constant 10 : index
    %c256_33 = arith.constant 256 : index
    %79 = vector.load %arg9[%c10, %c256_33] : memref<16x512xf32, #tpu.memory_space<vmem>>, vector<2x256xf32>
    %80 = arith.addf %78, %79 : vector<2x256xf32>
    %cst_34 = arith.constant dense<0.000000e+00> : vector<2x256xf32>
    %81 = tpu.matmul %77, %35, %cst_34 {dimension_numbers = #tpu.dot_dimension_numbers<[1], [0], [0], [1], [0, 0, 1, 1], [], []>} : vector<2x64xf32>, vector<64x256xf32>, vector<2x256xf32> -> vector<2x256xf32>
    %82 = arith.addf %80, %81 : vector<2x256xf32>
    %83 = arith.negf %82 : vector<2x256xf32>
    %84 = math.exp %83 : vector<2x256xf32>
    %cst_35 = arith.constant 1.000000e+00 : f32
    %85 = vector.broadcast %cst_35 : f32 to vector<2x256xf32>
    %86 = arith.addf %85, %84 : vector<2x256xf32>
    %87 = arith.divf %85, %86 : vector<2x256xf32>
    %88 = math.tanh %82 : vector<2x256xf32>
    %89 = vector.extract_strided_slice %87 {offsets = [0, 64], sizes = [2, 64], strides = [1, 1]} : vector<2x256xf32> to vector<2x64xf32>
    %90 = arith.mulf %89, %74 : vector<2x64xf32>
    %91 = vector.extract_strided_slice %87 {offsets = [0, 0], sizes = [2, 64], strides = [1, 1]} : vector<2x256xf32> to vector<2x64xf32>
    %92 = vector.extract_strided_slice %88 {offsets = [0, 128], sizes = [2, 64], strides = [1, 1]} : vector<2x256xf32> to vector<2x64xf32>
    %93 = arith.mulf %91, %92 : vector<2x64xf32>
    %94 = arith.addf %90, %93 : vector<2x64xf32>
    %95 = vector.extract_strided_slice %87 {offsets = [0, 192], sizes = [2, 64], strides = [1, 1]} : vector<2x256xf32> to vector<2x64xf32>
    %96 = math.tanh %94 : vector<2x64xf32>
    %97 = arith.mulf %95, %96 : vector<2x64xf32>
    %c6 = arith.constant 6 : index
    %c0_36 = arith.constant 0 : index
    %98 = vector.load %arg9[%c6, %c0_36] : memref<16x512xf32, #tpu.memory_space<vmem>>, vector<2x256xf32>
    %c8 = arith.constant 8 : index
    %c256_37 = arith.constant 256 : index
    %99 = vector.load %arg9[%c8, %c256_37] : memref<16x512xf32, #tpu.memory_space<vmem>>, vector<2x256xf32>
    %100 = arith.addf %98, %99 : vector<2x256xf32>
    %cst_38 = arith.constant dense<0.000000e+00> : vector<2x256xf32>
    %101 = tpu.matmul %97, %35, %cst_38 {dimension_numbers = #tpu.dot_dimension_numbers<[1], [0], [0], [1], [0, 0, 1, 1], [], []>} : vector<2x64xf32>, vector<64x256xf32>, vector<2x256xf32> -> vector<2x256xf32>
    %102 = arith.addf %100, %101 : vector<2x256xf32>
    %103 = arith.negf %102 : vector<2x256xf32>
    %104 = math.exp %103 : vector<2x256xf32>
    %cst_39 = arith.constant 1.000000e+00 : f32
    %105 = vector.broadcast %cst_39 : f32 to vector<2x256xf32>
    %106 = arith.addf %105, %104 : vector<2x256xf32>
    %107 = arith.divf %105, %106 : vector<2x256xf32>
    %108 = math.tanh %102 : vector<2x256xf32>
    %109 = vector.extract_strided_slice %107 {offsets = [0, 64], sizes = [2, 64], strides = [1, 1]} : vector<2x256xf32> to vector<2x64xf32>
    %110 = arith.mulf %109, %94 : vector<2x64xf32>
    %111 = vector.extract_strided_slice %107 {offsets = [0, 0], sizes = [2, 64], strides = [1, 1]} : vector<2x256xf32> to vector<2x64xf32>
    %112 = vector.extract_strided_slice %108 {offsets = [0, 128], sizes = [2, 64], strides = [1, 1]} : vector<2x256xf32> to vector<2x64xf32>
    %113 = arith.mulf %111, %112 : vector<2x64xf32>
    %114 = arith.addf %110, %113 : vector<2x64xf32>
    %115 = vector.extract_strided_slice %107 {offsets = [0, 192], sizes = [2, 64], strides = [1, 1]} : vector<2x256xf32> to vector<2x64xf32>
    %116 = math.tanh %114 : vector<2x64xf32>
    %117 = arith.mulf %115, %116 : vector<2x64xf32>
    %c8_40 = arith.constant 8 : index
    %c0_41 = arith.constant 0 : index
    %118 = vector.load %arg9[%c8_40, %c0_41] : memref<16x512xf32, #tpu.memory_space<vmem>>, vector<2x256xf32>
    %c6_42 = arith.constant 6 : index
    %c256_43 = arith.constant 256 : index
    %119 = vector.load %arg9[%c6_42, %c256_43] : memref<16x512xf32, #tpu.memory_space<vmem>>, vector<2x256xf32>
    %120 = arith.addf %118, %119 : vector<2x256xf32>
    %cst_44 = arith.constant dense<0.000000e+00> : vector<2x256xf32>
    %121 = tpu.matmul %117, %35, %cst_44 {dimension_numbers = #tpu.dot_dimension_numbers<[1], [0], [0], [1], [0, 0, 1, 1], [], []>} : vector<2x64xf32>, vector<64x256xf32>, vector<2x256xf32> -> vector<2x256xf32>
    %122 = arith.addf %120, %121 : vector<2x256xf32>
    %123 = arith.negf %122 : vector<2x256xf32>
    %124 = math.exp %123 : vector<2x256xf32>
    %cst_45 = arith.constant 1.000000e+00 : f32
    %125 = vector.broadcast %cst_45 : f32 to vector<2x256xf32>
    %126 = arith.addf %125, %124 : vector<2x256xf32>
    %127 = arith.divf %125, %126 : vector<2x256xf32>
    %128 = math.tanh %122 : vector<2x256xf32>
    %129 = vector.extract_strided_slice %127 {offsets = [0, 64], sizes = [2, 64], strides = [1, 1]} : vector<2x256xf32> to vector<2x64xf32>
    %130 = arith.mulf %129, %114 : vector<2x64xf32>
    %131 = vector.extract_strided_slice %127 {offsets = [0, 0], sizes = [2, 64], strides = [1, 1]} : vector<2x256xf32> to vector<2x64xf32>
    %132 = vector.extract_strided_slice %128 {offsets = [0, 128], sizes = [2, 64], strides = [1, 1]} : vector<2x256xf32> to vector<2x64xf32>
    %133 = arith.mulf %131, %132 : vector<2x64xf32>
    %134 = arith.addf %130, %133 : vector<2x64xf32>
    %135 = vector.extract_strided_slice %127 {offsets = [0, 192], sizes = [2, 64], strides = [1, 1]} : vector<2x256xf32> to vector<2x64xf32>
    %136 = math.tanh %134 : vector<2x64xf32>
    %137 = arith.mulf %135, %136 : vector<2x64xf32>
    %c10_46 = arith.constant 10 : index
    %c0_47 = arith.constant 0 : index
    %138 = vector.load %arg9[%c10_46, %c0_47] : memref<16x512xf32, #tpu.memory_space<vmem>>, vector<2x256xf32>
    %c4_48 = arith.constant 4 : index
    %c256_49 = arith.constant 256 : index
    %139 = vector.load %arg9[%c4_48, %c256_49] : memref<16x512xf32, #tpu.memory_space<vmem>>, vector<2x256xf32>
    %140 = arith.addf %138, %139 : vector<2x256xf32>
    %cst_50 = arith.constant dense<0.000000e+00> : vector<2x256xf32>
    %141 = tpu.matmul %137, %35, %cst_50 {dimension_numbers = #tpu.dot_dimension_numbers<[1], [0], [0], [1], [0, 0, 1, 1], [], []>} : vector<2x64xf32>, vector<64x256xf32>, vector<2x256xf32> -> vector<2x256xf32>
    %142 = arith.addf %140, %141 : vector<2x256xf32>
    %143 = arith.negf %142 : vector<2x256xf32>
    %144 = math.exp %143 : vector<2x256xf32>
    %cst_51 = arith.constant 1.000000e+00 : f32
    %145 = vector.broadcast %cst_51 : f32 to vector<2x256xf32>
    %146 = arith.addf %145, %144 : vector<2x256xf32>
    %147 = arith.divf %145, %146 : vector<2x256xf32>
    %148 = math.tanh %142 : vector<2x256xf32>
    %149 = vector.extract_strided_slice %147 {offsets = [0, 64], sizes = [2, 64], strides = [1, 1]} : vector<2x256xf32> to vector<2x64xf32>
    %150 = arith.mulf %149, %134 : vector<2x64xf32>
    %151 = vector.extract_strided_slice %147 {offsets = [0, 0], sizes = [2, 64], strides = [1, 1]} : vector<2x256xf32> to vector<2x64xf32>
    %152 = vector.extract_strided_slice %148 {offsets = [0, 128], sizes = [2, 64], strides = [1, 1]} : vector<2x256xf32> to vector<2x64xf32>
    %153 = arith.mulf %151, %152 : vector<2x64xf32>
    %154 = arith.addf %150, %153 : vector<2x64xf32>
    %155 = vector.extract_strided_slice %147 {offsets = [0, 192], sizes = [2, 64], strides = [1, 1]} : vector<2x256xf32> to vector<2x64xf32>
    %156 = math.tanh %154 : vector<2x64xf32>
    %157 = arith.mulf %155, %156 : vector<2x64xf32>
    %c12_52 = arith.constant 12 : index
    %c0_53 = arith.constant 0 : index
    %158 = vector.load %arg9[%c12_52, %c0_53] : memref<16x512xf32, #tpu.memory_space<vmem>>, vector<2x256xf32>
    %c2_54 = arith.constant 2 : index
    %c256_55 = arith.constant 256 : index
    %159 = vector.load %arg9[%c2_54, %c256_55] : memref<16x512xf32, #tpu.memory_space<vmem>>, vector<2x256xf32>
    %160 = arith.addf %158, %159 : vector<2x256xf32>
    %cst_56 = arith.constant dense<0.000000e+00> : vector<2x256xf32>
    %161 = tpu.matmul %157, %35, %cst_56 {dimension_numbers = #tpu.dot_dimension_numbers<[1], [0], [0], [1], [0, 0, 1, 1], [], []>} : vector<2x64xf32>, vector<64x256xf32>, vector<2x256xf32> -> vector<2x256xf32>
    %162 = arith.addf %160, %161 : vector<2x256xf32>
    %163 = arith.negf %162 : vector<2x256xf32>
    %164 = math.exp %163 : vector<2x256xf32>
    %cst_57 = arith.constant 1.000000e+00 : f32
    %165 = vector.broadcast %cst_57 : f32 to vector<2x256xf32>
    %166 = arith.addf %165, %164 : vector<2x256xf32>
    %167 = arith.divf %165, %166 : vector<2x256xf32>
    %168 = math.tanh %162 : vector<2x256xf32>
    %169 = vector.extract_strided_slice %167 {offsets = [0, 64], sizes = [2, 64], strides = [1, 1]} : vector<2x256xf32> to vector<2x64xf32>
    %170 = arith.mulf %169, %154 : vector<2x64xf32>
    %171 = vector.extract_strided_slice %167 {offsets = [0, 0], sizes = [2, 64], strides = [1, 1]} : vector<2x256xf32> to vector<2x64xf32>
    %172 = vector.extract_strided_slice %168 {offsets = [0, 128], sizes = [2, 64], strides = [1, 1]} : vector<2x256xf32> to vector<2x64xf32>
    %173 = arith.mulf %171, %172 : vector<2x64xf32>
    %174 = arith.addf %170, %173 : vector<2x64xf32>
    %175 = vector.extract_strided_slice %167 {offsets = [0, 192], sizes = [2, 64], strides = [1, 1]} : vector<2x256xf32> to vector<2x64xf32>
    %176 = math.tanh %174 : vector<2x64xf32>
    %177 = arith.mulf %175, %176 : vector<2x64xf32>
    %c14_58 = arith.constant 14 : index
    %c0_59 = arith.constant 0 : index
    %178 = vector.load %arg9[%c14_58, %c0_59] : memref<16x512xf32, #tpu.memory_space<vmem>>, vector<2x256xf32>
    %c0_60 = arith.constant 0 : index
    %c256_61 = arith.constant 256 : index
    %179 = vector.load %arg9[%c0_60, %c256_61] : memref<16x512xf32, #tpu.memory_space<vmem>>, vector<2x256xf32>
    %180 = arith.addf %178, %179 : vector<2x256xf32>
    %cst_62 = arith.constant dense<0.000000e+00> : vector<2x256xf32>
    %181 = tpu.matmul %177, %35, %cst_62 {dimension_numbers = #tpu.dot_dimension_numbers<[1], [0], [0], [1], [0, 0, 1, 1], [], []>} : vector<2x64xf32>, vector<64x256xf32>, vector<2x256xf32> -> vector<2x256xf32>
    %182 = arith.addf %180, %181 : vector<2x256xf32>
    %183 = arith.negf %182 : vector<2x256xf32>
    %184 = math.exp %183 : vector<2x256xf32>
    %cst_63 = arith.constant 1.000000e+00 : f32
    %185 = vector.broadcast %cst_63 : f32 to vector<2x256xf32>
    %186 = arith.addf %185, %184 : vector<2x256xf32>
    %187 = arith.divf %185, %186 : vector<2x256xf32>
    %188 = math.tanh %182 : vector<2x256xf32>
    %189 = vector.extract_strided_slice %187 {offsets = [0, 64], sizes = [2, 64], strides = [1, 1]} : vector<2x256xf32> to vector<2x64xf32>
    %190 = arith.mulf %189, %174 : vector<2x64xf32>
    %191 = vector.extract_strided_slice %187 {offsets = [0, 0], sizes = [2, 64], strides = [1, 1]} : vector<2x256xf32> to vector<2x64xf32>
    %192 = vector.extract_strided_slice %188 {offsets = [0, 128], sizes = [2, 64], strides = [1, 1]} : vector<2x256xf32> to vector<2x64xf32>
    %193 = arith.mulf %191, %192 : vector<2x64xf32>
    %194 = arith.addf %190, %193 : vector<2x64xf32>
    %195 = vector.extract_strided_slice %187 {offsets = [0, 192], sizes = [2, 64], strides = [1, 1]} : vector<2x256xf32> to vector<2x64xf32>
    %196 = math.tanh %194 : vector<2x64xf32>
    %197 = arith.mulf %195, %196 : vector<2x64xf32>
    %198 = vector.extract_strided_slice %57 {offsets = [0, 0], sizes = [2, 32], strides = [1, 1]} : vector<2x64xf32> to vector<2x32xf32>
    %199 = vector.extract_strided_slice %197 {offsets = [0, 32], sizes = [2, 32], strides = [1, 1]} : vector<2x64xf32> to vector<2x32xf32>
    %200 = tpu.concatenate %198, %199 in 1 : vector<2x32xf32>, vector<2x32xf32> -> vector<2x64xf32>
    %201 = vector.extract_strided_slice %77 {offsets = [0, 0], sizes = [2, 32], strides = [1, 1]} : vector<2x64xf32> to vector<2x32xf32>
    %202 = vector.extract_strided_slice %177 {offsets = [0, 32], sizes = [2, 32], strides = [1, 1]} : vector<2x64xf32> to vector<2x32xf32>
    %203 = tpu.concatenate %201, %202 in 1 : vector<2x32xf32>, vector<2x32xf32> -> vector<2x64xf32>
    %204 = vector.extract_strided_slice %97 {offsets = [0, 0], sizes = [2, 32], strides = [1, 1]} : vector<2x64xf32> to vector<2x32xf32>
    %205 = vector.extract_strided_slice %157 {offsets = [0, 32], sizes = [2, 32], strides = [1, 1]} : vector<2x64xf32> to vector<2x32xf32>
    %206 = tpu.concatenate %204, %205 in 1 : vector<2x32xf32>, vector<2x32xf32> -> vector<2x64xf32>
    %207 = vector.extract_strided_slice %117 {offsets = [0, 0], sizes = [2, 32], strides = [1, 1]} : vector<2x64xf32> to vector<2x32xf32>
    %208 = vector.extract_strided_slice %137 {offsets = [0, 32], sizes = [2, 32], strides = [1, 1]} : vector<2x64xf32> to vector<2x32xf32>
    %209 = tpu.concatenate %207, %208 in 1 : vector<2x32xf32>, vector<2x32xf32> -> vector<2x64xf32>
    %210 = vector.extract_strided_slice %137 {offsets = [0, 0], sizes = [2, 32], strides = [1, 1]} : vector<2x64xf32> to vector<2x32xf32>
    %211 = vector.extract_strided_slice %117 {offsets = [0, 32], sizes = [2, 32], strides = [1, 1]} : vector<2x64xf32> to vector<2x32xf32>
    %212 = tpu.concatenate %210, %211 in 1 : vector<2x32xf32>, vector<2x32xf32> -> vector<2x64xf32>
    %213 = vector.extract_strided_slice %157 {offsets = [0, 0], sizes = [2, 32], strides = [1, 1]} : vector<2x64xf32> to vector<2x32xf32>
    %214 = vector.extract_strided_slice %97 {offsets = [0, 32], sizes = [2, 32], strides = [1, 1]} : vector<2x64xf32> to vector<2x32xf32>
    %215 = tpu.concatenate %213, %214 in 1 : vector<2x32xf32>, vector<2x32xf32> -> vector<2x64xf32>
    %216 = vector.extract_strided_slice %177 {offsets = [0, 0], sizes = [2, 32], strides = [1, 1]} : vector<2x64xf32> to vector<2x32xf32>
    %217 = vector.extract_strided_slice %77 {offsets = [0, 32], sizes = [2, 32], strides = [1, 1]} : vector<2x64xf32> to vector<2x32xf32>
    %218 = tpu.concatenate %216, %217 in 1 : vector<2x32xf32>, vector<2x32xf32> -> vector<2x64xf32>
    %219 = vector.extract_strided_slice %197 {offsets = [0, 0], sizes = [2, 32], strides = [1, 1]} : vector<2x64xf32> to vector<2x32xf32>
    %220 = vector.extract_strided_slice %57 {offsets = [0, 32], sizes = [2, 32], strides = [1, 1]} : vector<2x64xf32> to vector<2x32xf32>
    %221 = tpu.concatenate %219, %220 in 1 : vector<2x32xf32>, vector<2x32xf32> -> vector<2x64xf32>
    %222 = tpu.concatenate %200, %203, %206, %209, %212, %215, %218, %221 in 0 : vector<2x64xf32>, vector<2x64xf32>, vector<2x64xf32>, vector<2x64xf32>, vector<2x64xf32>, vector<2x64xf32>, vector<2x64xf32>, vector<2x64xf32> -> vector<16x64xf32>
    %c48 = arith.constant 48 : index
    %c0_64 = arith.constant 0 : index
    %223 = vector.load %arg3[%c48, %c0_64] : memref<112x512xf32, #tpu.memory_space<vmem>>, vector<64x512xf32>
    %cst_65 = arith.constant dense<0.000000e+00> : vector<16x512xf32>
    %224 = tpu.matmul %222, %223, %cst_65 {dimension_numbers = #tpu.dot_dimension_numbers<[1], [0], [0], [1], [0, 0, 1, 1], [], []>} : vector<16x64xf32>, vector<64x512xf32>, vector<16x512xf32> -> vector<16x512xf32>
    %c1 = arith.constant 1 : index
    %c0_66 = arith.constant 0 : index
    %225 = vector.load %arg7[%c1, %c0_66] : memref<8x512xf32, #tpu.memory_space<vmem>>, vector<1x512xf32>
    %226 = vector.broadcast %225 : vector<1x512xf32> to vector<16x512xf32>
    %227 = arith.addf %224, %226 : vector<16x512xf32>
    %c0_67 = arith.constant 0 : index
    %c0_68 = arith.constant 0 : index
    %228 = vector.load %arg9[%c0_67, %c0_68] : memref<16x512xf32, #tpu.memory_space<vmem>>, vector<16x512xf32>
    tpu.vector_store %arg9[%c0_67, %c0_68], %227 {strides = array<i32>} : memref<16x512xf32, #tpu.memory_space<vmem>>, vector<16x512xf32>,
    %c64 = arith.constant 64 : index
    %c0_69 = arith.constant 0 : index
    %229 = vector.load %arg4[%c64, %c0_69] : memref<128x256xf32, #tpu.memory_space<vmem>>, vector<64x256xf32>
    %cst_70 = arith.constant 0.000000e+00 : f32
    %230 = vector.broadcast %cst_70 : f32 to vector<2x64xf32>
    %cst_71 = arith.constant 0.000000e+00 : f32
    %231 = vector.broadcast %cst_71 : f32 to vector<2x64xf32>
    %c0_72 = arith.constant 0 : index
    %c0_73 = arith.constant 0 : index
    %232 = vector.load %arg9[%c0_72, %c0_73] : memref<16x512xf32, #tpu.memory_space<vmem>>, vector<2x256xf32>
    %c14_74 = arith.constant 14 : index
    %c256_75 = arith.constant 256 : index
    %233 = vector.load %arg9[%c14_74, %c256_75] : memref<16x512xf32, #tpu.memory_space<vmem>>, vector<2x256xf32>
    %234 = arith.addf %232, %233 : vector<2x256xf32>
    %cst_76 = arith.constant dense<0.000000e+00> : vector<2x256xf32>
    %235 = tpu.matmul %230, %229, %cst_76 {dimension_numbers = #tpu.dot_dimension_numbers<[1], [0], [0], [1], [0, 0, 1, 1], [], []>} : vector<2x64xf32>, vector<64x256xf32>, vector<2x256xf32> -> vector<2x256xf32>
    %236 = arith.addf %234, %235 : vector<2x256xf32>
    %237 = arith.negf %236 : vector<2x256xf32>
    %238 = math.exp %237 : vector<2x256xf32>
    %cst_77 = arith.constant 1.000000e+00 : f32
    %239 = vector.broadcast %cst_77 : f32 to vector<2x256xf32>
    %240 = arith.addf %239, %238 : vector<2x256xf32>
    %241 = arith.divf %239, %240 : vector<2x256xf32>
    %242 = math.tanh %236 : vector<2x256xf32>
    %243 = vector.extract_strided_slice %241 {offsets = [0, 64], sizes = [2, 64], strides = [1, 1]} : vector<2x256xf32> to vector<2x64xf32>
    %244 = arith.mulf %243, %231 : vector<2x64xf32>
    %245 = vector.extract_strided_slice %241 {offsets = [0, 0], sizes = [2, 64], strides = [1, 1]} : vector<2x256xf32> to vector<2x64xf32>
    %246 = vector.extract_strided_slice %242 {offsets = [0, 128], sizes = [2, 64], strides = [1, 1]} : vector<2x256xf32> to vector<2x64xf32>
    %247 = arith.mulf %245, %246 : vector<2x64xf32>
    %248 = arith.addf %244, %247 : vector<2x64xf32>
    %249 = vector.extract_strided_slice %241 {offsets = [0, 192], sizes = [2, 64], strides = [1, 1]} : vector<2x256xf32> to vector<2x64xf32>
    %250 = math.tanh %248 : vector<2x64xf32>
    %251 = arith.mulf %249, %250 : vector<2x64xf32>
    %c2_78 = arith.constant 2 : index
    %c0_79 = arith.constant 0 : index
    %252 = vector.load %arg9[%c2_78, %c0_79] : memref<16x512xf32, #tpu.memory_space<vmem>>, vector<2x256xf32>
    %c12_80 = arith.constant 12 : index
    %c256_81 = arith.constant 256 : index
    %253 = vector.load %arg9[%c12_80, %c256_81] : memref<16x512xf32, #tpu.memory_space<vmem>>, vector<2x256xf32>
    %254 = arith.addf %252, %253 : vector<2x256xf32>
    %cst_82 = arith.constant dense<0.000000e+00> : vector<2x256xf32>
    %255 = tpu.matmul %251, %229, %cst_82 {dimension_numbers = #tpu.dot_dimension_numbers<[1], [0], [0], [1], [0, 0, 1, 1], [], []>} : vector<2x64xf32>, vector<64x256xf32>, vector<2x256xf32> -> vector<2x256xf32>
    %256 = arith.addf %254, %255 : vector<2x256xf32>
    %257 = arith.negf %256 : vector<2x256xf32>
    %258 = math.exp %257 : vector<2x256xf32>
    %cst_83 = arith.constant 1.000000e+00 : f32
    %259 = vector.broadcast %cst_83 : f32 to vector<2x256xf32>
    %260 = arith.addf %259, %258 : vector<2x256xf32>
    %261 = arith.divf %259, %260 : vector<2x256xf32>
    %262 = math.tanh %256 : vector<2x256xf32>
    %263 = vector.extract_strided_slice %261 {offsets = [0, 64], sizes = [2, 64], strides = [1, 1]} : vector<2x256xf32> to vector<2x64xf32>
    %264 = arith.mulf %263, %248 : vector<2x64xf32>
    %265 = vector.extract_strided_slice %261 {offsets = [0, 0], sizes = [2, 64], strides = [1, 1]} : vector<2x256xf32> to vector<2x64xf32>
    %266 = vector.extract_strided_slice %262 {offsets = [0, 128], sizes = [2, 64], strides = [1, 1]} : vector<2x256xf32> to vector<2x64xf32>
    %267 = arith.mulf %265, %266 : vector<2x64xf32>
    %268 = arith.addf %264, %267 : vector<2x64xf32>
    %269 = vector.extract_strided_slice %261 {offsets = [0, 192], sizes = [2, 64], strides = [1, 1]} : vector<2x256xf32> to vector<2x64xf32>
    %270 = math.tanh %268 : vector<2x64xf32>
    %271 = arith.mulf %269, %270 : vector<2x64xf32>
    %c4_84 = arith.constant 4 : index
    %c0_85 = arith.constant 0 : index
    %272 = vector.load %arg9[%c4_84, %c0_85] : memref<16x512xf32, #tpu.memory_space<vmem>>, vector<2x256xf32>
    %c10_86 = arith.constant 10 : index
    %c256_87 = arith.constant 256 : index
    %273 = vector.load %arg9[%c10_86, %c256_87] : memref<16x512xf32, #tpu.memory_space<vmem>>, vector<2x256xf32>
    %274 = arith.addf %272, %273 : vector<2x256xf32>
    %cst_88 = arith.constant dense<0.000000e+00> : vector<2x256xf32>
    %275 = tpu.matmul %271, %229, %cst_88 {dimension_numbers = #tpu.dot_dimension_numbers<[1], [0], [0], [1], [0, 0, 1, 1], [], []>} : vector<2x64xf32>, vector<64x256xf32>, vector<2x256xf32> -> vector<2x256xf32>
    %276 = arith.addf %274, %275 : vector<2x256xf32>
    %277 = arith.negf %276 : vector<2x256xf32>
    %278 = math.exp %277 : vector<2x256xf32>
    %cst_89 = arith.constant 1.000000e+00 : f32
    %279 = vector.broadcast %cst_89 : f32 to vector<2x256xf32>
    %280 = arith.addf %279, %278 : vector<2x256xf32>
    %281 = arith.divf %279, %280 : vector<2x256xf32>
    %282 = math.tanh %276 : vector<2x256xf32>
    %283 = vector.extract_strided_slice %281 {offsets = [0, 64], sizes = [2, 64], strides = [1, 1]} : vector<2x256xf32> to vector<2x64xf32>
    %284 = arith.mulf %283, %268 : vector<2x64xf32>
    %285 = vector.extract_strided_slice %281 {offsets = [0, 0], sizes = [2, 64], strides = [1, 1]} : vector<2x256xf32> to vector<2x64xf32>
    %286 = vector.extract_strided_slice %282 {offsets = [0, 128], sizes = [2, 64], strides = [1, 1]} : vector<2x256xf32> to vector<2x64xf32>
    %287 = arith.mulf %285, %286 : vector<2x64xf32>
    %288 = arith.addf %284, %287 : vector<2x64xf32>
    %289 = vector.extract_strided_slice %281 {offsets = [0, 192], sizes = [2, 64], strides = [1, 1]} : vector<2x256xf32> to vector<2x64xf32>
    %290 = math.tanh %288 : vector<2x64xf32>
    %291 = arith.mulf %289, %290 : vector<2x64xf32>
    %c6_90 = arith.constant 6 : index
    %c0_91 = arith.constant 0 : index
    %292 = vector.load %arg9[%c6_90, %c0_91] : memref<16x512xf32, #tpu.memory_space<vmem>>, vector<2x256xf32>
    %c8_92 = arith.constant 8 : index
    %c256_93 = arith.constant 256 : index
    %293 = vector.load %arg9[%c8_92, %c256_93] : memref<16x512xf32, #tpu.memory_space<vmem>>, vector<2x256xf32>
    %294 = arith.addf %292, %293 : vector<2x256xf32>
    %cst_94 = arith.constant dense<0.000000e+00> : vector<2x256xf32>
    %295 = tpu.matmul %291, %229, %cst_94 {dimension_numbers = #tpu.dot_dimension_numbers<[1], [0], [0], [1], [0, 0, 1, 1], [], []>} : vector<2x64xf32>, vector<64x256xf32>, vector<2x256xf32> -> vector<2x256xf32>
    %296 = arith.addf %294, %295 : vector<2x256xf32>
    %297 = arith.negf %296 : vector<2x256xf32>
    %298 = math.exp %297 : vector<2x256xf32>
    %cst_95 = arith.constant 1.000000e+00 : f32
    %299 = vector.broadcast %cst_95 : f32 to vector<2x256xf32>
    %300 = arith.addf %299, %298 : vector<2x256xf32>
    %301 = arith.divf %299, %300 : vector<2x256xf32>
    %302 = math.tanh %296 : vector<2x256xf32>
    %303 = vector.extract_strided_slice %301 {offsets = [0, 64], sizes = [2, 64], strides = [1, 1]} : vector<2x256xf32> to vector<2x64xf32>
    %304 = arith.mulf %303, %288 : vector<2x64xf32>
    %305 = vector.extract_strided_slice %301 {offsets = [0, 0], sizes = [2, 64], strides = [1, 1]} : vector<2x256xf32> to vector<2x64xf32>
    %306 = vector.extract_strided_slice %302 {offsets = [0, 128], sizes = [2, 64], strides = [1, 1]} : vector<2x256xf32> to vector<2x64xf32>
    %307 = arith.mulf %305, %306 : vector<2x64xf32>
    %308 = arith.addf %304, %307 : vector<2x64xf32>
    %309 = vector.extract_strided_slice %301 {offsets = [0, 192], sizes = [2, 64], strides = [1, 1]} : vector<2x256xf32> to vector<2x64xf32>
    %310 = math.tanh %308 : vector<2x64xf32>
    %311 = arith.mulf %309, %310 : vector<2x64xf32>
    %c8_96 = arith.constant 8 : index
    %c0_97 = arith.constant 0 : index
    %312 = vector.load %arg9[%c8_96, %c0_97] : memref<16x512xf32, #tpu.memory_space<vmem>>, vector<2x256xf32>
    %c6_98 = arith.constant 6 : index
    %c256_99 = arith.constant 256 : index
    %313 = vector.load %arg9[%c6_98, %c256_99] : memref<16x512xf32, #tpu.memory_space<vmem>>, vector<2x256xf32>
    %314 = arith.addf %312, %313 : vector<2x256xf32>
    %cst_100 = arith.constant dense<0.000000e+00> : vector<2x256xf32>
    %315 = tpu.matmul %311, %229, %cst_100 {dimension_numbers = #tpu.dot_dimension_numbers<[1], [0], [0], [1], [0, 0, 1, 1], [], []>} : vector<2x64xf32>, vector<64x256xf32>, vector<2x256xf32> -> vector<2x256xf32>
    %316 = arith.addf %314, %315 : vector<2x256xf32>
    %317 = arith.negf %316 : vector<2x256xf32>
    %318 = math.exp %317 : vector<2x256xf32>
    %cst_101 = arith.constant 1.000000e+00 : f32
    %319 = vector.broadcast %cst_101 : f32 to vector<2x256xf32>
    %320 = arith.addf %319, %318 : vector<2x256xf32>
    %321 = arith.divf %319, %320 : vector<2x256xf32>
    %322 = math.tanh %316 : vector<2x256xf32>
    %323 = vector.extract_strided_slice %321 {offsets = [0, 64], sizes = [2, 64], strides = [1, 1]} : vector<2x256xf32> to vector<2x64xf32>
    %324 = arith.mulf %323, %308 : vector<2x64xf32>
    %325 = vector.extract_strided_slice %321 {offsets = [0, 0], sizes = [2, 64], strides = [1, 1]} : vector<2x256xf32> to vector<2x64xf32>
    %326 = vector.extract_strided_slice %322 {offsets = [0, 128], sizes = [2, 64], strides = [1, 1]} : vector<2x256xf32> to vector<2x64xf32>
    %327 = arith.mulf %325, %326 : vector<2x64xf32>
    %328 = arith.addf %324, %327 : vector<2x64xf32>
    %329 = vector.extract_strided_slice %321 {offsets = [0, 192], sizes = [2, 64], strides = [1, 1]} : vector<2x256xf32> to vector<2x64xf32>
    %330 = math.tanh %328 : vector<2x64xf32>
    %331 = arith.mulf %329, %330 : vector<2x64xf32>
    %c10_102 = arith.constant 10 : index
    %c0_103 = arith.constant 0 : index
    %332 = vector.load %arg9[%c10_102, %c0_103] : memref<16x512xf32, #tpu.memory_space<vmem>>, vector<2x256xf32>
    %c4_104 = arith.constant 4 : index
    %c256_105 = arith.constant 256 : index
    %333 = vector.load %arg9[%c4_104, %c256_105] : memref<16x512xf32, #tpu.memory_space<vmem>>, vector<2x256xf32>
    %334 = arith.addf %332, %333 : vector<2x256xf32>
    %cst_106 = arith.constant dense<0.000000e+00> : vector<2x256xf32>
    %335 = tpu.matmul %331, %229, %cst_106 {dimension_numbers = #tpu.dot_dimension_numbers<[1], [0], [0], [1], [0, 0, 1, 1], [], []>} : vector<2x64xf32>, vector<64x256xf32>, vector<2x256xf32> -> vector<2x256xf32>
    %336 = arith.addf %334, %335 : vector<2x256xf32>
    %337 = arith.negf %336 : vector<2x256xf32>
    %338 = math.exp %337 : vector<2x256xf32>
    %cst_107 = arith.constant 1.000000e+00 : f32
    %339 = vector.broadcast %cst_107 : f32 to vector<2x256xf32>
    %340 = arith.addf %339, %338 : vector<2x256xf32>
    %341 = arith.divf %339, %340 : vector<2x256xf32>
    %342 = math.tanh %336 : vector<2x256xf32>
    %343 = vector.extract_strided_slice %341 {offsets = [0, 64], sizes = [2, 64], strides = [1, 1]} : vector<2x256xf32> to vector<2x64xf32>
    %344 = arith.mulf %343, %328 : vector<2x64xf32>
    %345 = vector.extract_strided_slice %341 {offsets = [0, 0], sizes = [2, 64], strides = [1, 1]} : vector<2x256xf32> to vector<2x64xf32>
    %346 = vector.extract_strided_slice %342 {offsets = [0, 128], sizes = [2, 64], strides = [1, 1]} : vector<2x256xf32> to vector<2x64xf32>
    %347 = arith.mulf %345, %346 : vector<2x64xf32>
    %348 = arith.addf %344, %347 : vector<2x64xf32>
    %349 = vector.extract_strided_slice %341 {offsets = [0, 192], sizes = [2, 64], strides = [1, 1]} : vector<2x256xf32> to vector<2x64xf32>
    %350 = math.tanh %348 : vector<2x64xf32>
    %351 = arith.mulf %349, %350 : vector<2x64xf32>
    %c12_108 = arith.constant 12 : index
    %c0_109 = arith.constant 0 : index
    %352 = vector.load %arg9[%c12_108, %c0_109] : memref<16x512xf32, #tpu.memory_space<vmem>>, vector<2x256xf32>
    %c2_110 = arith.constant 2 : index
    %c256_111 = arith.constant 256 : index
    %353 = vector.load %arg9[%c2_110, %c256_111] : memref<16x512xf32, #tpu.memory_space<vmem>>, vector<2x256xf32>
    %354 = arith.addf %352, %353 : vector<2x256xf32>
    %cst_112 = arith.constant dense<0.000000e+00> : vector<2x256xf32>
    %355 = tpu.matmul %351, %229, %cst_112 {dimension_numbers = #tpu.dot_dimension_numbers<[1], [0], [0], [1], [0, 0, 1, 1], [], []>} : vector<2x64xf32>, vector<64x256xf32>, vector<2x256xf32> -> vector<2x256xf32>
    %356 = arith.addf %354, %355 : vector<2x256xf32>
    %357 = arith.negf %356 : vector<2x256xf32>
    %358 = math.exp %357 : vector<2x256xf32>
    %cst_113 = arith.constant 1.000000e+00 : f32
    %359 = vector.broadcast %cst_113 : f32 to vector<2x256xf32>
    %360 = arith.addf %359, %358 : vector<2x256xf32>
    %361 = arith.divf %359, %360 : vector<2x256xf32>
    %362 = math.tanh %356 : vector<2x256xf32>
    %363 = vector.extract_strided_slice %361 {offsets = [0, 64], sizes = [2, 64], strides = [1, 1]} : vector<2x256xf32> to vector<2x64xf32>
    %364 = arith.mulf %363, %348 : vector<2x64xf32>
    %365 = vector.extract_strided_slice %361 {offsets = [0, 0], sizes = [2, 64], strides = [1, 1]} : vector<2x256xf32> to vector<2x64xf32>
    %366 = vector.extract_strided_slice %362 {offsets = [0, 128], sizes = [2, 64], strides = [1, 1]} : vector<2x256xf32> to vector<2x64xf32>
    %367 = arith.mulf %365, %366 : vector<2x64xf32>
    %368 = arith.addf %364, %367 : vector<2x64xf32>
    %369 = vector.extract_strided_slice %361 {offsets = [0, 192], sizes = [2, 64], strides = [1, 1]} : vector<2x256xf32> to vector<2x64xf32>
    %370 = math.tanh %368 : vector<2x64xf32>
    %371 = arith.mulf %369, %370 : vector<2x64xf32>
    %c14_114 = arith.constant 14 : index
    %c0_115 = arith.constant 0 : index
    %372 = vector.load %arg9[%c14_114, %c0_115] : memref<16x512xf32, #tpu.memory_space<vmem>>, vector<2x256xf32>
    %c0_116 = arith.constant 0 : index
    %c256_117 = arith.constant 256 : index
    %373 = vector.load %arg9[%c0_116, %c256_117] : memref<16x512xf32, #tpu.memory_space<vmem>>, vector<2x256xf32>
    %374 = arith.addf %372, %373 : vector<2x256xf32>
    %cst_118 = arith.constant dense<0.000000e+00> : vector<2x256xf32>
    %375 = tpu.matmul %371, %229, %cst_118 {dimension_numbers = #tpu.dot_dimension_numbers<[1], [0], [0], [1], [0, 0, 1, 1], [], []>} : vector<2x64xf32>, vector<64x256xf32>, vector<2x256xf32> -> vector<2x256xf32>
    %376 = arith.addf %374, %375 : vector<2x256xf32>
    %377 = arith.negf %376 : vector<2x256xf32>
    %378 = math.exp %377 : vector<2x256xf32>
    %cst_119 = arith.constant 1.000000e+00 : f32
    %379 = vector.broadcast %cst_119 : f32 to vector<2x256xf32>
    %380 = arith.addf %379, %378 : vector<2x256xf32>
    %381 = arith.divf %379, %380 : vector<2x256xf32>
    %382 = math.tanh %376 : vector<2x256xf32>
    %383 = vector.extract_strided_slice %381 {offsets = [0, 64], sizes = [2, 64], strides = [1, 1]} : vector<2x256xf32> to vector<2x64xf32>
    %384 = arith.mulf %383, %368 : vector<2x64xf32>
    %385 = vector.extract_strided_slice %381 {offsets = [0, 0], sizes = [2, 64], strides = [1, 1]} : vector<2x256xf32> to vector<2x64xf32>
    %386 = vector.extract_strided_slice %382 {offsets = [0, 128], sizes = [2, 64], strides = [1, 1]} : vector<2x256xf32> to vector<2x64xf32>
    %387 = arith.mulf %385, %386 : vector<2x64xf32>
    %388 = arith.addf %384, %387 : vector<2x64xf32>
    %389 = vector.extract_strided_slice %381 {offsets = [0, 192], sizes = [2, 64], strides = [1, 1]} : vector<2x256xf32> to vector<2x64xf32>
    %390 = math.tanh %388 : vector<2x64xf32>
    %391 = arith.mulf %389, %390 : vector<2x64xf32>
    %392 = vector.extract_strided_slice %251 {offsets = [0, 0], sizes = [2, 32], strides = [1, 1]} : vector<2x64xf32> to vector<2x32xf32>
    %393 = vector.extract_strided_slice %391 {offsets = [0, 32], sizes = [2, 32], strides = [1, 1]} : vector<2x64xf32> to vector<2x32xf32>
    %394 = tpu.concatenate %392, %393 in 1 : vector<2x32xf32>, vector<2x32xf32> -> vector<2x64xf32>
    %395 = vector.extract_strided_slice %271 {offsets = [0, 0], sizes = [2, 32], strides = [1, 1]} : vector<2x64xf32> to vector<2x32xf32>
    %396 = vector.extract_strided_slice %371 {offsets = [0, 32], sizes = [2, 32], strides = [1, 1]} : vector<2x64xf32> to vector<2x32xf32>
    %397 = tpu.concatenate %395, %396 in 1 : vector<2x32xf32>, vector<2x32xf32> -> vector<2x64xf32>
    %398 = vector.extract_strided_slice %291 {offsets = [0, 0], sizes = [2, 32], strides = [1, 1]} : vector<2x64xf32> to vector<2x32xf32>
    %399 = vector.extract_strided_slice %351 {offsets = [0, 32], sizes = [2, 32], strides = [1, 1]} : vector<2x64xf32> to vector<2x32xf32>
    %400 = tpu.concatenate %398, %399 in 1 : vector<2x32xf32>, vector<2x32xf32> -> vector<2x64xf32>
    %401 = vector.extract_strided_slice %311 {offsets = [0, 0], sizes = [2, 32], strides = [1, 1]} : vector<2x64xf32> to vector<2x32xf32>
    %402 = vector.extract_strided_slice %331 {offsets = [0, 32], sizes = [2, 32], strides = [1, 1]} : vector<2x64xf32> to vector<2x32xf32>
    %403 = tpu.concatenate %401, %402 in 1 : vector<2x32xf32>, vector<2x32xf32> -> vector<2x64xf32>
    %404 = vector.extract_strided_slice %331 {offsets = [0, 0], sizes = [2, 32], strides = [1, 1]} : vector<2x64xf32> to vector<2x32xf32>
    %405 = vector.extract_strided_slice %311 {offsets = [0, 32], sizes = [2, 32], strides = [1, 1]} : vector<2x64xf32> to vector<2x32xf32>
    %406 = tpu.concatenate %404, %405 in 1 : vector<2x32xf32>, vector<2x32xf32> -> vector<2x64xf32>
    %407 = vector.extract_strided_slice %351 {offsets = [0, 0], sizes = [2, 32], strides = [1, 1]} : vector<2x64xf32> to vector<2x32xf32>
    %408 = vector.extract_strided_slice %291 {offsets = [0, 32], sizes = [2, 32], strides = [1, 1]} : vector<2x64xf32> to vector<2x32xf32>
    %409 = tpu.concatenate %407, %408 in 1 : vector<2x32xf32>, vector<2x32xf32> -> vector<2x64xf32>
    %410 = vector.extract_strided_slice %371 {offsets = [0, 0], sizes = [2, 32], strides = [1, 1]} : vector<2x64xf32> to vector<2x32xf32>
    %411 = vector.extract_strided_slice %271 {offsets = [0, 32], sizes = [2, 32], strides = [1, 1]} : vector<2x64xf32> to vector<2x32xf32>
    %412 = tpu.concatenate %410, %411 in 1 : vector<2x32xf32>, vector<2x32xf32> -> vector<2x64xf32>
    %413 = vector.extract_strided_slice %391 {offsets = [0, 0], sizes = [2, 32], strides = [1, 1]} : vector<2x64xf32> to vector<2x32xf32>
    %414 = vector.extract_strided_slice %251 {offsets = [0, 32], sizes = [2, 32], strides = [1, 1]} : vector<2x64xf32> to vector<2x32xf32>
    %415 = tpu.concatenate %413, %414 in 1 : vector<2x32xf32>, vector<2x32xf32> -> vector<2x64xf32>
    %416 = tpu.concatenate %394, %397, %400, %403, %406, %409, %412, %415 in 0 : vector<2x64xf32>, vector<2x64xf32>, vector<2x64xf32>, vector<2x64xf32>, vector<2x64xf32>, vector<2x64xf32>, vector<2x64xf32>, vector<2x64xf32> -> vector<16x64xf32>
    %c0_120 = arith.constant 0 : index
    %c0_121 = arith.constant 0 : index
    %417 = vector.load %arg6[%c0_120, %c0_121] : memref<192x128xf32, #tpu.memory_space<vmem>>, vector<64x128xf32>
    %cst_122 = arith.constant dense<0.000000e+00> : vector<16x128xf32>
    %418 = tpu.matmul %416, %417, %cst_122 {dimension_numbers = #tpu.dot_dimension_numbers<[1], [0], [0], [1], [0, 0, 1, 1], [], []>} : vector<16x64xf32>, vector<64x128xf32>, vector<16x128xf32> -> vector<16x128xf32>
    %c2_123 = arith.constant 2 : index
    %c0_124 = arith.constant 0 : index
    %419 = vector.load %arg7[%c2_123, %c0_124] : memref<8x512xf32, #tpu.memory_space<vmem>>, vector<1x128xf32>
    %420 = vector.broadcast %419 : vector<1x128xf32> to vector<16x128xf32>
    %421 = arith.addf %418, %420 : vector<16x128xf32>
    %c64_125 = arith.constant 64 : index
    %c0_126 = arith.constant 0 : index
    %422 = vector.load %arg6[%c64_125, %c0_126] : memref<192x128xf32, #tpu.memory_space<vmem>>, vector<128x128xf32>
    %cst_127 = arith.constant dense<0.000000e+00> : vector<16x128xf32>
    %423 = tpu.matmul %421, %422, %cst_127 {dimension_numbers = #tpu.dot_dimension_numbers<[1], [0], [0], [1], [0, 0, 1, 1], [], []>} : vector<16x128xf32>, vector<128x128xf32>, vector<16x128xf32> -> vector<16x128xf32>
    %c3 = arith.constant 3 : index
    %c0_128 = arith.constant 0 : index
    %424 = vector.load %arg7[%c3, %c0_128] : memref<8x512xf32, #tpu.memory_space<vmem>>, vector<1x128xf32>
    %425 = vector.broadcast %424 : vector<1x128xf32> to vector<16x128xf32>
    %426 = arith.addf %423, %425 : vector<16x128xf32>
    %c0_129 = arith.constant 0 : index
    %c0_130 = arith.constant 0 : index
    %427 = vector.load %arg8[%c0_129, %c0_130] : memref<16x128xf32, #tpu.memory_space<vmem>>, vector<16x128xf32>
    tpu.vector_store %arg8[%c0_129, %c0_130], %426 {strides = array<i32>} : memref<16x128xf32, #tpu.memory_space<vmem>>, vector<16x128xf32>,
    return
  }
}

</mosaic_0001>

<llo_original>
// kernel: entity_extraction_forward.1
$region0: #{entity_extraction_forward.1}
  #allocation0 [shape = 'u32[]', space=smem, size = 0x4, offset = 0x4, fixed_abs, tag = 'smem constant byte address 0x4 - core index']
  #allocation1 [shape = 'u32[144,128]{1,0:T(1,128)}', space=vmem, size = 0x12000, scoped, tag = 'internal scratch']
  #allocation2 [shape = 'f32[16,512]{1,0:T(8,128)}', space=vmem, size = 0x8000, scoped, tag = 'scratch operand']
  %s0 = inlined_call_operand.vmem [shape: f32[16,16], index: 0, kind: input, shape index: {}]
  %s1 = inlined_call_operand.vmem [shape: f32[16,16], index: 1, kind: input, shape index: {}]
  %s2 = inlined_call_operand.vmem [shape: f32[16,192], index: 2, kind: input, shape index: {}]
  %s3 = inlined_call_operand.vmem [shape: f32[112,512], index: 3, kind: input, shape index: {}]
  %s4 = inlined_call_operand.vmem [shape: f32[128,256], index: 4, kind: input, shape index: {}]
  %s5 = inlined_call_operand.vmem [shape: f32[192,128], index: 5, kind: input, shape index: {}]
  %s6 = inlined_call_operand.vmem [shape: f32[192,128], index: 6, kind: input, shape index: {}]
  %s7 = inlined_call_operand.vmem [shape: f32[8,512], index: 7, kind: input, shape index: {}]
  %s8 = inlined_call_operand.vmem [shape: f32[16,128], index: 8, kind: output, shape index: {}]
  %s9 = sld [smem:[#allocation0]]
  $region42: #{entity_extraction_forward.1} parent=0
    _
  %s11 = ssub.s32 1, %s9
  %s12 = scalar_select 0, %s11, %s9
  // Predicated region
  $region2: #{entity_extraction_forward.1} parent=0 // pred_check
    _
  $region3: #{entity_extraction_forward.1} parent=0 // pred_check_branch
    %14 = sbr.rel (0) target = $region5
  $region4: #{entity_extraction_forward.1} parent=0 // pred_region
    _
  $region5: #{entity_extraction_forward.1} parent=0 // pred_fallthru
    _
  // Predicated region
  $region6: #{entity_extraction_forward.1} parent=0 // pred_check
    _
  $region7: #{entity_extraction_forward.1} parent=0 // pred_check_branch
    %16 = sbr.rel (0) target = $region9
  $region8: #{entity_extraction_forward.1} parent=0 // pred_region
    _
  $region9: #{entity_extraction_forward.1} parent=0 // pred_fallthru
    _
  // Predicated region
  $region10: #{entity_extraction_forward.1} parent=0 // pred_check
    _
  $region11: #{entity_extraction_forward.1} parent=0 // pred_check_branch
    %18 = sbr.rel (0) target = $region13
  $region12: #{entity_extraction_forward.1} parent=0 // pred_region
    _
  $region13: #{entity_extraction_forward.1} parent=0 // pred_fallthru
    _
  // Predicated region
  $region14: #{entity_extraction_forward.1} parent=0 // pred_check
    _
  $region15: #{entity_extraction_forward.1} parent=0 // pred_check_branch
    %20 = sbr.rel (0) target = $region17
  $region16: #{entity_extraction_forward.1} parent=0 // pred_region
    _
  $region17: #{entity_extraction_forward.1} parent=0 // pred_fallthru
    _
  // Predicated region
  $region18: #{entity_extraction_forward.1} parent=0 // pred_check
    _
  $region19: #{entity_extraction_forward.1} parent=0 // pred_check_branch
    %22 = sbr.rel (0) target = $region21
  $region20: #{entity_extraction_forward.1} parent=0 // pred_region
    _
  $region21: #{entity_extraction_forward.1} parent=0 // pred_fallthru
    _
  // Predicated region
  $region22: #{entity_extraction_forward.1} parent=0 // pred_check
    _
  $region23: #{entity_extraction_forward.1} parent=0 // pred_check_branch
    %24 = sbr.rel (0) target = $region25
  $region24: #{entity_extraction_forward.1} parent=0 // pred_region
    _
  $region25: #{entity_extraction_forward.1} parent=0 // pred_fallthru
    _
  // Predicated region
  $region26: #{entity_extraction_forward.1} parent=0 // pred_check
    _
  $region27: #{entity_extraction_forward.1} parent=0 // pred_check_branch
    %26 = sbr.rel (0) target = $region29
  $region28: #{entity_extraction_forward.1} parent=0 // pred_region
    _
  $region29: #{entity_extraction_forward.1} parent=0 // pred_fallthru
    _
  // Predicated region
  $region30: #{entity_extraction_forward.1} parent=0 // pred_check
    _
  $region31: #{entity_extraction_forward.1} parent=0 // pred_check_branch
    %28 = sbr.rel (0) target = $region33
  $region32: #{entity_extraction_forward.1} parent=0 // pred_region
    _
  $region33: #{entity_extraction_forward.1} parent=0 // pred_fallthru
    _
  %v29 = vld [vmem:[%s2] sm:$0xff]
  %v30 = vld [vmem:[%s2 + $0x8] sm:$0xff]
  %v31 = vld [vmem:[%s2 + $0x10] sm:$0xff]
  %v32 = vld [vmem:[%s2 + $0x18] sm:$0xff]
  %v33 = vld [vmem:[%s5] sm:$0xff]
  %v34 = vld [vmem:[%s5 + $0x8] sm:$0xff]
  %v35 = vld [vmem:[%s5 + $0x10] sm:$0xff]
  %v36 = vld [vmem:[%s5 + $0x18] sm:$0xff]
  %v37 = vld [vmem:[%s5 + $0x20] sm:$0xff]
  %v38 = vld [vmem:[%s5 + $0x28] sm:$0xff]
  %v39 = vld [vmem:[%s5 + $0x30] sm:$0xff]
  %v40 = vld [vmem:[%s5 + $0x38] sm:$0xff]
  %v41 = vld [vmem:[%s5 + $0x40] sm:$0xff]
  %v42 = vld [vmem:[%s5 + $0x48] sm:$0xff]
  %v43 = vld [vmem:[%s5 + $0x50] sm:$0xff]
  %v44 = vld [vmem:[%s5 + $0x58] sm:$0xff]
  %v45 = vld [vmem:[%s5 + $0x60] sm:$0xff]
  %v46 = vld [vmem:[%s5 + $0x68] sm:$0xff]
  %v47 = vld [vmem:[%s5 + $0x70] sm:$0xff]
  %v48 = vld [vmem:[%s5 + $0x78] sm:$0xff]
  %v49 = vld [vmem:[%s5 + $0x80] sm:$0xff]
  %v50 = vld [vmem:[%s5 + $0x88] sm:$0xff]
  %v51 = vld [vmem:[%s5 + $0x90] sm:$0xff]
  %v52 = vld [vmem:[%s5 + $0x98] sm:$0xff]
  %v53 = vld [vmem:[%s5 + $0xa0] sm:$0xff]
  %v54 = vld [vmem:[%s5 + $0xa8] sm:$0xff]
  %v55 = vld [vmem:[%s5 + $0xb0] sm:$0xff]
  %v56 = vld [vmem:[%s5 + $0xb8] sm:$0xff]
  %vm57 = vcmask 523264
  %v59 = vsel %vm57, %v30, 0
  %v62 = vsel %vm57, %v32, 0
  %64 = vmatprep.subr.mxu0 0.0
  %65 = vmatpush1.msra.mxu0 %v33
  %66 = vmatprep.subr.mxu0 0.0
  %67 = vmatpush1.msra.mxu0 %v34
  %68 = vmatprep.subr.mxu0 0.0
  %69 = vmatpush1.msra.mxu0 %v35
  %70 = vmatprep.subr.mxu0 0.0
  %71 = vmatpush1.msra.mxu0 %v36
  %72 = vmatprep.subr.mxu0 0.0
  %73 = vmatpush1.msra.mxu0 %v37
  %74 = vmatprep.subr.mxu0 0.0
  %75 = vmatpush1.msra.mxu0 %v38
  %76 = vmatprep.subr.mxu0 0.0
  %77 = vmatpush1.msra.mxu0 %v39
  %78 = vmatprep.subr.mxu0 0.0
  %79 = vmatpush1.msra.mxu0 %v40
  %80 = vmatprep.subr.mxu0 0.0
  %81 = vmatpush1.msra.mxu0 %v41
  %82 = vmatprep.subr.mxu0 0.0
  %83 = vmatpush1.msra.mxu0 %v42
  %84 = vmatprep.subr.mxu0 0.0
  %85 = vmatpush1.msra.mxu0 %v43
  %86 = vmatprep.subr.mxu0 0.0
  %87 = vmatpush1.msra.mxu0 %v44
  %88 = vmatprep.subr.mxu0 0.0
  %89 = vmatpush1.msra.mxu0 %v45
  %90 = vmatprep.subr.mxu0 0.0
  %91 = vmatpush1.msra.mxu0 %v46
  %92 = vmatprep.subr.mxu0 0.0
  %93 = vmatpush1.msra.mxu0 %v47
  %94 = vmatprep.subr.mxu0 0.0
  %95 = vmatpush1.msra.mxu0 %v48
  %96 = vmatprep.subr.mxu0 0.0
  %97 = vmatpush1.msra.mxu0 %v49
  %98 = vmatprep.subr.mxu0 0.0
  %99 = vmatpush1.msra.mxu0 %v50
  %100 = vmatprep.subr.mxu0 0.0
  %101 = vmatpush1.msra.mxu0 %v51
  %102 = vmatprep.subr.mxu0 0.0
  %103 = vmatpush1.msra.mxu0 %v52
  %104 = vmatprep.subr.mxu0 0.0
  %105 = vmatpush1.msra.mxu0 %v53
  %106 = vmatprep.subr.mxu0 0.0
  %107 = vmatpush1.msra.mxu0 %v54
  %108 = vmatprep.subr.mxu0 0.0
  %109 = vmatpush1.msra.mxu0 %v55
  %110 = vmatprep.subr.mxu0 0.0
  %111 = vmatpush1.msra.mxu0 %v56
  %112 = vmatprep.subr.mxu0 0.0
  %113 = vmatpush1.msra.mxu0 0.0
  %114 = vmatprep.subr.mxu0 0.0
  %115 = vmatpush1.msra.mxu0 0.0
  %116 = vmatprep.subr.mxu0 0.0
  %117 = vmatpush1.msra.mxu0 0.0
  %118 = vmatprep.subr.mxu0 0.0
  %119 = vmatpush1.msra.mxu0 0.0
  %120 = vmatprep.subr.mxu0 0.0
  %121 = vmatpush1.msra.mxu0 0.0
  %122 = vmatprep.subr.mxu0 0.0
  %123 = vmatpush1.msra.mxu0 0.0
  %124 = vmatprep.subr.mxu0 0.0
  %125 = vmatpush1.msra.mxu0 0.0
  %126 = vmatprep.subr.mxu0 0.0
  %127 = vmatpush1.msra.mxu0 0.0
  %128 = vmatprep.mubr.f32.mxu0 %v59
  %129 = vmatmul.mubr.f32.gmra.mrb[0].mxu0 %v29
  %v130 = vpop.f32.mrb[0].mxu0
  %v131 = vadd.f32 0.0, %v130
  %v132 = vpop.f32.mrb[0].mxu0
  %133 = vmatprep.mubr.f32.mxu0 %v62
  %134 = vmatmul.mubr.f32.gmra.mrb[0].mxu0 %v31
  %v135 = vpop.f32.mrb[0].mxu0
  %v136 = vadd.f32 0.0, %v135
  %v137 = vpop.f32.mrb[0].mxu0
  %138 = vdwg.mxu0
  %141 = vrot.lane.b32.xlu0 %v131, 112
  %v142 = vpop.permute.xlu0 %141
  %143 = vrot.lane.b32.xlu0 %v136, 112
  %v144 = vpop.permute.xlu0 %143
  %v147 = vmax.f32 %v131, %v142
  %v148 = vmax.f32 %v136, %v144
  %149 = vrot.lane.b32.xlu0 %v131, 96
  %v150 = vpop.permute.xlu0 %149
  %151 = vrot.lane.b32.xlu0 %v136, 96
  %v152 = vpop.permute.xlu0 %151
  %v155 = vmax.f32 %v147, %v150
  %v156 = vmax.f32 %v148, %v152
  %157 = vrot.lane.b32.xlu0 %v131, 80
  %v158 = vpop.permute.xlu0 %157
  %159 = vrot.lane.b32.xlu0 %v136, 80
  %v160 = vpop.permute.xlu0 %159
  %v163 = vmax.f32 %v155, %v158
  %v164 = vmax.f32 %v156, %v160
  %165 = vrot.lane.b32.xlu0 %v131, 64
  %v166 = vpop.permute.xlu0 %165
  %167 = vrot.lane.b32.xlu0 %v136, 64
  %v168 = vpop.permute.xlu0 %167
  %v171 = vmax.f32 %v163, %v166
  %v172 = vmax.f32 %v164, %v168
  %173 = vrot.lane.b32.xlu0 %v131, 48
  %v174 = vpop.permute.xlu0 %173
  %175 = vrot.lane.b32.xlu0 %v136, 48
  %v176 = vpop.permute.xlu0 %175
  %v179 = vmax.f32 %v171, %v174
  %v180 = vmax.f32 %v172, %v176
  %181 = vrot.lane.b32.xlu0 %v131, 32
  %v182 = vpop.permute.xlu0 %181
  %183 = vrot.lane.b32.xlu0 %v136, 32
  %v184 = vpop.permute.xlu0 %183
  %v187 = vmax.f32 %v179, %v182
  %v188 = vmax.f32 %v180, %v184
  %189 = vrot.lane.b32.xlu0 %v131, 16
  %v190 = vpop.permute.xlu0 %189
  %191 = vrot.lane.b32.xlu0 %v136, 16
  %v192 = vpop.permute.xlu0 %191
  %v195 = vmax.f32 %v187, %v190
  %v196 = vmax.f32 %v188, %v192
  %v197 = vld [vmem:[%s7 + $0x4] ss:$0 sm:$0xff]
  %v198 = vadd.f32 %v195, %v197
  %v199 = vadd.f32 %v196, %v197
  %v200 = vld [vmem:[%s0] sm:$0xff]
  %v201 = vld [vmem:[%s0 + $0x8] sm:$0xff]
  %v202 = vld [vmem:[%s3] sm:$0xff]
  %v203 = vld [vmem:[%s3 + $0x8] sm:$0xff]
  %v204 = vld [vmem:[%s3 + $0x10] sm:$0xff]
  %v205 = vld [vmem:[%s3 + $0x18] sm:$0xff]
  %v206 = vld [vmem:[%s3 + $0x20] sm:$0xff]
  %v207 = vld [vmem:[%s3 + $0x28] sm:$0xff]
  %v208 = vld [vmem:[%s3 + $0x30] sm:$0xff]
  %v209 = vld [vmem:[%s3 + $0x38] sm:$0xff]
  %v210 = vld [vmem:[%s1] sm:$0xff]
  %v211 = vld [vmem:[%s1 + $0x8] sm:$0xff]
  %v212 = vld [vmem:[%s3 + $0x40] sm:$0xff]
  %v213 = vld [vmem:[%s3 + $0x48] sm:$0xff]
  %v214 = vld [vmem:[%s3 + $0x50] sm:$0xff]
  %v215 = vld [vmem:[%s3 + $0x58] sm:$0xff]
  %v216 = vld [vmem:[%s3 + $0x60] sm:$0xff]
  %v217 = vld [vmem:[%s3 + $0x68] sm:$0xff]
  %v218 = vld [vmem:[%s3 + $0x70] sm:$0xff]
  %v219 = vld [vmem:[%s3 + $0x78] sm:$0xff]
  %vm220 = vcmask 130048
  %v222 = vsel %vm220, %v210, 0
  %v225 = vsel %vm220, %v211, 0
  %227 = vmatprep.subr.mxu0 %v213
  %228 = vmatpush1.msra.mxu0 %v212
  %229 = vmatprep.subr.mxu0 %v217
  %230 = vmatpush1.msra.mxu0 %v216
  %231 = vmatprep.subr.mxu0 0.0
  %232 = vmatpush1.msra.mxu0 0.0
  %233 = vmatprep.subr.mxu0 0.0
  %234 = vmatpush1.msra.mxu0 0.0
  %235 = vmatprep.subr.mxu0 0.0
  %236 = vmatpush1.msra.mxu0 0.0
  %237 = vmatprep.subr.mxu0 0.0
  %238 = vmatpush1.msra.mxu0 0.0
  %239 = vmatprep.subr.mxu0 0.0
  %240 = vmatpush1.msra.mxu0 0.0
  %241 = vmatprep.subr.mxu0 0.0
  %242 = vmatpush1.msra.mxu0 0.0
  %243 = vmatprep.subr.mxu0 0.0
  %244 = vmatpush1.msra.mxu0 0.0
  %245 = vmatprep.subr.mxu0 0.0
  %246 = vmatpush1.msra.mxu0 0.0
  %247 = vmatprep.subr.mxu0 0.0
  %248 = vmatpush1.msra.mxu0 0.0
  %249 = vmatprep.subr.mxu0 0.0
  %250 = vmatpush1.msra.mxu0 0.0
  %251 = vmatprep.subr.mxu0 0.0
  %252 = vmatpush1.msra.mxu0 0.0
  %253 = vmatprep.subr.mxu0 0.0
  %254 = vmatpush1.msra.mxu0 0.0
  %255 = vmatprep.subr.mxu0 0.0
  %256 = vmatpush1.msra.mxu0 0.0
  %257 = vmatprep.subr.mxu0 0.0
  %258 = vmatpush1.msra.mxu0 0.0
  %259 = vmatprep.subr.mxu0 0.0
  %260 = vmatpush1.msra.mxu0 0.0
  %261 = vmatprep.subr.mxu0 0.0
  %262 = vmatpush1.msra.mxu0 0.0
  %263 = vmatprep.subr.mxu0 0.0
  %264 = vmatpush1.msra.mxu0 0.0
  %265 = vmatprep.subr.mxu0 0.0
  %266 = vmatpush1.msra.mxu0 0.0
  %267 = vmatprep.subr.mxu0 0.0
  %268 = vmatpush1.msra.mxu0 0.0
  %269 = vmatprep.subr.mxu0 0.0
  %270 = vmatpush1.msra.mxu0 0.0
  %271 = vmatprep.subr.mxu0 0.0
  %272 = vmatpush1.msra.mxu0 0.0
  %273 = vmatprep.subr.mxu0 0.0
  %274 = vmatpush1.msra.mxu0 0.0
  %275 = vmatprep.subr.mxu0 0.0
  %276 = vmatpush1.msra.mxu0 0.0
  %277 = vmatprep.subr.mxu0 0.0
  %278 = vmatpush1.msra.mxu0 0.0
  %279 = vmatprep.subr.mxu0 0.0
  %280 = vmatpush1.msra.mxu0 0.0
  %281 = vmatprep.subr.mxu0 0.0
  %282 = vmatpush1.msra.mxu0 0.0
  %283 = vmatprep.subr.mxu0 0.0
  %284 = vmatpush1.msra.mxu0 0.0
  %285 = vmatprep.subr.mxu0 0.0
  %286 = vmatpush1.msra.mxu0 0.0
  %287 = vmatprep.subr.mxu0 0.0
  %288 = vmatpush1.msra.mxu0 0.0
  %289 = vmatprep.subr.mxu0 0.0
  %290 = vmatpush1.msra.mxu0 0.0
  %291 = vmatprep.mubr.f32.mxu0 0.0
  %292 = vmatmul.mubr.f32.gmra.mrb[0].mxu0 %v222
  %v293 = vpop.f32.mrb[0].mxu0
  %v294 = vadd.f32 0.0, %v293
  %v295 = vpop.f32.mrb[0].mxu0
  %v296 = vadd.f32 0.0, %v295
  %297 = vmatprep.mubr.f32.mxu0 0.0
  %298 = vmatmul.mubr.f32.gmra.mrb[0].mxu0 %v225
  %v299 = vpop.f32.mrb[0].mxu0
  %v300 = vadd.f32 0.0, %v299
  %v301 = vpop.f32.mrb[0].mxu0
  %v302 = vadd.f32 0.0, %v301
  %303 = vdwg.mxu0
  %304 = vmatprep.subr.mxu0 %v215
  %305 = vmatpush1.msra.mxu0 %v214
  %306 = vmatprep.subr.mxu0 %v219
  %307 = vmatpush1.msra.mxu0 %v218
  %308 = vmatprep.subr.mxu0 0.0
  %309 = vmatpush1.msra.mxu0 0.0
  %310 = vmatprep.subr.mxu0 0.0
  %311 = vmatpush1.msra.mxu0 0.0
  %312 = vmatprep.subr.mxu0 0.0
  %313 = vmatpush1.msra.mxu0 0.0
  %314 = vmatprep.subr.mxu0 0.0
  %315 = vmatpush1.msra.mxu0 0.0
  %316 = vmatprep.subr.mxu0 0.0
  %317 = vmatpush1.msra.mxu0 0.0
  %318 = vmatprep.subr.mxu0 0.0
  %319 = vmatpush1.msra.mxu0 0.0
  %320 = vmatprep.subr.mxu0 0.0
  %321 = vmatpush1.msra.mxu0 0.0
  %322 = vmatprep.subr.mxu0 0.0
  %323 = vmatpush1.msra.mxu0 0.0
  %324 = vmatprep.subr.mxu0 0.0
  %325 = vmatpush1.msra.mxu0 0.0
  %326 = vmatprep.subr.mxu0 0.0
  %327 = vmatpush1.msra.mxu0 0.0
  %328 = vmatprep.subr.mxu0 0.0
  %329 = vmatpush1.msra.mxu0 0.0
  %330 = vmatprep.subr.mxu0 0.0
  %331 = vmatpush1.msra.mxu0 0.0
  %332 = vmatprep.subr.mxu0 0.0
  %333 = vmatpush1.msra.mxu0 0.0
  %334 = vmatprep.subr.mxu0 0.0
  %335 = vmatpush1.msra.mxu0 0.0
  %336 = vmatprep.subr.mxu0 0.0
  %337 = vmatpush1.msra.mxu0 0.0
  %338 = vmatprep.subr.mxu0 0.0
  %339 = vmatpush1.msra.mxu0 0.0
  %340 = vmatprep.subr.mxu0 0.0
  %341 = vmatpush1.msra.mxu0 0.0
  %342 = vmatprep.subr.mxu0 0.0
  %343 = vmatpush1.msra.mxu0 0.0
  %344 = vmatprep.subr.mxu0 0.0
  %345 = vmatpush1.msra.mxu0 0.0
  %346 = vmatprep.subr.mxu0 0.0
  %347 = vmatpush1.msra.mxu0 0.0
  %348 = vmatprep.subr.mxu0 0.0
  %349 = vmatpush1.msra.mxu0 0.0
  %350 = vmatprep.subr.mxu0 0.0
  %351 = vmatpush1.msra.mxu0 0.0
  %352 = vmatprep.subr.mxu0 0.0
  %353 = vmatpush1.msra.mxu0 0.0
  %354 = vmatprep.subr.mxu0 0.0
  %355 = vmatpush1.msra.mxu0 0.0
  %356 = vmatprep.subr.mxu0 0.0
  %357 = vmatpush1.msra.mxu0 0.0
  %358 = vmatprep.subr.mxu0 0.0
  %359 = vmatpush1.msra.mxu0 0.0
  %360 = vmatprep.subr.mxu0 0.0
  %361 = vmatpush1.msra.mxu0 0.0
  %362 = vmatprep.subr.mxu0 0.0
  %363 = vmatpush1.msra.mxu0 0.0
  %364 = vmatprep.subr.mxu0 0.0
  %365 = vmatpush1.msra.mxu0 0.0
  %366 = vmatprep.subr.mxu0 0.0
  %367 = vmatpush1.msra.mxu0 0.0
  %368 = vmatprep.mubr.f32.mxu0 0.0
  %369 = vmatmul.mubr.f32.gmra.mrb[0].mxu0 %v222
  %v370 = vpop.f32.mrb[0].mxu0
  %v371 = vadd.f32 0.0, %v370
  %v372 = vpop.f32.mrb[0].mxu0
  %v373 = vadd.f32 0.0, %v372
  %374 = vmatprep.mubr.f32.mxu0 0.0
  %375 = vmatmul.mubr.f32.gmra.mrb[0].mxu0 %v225
  %v376 = vpop.f32.mrb[0].mxu0
  %v377 = vadd.f32 0.0, %v376
  %v378 = vpop.f32.mrb[0].mxu0
  %v379 = vadd.f32 0.0, %v378
  %380 = vdwg.mxu0
  %v382 = vsel %vm220, %v200, 0
  %v385 = vsel %vm220, %v201, 0
  %387 = vmatprep.subr.mxu0 %v203
  %388 = vmatpush1.msra.mxu0 %v202
  %389 = vmatprep.subr.mxu0 %v207
  %390 = vmatpush1.msra.mxu0 %v206
  %391 = vmatprep.subr.mxu0 0.0
  %392 = vmatpush1.msra.mxu0 0.0
  %393 = vmatprep.subr.mxu0 0.0
  %394 = vmatpush1.msra.mxu0 0.0
  %395 = vmatprep.subr.mxu0 0.0
  %396 = vmatpush1.msra.mxu0 0.0
  %397 = vmatprep.subr.mxu0 0.0
  %398 = vmatpush1.msra.mxu0 0.0
  %399 = vmatprep.subr.mxu0 0.0
  %400 = vmatpush1.msra.mxu0 0.0
  %401 = vmatprep.subr.mxu0 0.0
  %402 = vmatpush1.msra.mxu0 0.0
  %403 = vmatprep.subr.mxu0 0.0
  %404 = vmatpush1.msra.mxu0 0.0
  %405 = vmatprep.subr.mxu0 0.0
  %406 = vmatpush1.msra.mxu0 0.0
  %407 = vmatprep.subr.mxu0 0.0
  %408 = vmatpush1.msra.mxu0 0.0
  %409 = vmatprep.subr.mxu0 0.0
  %410 = vmatpush1.msra.mxu0 0.0
  %411 = vmatprep.subr.mxu0 0.0
  %412 = vmatpush1.msra.mxu0 0.0
  %413 = vmatprep.subr.mxu0 0.0
  %414 = vmatpush1.msra.mxu0 0.0
  %415 = vmatprep.subr.mxu0 0.0
  %416 = vmatpush1.msra.mxu0 0.0
  %417 = vmatprep.subr.mxu0 0.0
  %418 = vmatpush1.msra.mxu0 0.0
  %419 = vmatprep.subr.mxu0 0.0
  %420 = vmatpush1.msra.mxu0 0.0
  %421 = vmatprep.subr.mxu0 0.0
  %422 = vmatpush1.msra.mxu0 0.0
  %423 = vmatprep.subr.mxu0 0.0
  %424 = vmatpush1.msra.mxu0 0.0
  %425 = vmatprep.subr.mxu0 0.0
  %426 = vmatpush1.msra.mxu0 0.0
  %427 = vmatprep.subr.mxu0 0.0
  %428 = vmatpush1.msra.mxu0 0.0
  %429 = vmatprep.subr.mxu0 0.0
  %430 = vmatpush1.msra.mxu0 0.0
  %431 = vmatprep.subr.mxu0 0.0
  %432 = vmatpush1.msra.mxu0 0.0
  %433 = vmatprep.subr.mxu0 0.0
  %434 = vmatpush1.msra.mxu0 0.0
  %435 = vmatprep.subr.mxu0 0.0
  %436 = vmatpush1.msra.mxu0 0.0
  %437 = vmatprep.subr.mxu0 0.0
  %438 = vmatpush1.msra.mxu0 0.0
  %439 = vmatprep.subr.mxu0 0.0
  %440 = vmatpush1.msra.mxu0 0.0
  %441 = vmatprep.subr.mxu0 0.0
  %442 = vmatpush1.msra.mxu0 0.0
  %443 = vmatprep.subr.mxu0 0.0
  %444 = vmatpush1.msra.mxu0 0.0
  %445 = vmatprep.subr.mxu0 0.0
  %446 = vmatpush1.msra.mxu0 0.0
  %447 = vmatprep.subr.mxu0 0.0
  %448 = vmatpush1.msra.mxu0 0.0
  %449 = vmatprep.subr.mxu0 0.0
  %450 = vmatpush1.msra.mxu0 0.0
  %451 = vmatprep.mubr.f32.mxu0 0.0
  %452 = vmatmul.mubr.f32.gmra.mrb[0].mxu0 %v382
  %v453 = vpop.f32.mrb[0].mxu0
  %v454 = vadd.f32 %v294, %v453
  %v455 = vpop.f32.mrb[0].mxu0
  %v456 = vadd.f32 %v296, %v455
  %457 = vmatprep.mubr.f32.mxu0 0.0
  %458 = vmatmul.mubr.f32.gmra.mrb[0].mxu0 %v385
  %v459 = vpop.f32.mrb[0].mxu0
  %v460 = vadd.f32 %v300, %v459
  %v461 = vpop.f32.mrb[0].mxu0
  %v462 = vadd.f32 %v302, %v461
  %463 = vdwg.mxu0
  %464 = vmatprep.subr.mxu0 %v205
  %465 = vmatpush1.msra.mxu0 %v204
  %466 = vmatprep.subr.mxu0 %v209
  %467 = vmatpush1.msra.mxu0 %v208
  %468 = vmatprep.subr.mxu0 0.0
  %469 = vmatpush1.msra.mxu0 0.0
  %470 = vmatprep.subr.mxu0 0.0
  %471 = vmatpush1.msra.mxu0 0.0
  %472 = vmatprep.subr.mxu0 0.0
  %473 = vmatpush1.msra.mxu0 0.0
  %474 = vmatprep.subr.mxu0 0.0
  %475 = vmatpush1.msra.mxu0 0.0
  %476 = vmatprep.subr.mxu0 0.0
  %477 = vmatpush1.msra.mxu0 0.0
  %478 = vmatprep.subr.mxu0 0.0
  %479 = vmatpush1.msra.mxu0 0.0
  %480 = vmatprep.subr.mxu0 0.0
  %481 = vmatpush1.msra.mxu0 0.0
  %482 = vmatprep.subr.mxu0 0.0
  %483 = vmatpush1.msra.mxu0 0.0
  %484 = vmatprep.subr.mxu0 0.0
  %485 = vmatpush1.msra.mxu0 0.0
  %486 = vmatprep.subr.mxu0 0.0
  %487 = vmatpush1.msra.mxu0 0.0
  %488 = vmatprep.subr.mxu0 0.0
  %489 = vmatpush1.msra.mxu0 0.0
  %490 = vmatprep.subr.mxu0 0.0
  %491 = vmatpush1.msra.mxu0 0.0
  %492 = vmatprep.subr.mxu0 0.0
  %493 = vmatpush1.msra.mxu0 0.0
  %494 = vmatprep.subr.mxu0 0.0
  %495 = vmatpush1.msra.mxu0 0.0
  %496 = vmatprep.subr.mxu0 0.0
  %497 = vmatpush1.msra.mxu0 0.0
  %498 = vmatprep.subr.mxu0 0.0
  %499 = vmatpush1.msra.mxu0 0.0
  %500 = vmatprep.subr.mxu0 0.0
  %501 = vmatpush1.msra.mxu0 0.0
  %502 = vmatprep.subr.mxu0 0.0
  %503 = vmatpush1.msra.mxu0 0.0
  %504 = vmatprep.subr.mxu0 0.0
  %505 = vmatpush1.msra.mxu0 0.0
  %506 = vmatprep.subr.mxu0 0.0
  %507 = vmatpush1.msra.mxu0 0.0
  %508 = vmatprep.subr.mxu0 0.0
  %509 = vmatpush1.msra.mxu0 0.0
  %510 = vmatprep.subr.mxu0 0.0
  %511 = vmatpush1.msra.mxu0 0.0
  %512 = vmatprep.subr.mxu0 0.0
  %513 = vmatpush1.msra.mxu0 0.0
  %514 = vmatprep.subr.mxu0 0.0
  %515 = vmatpush1.msra.mxu0 0.0
  %516 = vmatprep.subr.mxu0 0.0
  %517 = vmatpush1.msra.mxu0 0.0
  %518 = vmatprep.subr.mxu0 0.0
  %519 = vmatpush1.msra.mxu0 0.0
  %520 = vmatprep.subr.mxu0 0.0
  %521 = vmatpush1.msra.mxu0 0.0
  %522 = vmatprep.subr.mxu0 0.0
  %523 = vmatpush1.msra.mxu0 0.0
  %524 = vmatprep.subr.mxu0 0.0
  %525 = vmatpush1.msra.mxu0 0.0
  %526 = vmatprep.subr.mxu0 0.0
  %527 = vmatpush1.msra.mxu0 0.0
  %528 = vmatprep.mubr.f32.mxu0 0.0
  %529 = vmatmul.mubr.f32.gmra.mrb[0].mxu0 %v382
  %v530 = vpop.f32.mrb[0].mxu0
  %v531 = vadd.f32 %v371, %v530
  %v532 = vpop.f32.mrb[0].mxu0
  %v533 = vadd.f32 %v373, %v532
  %534 = vmatprep.mubr.f32.mxu0 0.0
  %535 = vmatmul.mubr.f32.gmra.mrb[0].mxu0 %v385
  %v536 = vpop.f32.mrb[0].mxu0
  %v537 = vadd.f32 %v377, %v536
  %v538 = vpop.f32.mrb[0].mxu0
  %v539 = vadd.f32 %v379, %v538
  %540 = vdwg.mxu0
  %v541 = vld [vmem:[%s3 + $0x80] sm:$0xff]
  %v542 = vld [vmem:[%s3 + $0x88] sm:$0xff]
  %v543 = vld [vmem:[%s3 + $0x90] sm:$0xff]
  %v544 = vld [vmem:[%s3 + $0x98] sm:$0xff]
  %v545 = vld [vmem:[%s3 + $0xa0] sm:$0xff]
  %v546 = vld [vmem:[%s3 + $0xa8] sm:$0xff]
  %v547 = vld [vmem:[%s3 + $0xb0] sm:$0xff]
  %v548 = vld [vmem:[%s3 + $0xb8] sm:$0xff]
  %v550 = vsel %vm220, %v198, 0
  %v553 = vsel %vm220, %v199, 0
  %555 = vmatprep.subr.mxu0 %v542
  %556 = vmatpush1.msra.mxu0 %v541
  %557 = vmatprep.subr.mxu0 %v546
  %558 = vmatpush1.msra.mxu0 %v545
  %559 = vmatprep.subr.mxu0 0.0
  %560 = vmatpush1.msra.mxu0 0.0
  %561 = vmatprep.subr.mxu0 0.0
  %562 = vmatpush1.msra.mxu0 0.0
  %563 = vmatprep.subr.mxu0 0.0
  %564 = vmatpush1.msra.mxu0 0.0
  %565 = vmatprep.subr.mxu0 0.0
  %566 = vmatpush1.msra.mxu0 0.0
  %567 = vmatprep.subr.mxu0 0.0
  %568 = vmatpush1.msra.mxu0 0.0
  %569 = vmatprep.subr.mxu0 0.0
  %570 = vmatpush1.msra.mxu0 0.0
  %571 = vmatprep.subr.mxu0 0.0
  %572 = vmatpush1.msra.mxu0 0.0
  %573 = vmatprep.subr.mxu0 0.0
  %574 = vmatpush1.msra.mxu0 0.0
  %575 = vmatprep.subr.mxu0 0.0
  %576 = vmatpush1.msra.mxu0 0.0
  %577 = vmatprep.subr.mxu0 0.0
  %578 = vmatpush1.msra.mxu0 0.0
  %579 = vmatprep.subr.mxu0 0.0
  %580 = vmatpush1.msra.mxu0 0.0
  %581 = vmatprep.subr.mxu0 0.0
  %582 = vmatpush1.msra.mxu0 0.0
  %583 = vmatprep.subr.mxu0 0.0
  %584 = vmatpush1.msra.mxu0 0.0
  %585 = vmatprep.subr.mxu0 0.0
  %586 = vmatpush1.msra.mxu0 0.0
  %587 = vmatprep.subr.mxu0 0.0
  %588 = vmatpush1.msra.mxu0 0.0
  %589 = vmatprep.subr.mxu0 0.0
  %590 = vmatpush1.msra.mxu0 0.0
  %591 = vmatprep.subr.mxu0 0.0
  %592 = vmatpush1.msra.mxu0 0.0
  %593 = vmatprep.subr.mxu0 0.0
  %594 = vmatpush1.msra.mxu0 0.0
  %595 = vmatprep.subr.mxu0 0.0
  %596 = vmatpush1.msra.mxu0 0.0
  %597 = vmatprep.subr.mxu0 0.0
  %598 = vmatpush1.msra.mxu0 0.0
  %599 = vmatprep.subr.mxu0 0.0
  %600 = vmatpush1.msra.mxu0 0.0
  %601 = vmatprep.subr.mxu0 0.0
  %602 = vmatpush1.msra.mxu0 0.0
  %603 = vmatprep.subr.mxu0 0.0
  %604 = vmatpush1.msra.mxu0 0.0
  %605 = vmatprep.subr.mxu0 0.0
  %606 = vmatpush1.msra.mxu0 0.0
  %607 = vmatprep.subr.mxu0 0.0
  %608 = vmatpush1.msra.mxu0 0.0
  %609 = vmatprep.subr.mxu0 0.0
  %610 = vmatpush1.msra.mxu0 0.0
  %611 = vmatprep.subr.mxu0 0.0
  %612 = vmatpush1.msra.mxu0 0.0
  %613 = vmatprep.subr.mxu0 0.0
  %614 = vmatpush1.msra.mxu0 0.0
  %615 = vmatprep.subr.mxu0 0.0
  %616 = vmatpush1.msra.mxu0 0.0
  %617 = vmatprep.subr.mxu0 0.0
  %618 = vmatpush1.msra.mxu0 0.0
  %619 = vmatprep.mubr.f32.mxu0 0.0
  %620 = vmatmul.mubr.f32.gmra.mrb[0].mxu0 %v550
  %v621 = vpop.f32.mrb[0].mxu0
  %v622 = vadd.f32 0.0, %v621
  %v623 = vpop.f32.mrb[0].mxu0
  %v624 = vadd.f32 0.0, %v623
  %625 = vmatprep.mubr.f32.mxu0 0.0
  %626 = vmatmul.mubr.f32.gmra.mrb[0].mxu0 %v553
  %v627 = vpop.f32.mrb[0].mxu0
  %v628 = vadd.f32 0.0, %v627
  %v629 = vpop.f32.mrb[0].mxu0
  %v630 = vadd.f32 0.0, %v629
  %631 = vdwg.mxu0
  %632 = vmatprep.subr.mxu0 %v544
  %633 = vmatpush1.msra.mxu0 %v543
  %634 = vmatprep.subr.mxu0 %v548
  %635 = vmatpush1.msra.mxu0 %v547
  %636 = vmatprep.subr.mxu0 0.0
  %637 = vmatpush1.msra.mxu0 0.0
  %638 = vmatprep.subr.mxu0 0.0
  %639 = vmatpush1.msra.mxu0 0.0
  %640 = vmatprep.subr.mxu0 0.0
  %641 = vmatpush1.msra.mxu0 0.0
  %642 = vmatprep.subr.mxu0 0.0
  %643 = vmatpush1.msra.mxu0 0.0
  %644 = vmatprep.subr.mxu0 0.0
  %645 = vmatpush1.msra.mxu0 0.0
  %646 = vmatprep.subr.mxu0 0.0
  %647 = vmatpush1.msra.mxu0 0.0
  %648 = vmatprep.subr.mxu0 0.0
  %649 = vmatpush1.msra.mxu0 0.0
  %650 = vmatprep.subr.mxu0 0.0
  %651 = vmatpush1.msra.mxu0 0.0
  %652 = vmatprep.subr.mxu0 0.0
  %653 = vmatpush1.msra.mxu0 0.0
  %654 = vmatprep.subr.mxu0 0.0
  %655 = vmatpush1.msra.mxu0 0.0
  %656 = vmatprep.subr.mxu0 0.0
  %657 = vmatpush1.msra.mxu0 0.0
  %658 = vmatprep.subr.mxu0 0.0
  %659 = vmatpush1.msra.mxu0 0.0
  %660 = vmatprep.subr.mxu0 0.0
  %661 = vmatpush1.msra.mxu0 0.0
  %662 = vmatprep.subr.mxu0 0.0
  %663 = vmatpush1.msra.mxu0 0.0
  %664 = vmatprep.subr.mxu0 0.0
  %665 = vmatpush1.msra.mxu0 0.0
  %666 = vmatprep.subr.mxu0 0.0
  %667 = vmatpush1.msra.mxu0 0.0
  %668 = vmatprep.subr.mxu0 0.0
  %669 = vmatpush1.msra.mxu0 0.0
  %670 = vmatprep.subr.mxu0 0.0
  %671 = vmatpush1.msra.mxu0 0.0
  %672 = vmatprep.subr.mxu0 0.0
  %673 = vmatpush1.msra.mxu0 0.0
  %674 = vmatprep.subr.mxu0 0.0
  %675 = vmatpush1.msra.mxu0 0.0
  %676 = vmatprep.subr.mxu0 0.0
  %677 = vmatpush1.msra.mxu0 0.0
  %678 = vmatprep.subr.mxu0 0.0
  %679 = vmatpush1.msra.mxu0 0.0
  %680 = vmatprep.subr.mxu0 0.0
  %681 = vmatpush1.msra.mxu0 0.0
  %682 = vmatprep.subr.mxu0 0.0
  %683 = vmatpush1.msra.mxu0 0.0
  %684 = vmatprep.subr.mxu0 0.0
  %685 = vmatpush1.msra.mxu0 0.0
  %686 = vmatprep.subr.mxu0 0.0
  %687 = vmatpush1.msra.mxu0 0.0
  %688 = vmatprep.subr.mxu0 0.0
  %689 = vmatpush1.msra.mxu0 0.0
  %690 = vmatprep.subr.mxu0 0.0
  %691 = vmatpush1.msra.mxu0 0.0
  %692 = vmatprep.subr.mxu0 0.0
  %693 = vmatpush1.msra.mxu0 0.0
  %694 = vmatprep.subr.mxu0 0.0
  %695 = vmatpush1.msra.mxu0 0.0
  %696 = vmatprep.mubr.f32.mxu0 0.0
  %697 = vmatmul.mubr.f32.gmra.mrb[0].mxu0 %v550
  %v698 = vpop.f32.mrb[0].mxu0
  %v699 = vadd.f32 0.0, %v698
  %v700 = vpop.f32.mrb[0].mxu0
  %v701 = vadd.f32 0.0, %v700
  %702 = vmatprep.mubr.f32.mxu0 0.0
  %703 = vmatmul.mubr.f32.gmra.mrb[0].mxu0 %v553
  %v704 = vpop.f32.mrb[0].mxu0
  %v705 = vadd.f32 0.0, %v704
  %v706 = vpop.f32.mrb[0].mxu0
  %v707 = vadd.f32 0.0, %v706
  %708 = vdwg.mxu0
  %v709 = vadd.f32 %v454, %v622
  %v710 = vadd.f32 %v456, %v624
  %v711 = vadd.f32 %v531, %v699
  %v712 = vadd.f32 %v533, %v701
  %v713 = vadd.f32 %v460, %v628
  %v714 = vadd.f32 %v462, %v630
  %v715 = vadd.f32 %v537, %v705
  %v716 = vadd.f32 %v539, %v707
  %v717 = vld [vmem:[%s7] ss:$8 sm:$0xf]
  %v719 = vlaneseq
  %v720 = vshrl.u32 %v719, 7
  %v721 = vsub.s32 0, %v720
  %v722 = vrot.slane %v717, %v721
  %v723 = vlaneseq
  %v724 = vshrl.u32 %v723, 7
  %v725 = vsub.s32 1, %v724
  %v726 = vrot.slane %v717, %v725
  %v727 = vlaneseq
  %v728 = vshrl.u32 %v727, 7
  %v729 = vsub.s32 2, %v728
  %v730 = vrot.slane %v717, %v729
  %v731 = vlaneseq
  %v732 = vshrl.u32 %v731, 7
  %v733 = vsub.s32 3, %v732
  %v734 = vrot.slane %v717, %v733
  %v739 = vadd.f32 %v709, %v722
  %v740 = vadd.f32 %v710, %v726
  %v741 = vadd.f32 %v711, %v730
  %v742 = vadd.f32 %v712, %v734
  %v743 = vadd.f32 %v713, %v722
  %v744 = vadd.f32 %v714, %v726
  %v745 = vadd.f32 %v715, %v730
  %v746 = vadd.f32 %v716, %v734
  %747 = vst [vmem:[#allocation2] sm:$0xff] %v739
  %748 = vst [vmem:[#allocation2 + $0x8] sm:$0xff] %v740
  %749 = vst [vmem:[#allocation2 + $0x10] sm:$0xff] %v741
  %750 = vst [vmem:[#allocation2 + $0x18] sm:$0xff] %v742
  %751 = vst [vmem:[#allocation2 + $0x20] sm:$0xff] %v743
  %752 = vst [vmem:[#allocation2 + $0x28] sm:$0xff] %v744
  %753 = vst [vmem:[#allocation2 + $0x30] sm:$0xff] %v745
  %754 = vst [vmem:[#allocation2 + $0x38] sm:$0xff] %v746
  %v755 = vld [vmem:[%s4] sm:$0xff]
  %v756 = vld [vmem:[%s4 + $0x8] sm:$0xff]
  %v757 = vld [vmem:[%s4 + $0x10] sm:$0xff]
  %v758 = vld [vmem:[%s4 + $0x18] sm:$0xff]
  %v759 = vld [vmem:[%s4 + $0x20] sm:$0xff]
  %v760 = vld [vmem:[%s4 + $0x28] sm:$0xff]
  %v761 = vld [vmem:[%s4 + $0x30] sm:$0xff]
  %v762 = vld [vmem:[%s4 + $0x38] sm:$0xff]
  %v763 = vld [vmem:[%s4 + $0x40] sm:$0xff]
  %v764 = vld [vmem:[%s4 + $0x48] sm:$0xff]
  %v765 = vld [vmem:[%s4 + $0x50] sm:$0xff]
  %v766 = vld [vmem:[%s4 + $0x58] sm:$0xff]
  %v767 = vld [vmem:[%s4 + $0x60] sm:$0xff]
  %v768 = vld [vmem:[%s4 + $0x68] sm:$0xff]
  %v769 = vld [vmem:[%s4 + $0x70] sm:$0xff]
  %v770 = vld [vmem:[%s4 + $0x78] sm:$0xff]
  %v771 = vld [vmem:[#allocation2] sm:$0x3]
  %v772 = vld [vmem:[#allocation2 + $0x8] sm:$0x3]
  %v773 = vld [vmem:[#allocation2 + $0x30] sm:$0xc0]
  %v774 = vld [vmem:[#allocation2 + $0x38] sm:$0xc0]
  %v777 = vrot.slane %v773, 6
  %v778 = vrot.slane %v774, 6
  %v781 = vadd.f32 %v771, %v777
  %v782 = vadd.f32 %v772, %v778
  %v784 = vsel %vm57, 0.0, 0
  %786 = vmatprep.subr.mxu0 %v756
  %787 = vmatpush1.msra.mxu0 %v755
  %788 = vmatprep.subr.mxu0 %v758
  %789 = vmatpush1.msra.mxu0 %v757
  %790 = vmatprep.subr.mxu0 %v760
  %791 = vmatpush1.msra.mxu0 %v759
  %792 = vmatprep.subr.mxu0 %v762
  %793 = vmatpush1.msra.mxu0 %v761
  %794 = vmatprep.subr.mxu0 %v764
  %795 = vmatpush1.msra.mxu0 %v763
  %796 = vmatprep.subr.mxu0 %v766
  %797 = vmatpush1.msra.mxu0 %v765
  %798 = vmatprep.subr.mxu0 %v768
  %799 = vmatpush1.msra.mxu0 %v767
  %800 = vmatprep.subr.mxu0 %v770
  %801 = vmatpush1.msra.mxu0 %v769
  %802 = vmatprep.subr.mxu0 0.0
  %803 = vmatpush1.msra.mxu0 0.0
  %804 = vmatprep.subr.mxu0 0.0
  %805 = vmatpush1.msra.mxu0 0.0
  %806 = vmatprep.subr.mxu0 0.0
  %807 = vmatpush1.msra.mxu0 0.0
  %808 = vmatprep.subr.mxu0 0.0
  %809 = vmatpush1.msra.mxu0 0.0
  %810 = vmatprep.subr.mxu0 0.0
  %811 = vmatpush1.msra.mxu0 0.0
  %812 = vmatprep.subr.mxu0 0.0
  %813 = vmatpush1.msra.mxu0 0.0
  %814 = vmatprep.subr.mxu0 0.0
  %815 = vmatpush1.msra.mxu0 0.0
  %816 = vmatprep.subr.mxu0 0.0
  %817 = vmatpush1.msra.mxu0 0.0
  %818 = vmatprep.subr.mxu0 0.0
  %819 = vmatpush1.msra.mxu0 0.0
  %820 = vmatprep.subr.mxu0 0.0
  %821 = vmatpush1.msra.mxu0 0.0
  %822 = vmatprep.subr.mxu0 0.0
  %823 = vmatpush1.msra.mxu0 0.0
  %824 = vmatprep.subr.mxu0 0.0
  %825 = vmatpush1.msra.mxu0 0.0
  %826 = vmatprep.subr.mxu0 0.0
  %827 = vmatpush1.msra.mxu0 0.0
  %828 = vmatprep.subr.mxu0 0.0
  %829 = vmatpush1.msra.mxu0 0.0
  %830 = vmatprep.subr.mxu0 0.0
  %831 = vmatpush1.msra.mxu0 0.0
  %832 = vmatprep.subr.mxu0 0.0
  %833 = vmatpush1.msra.mxu0 0.0
  %834 = vmatprep.subr.mxu0 0.0
  %835 = vmatpush1.msra.mxu0 0.0
  %836 = vmatprep.subr.mxu0 0.0
  %837 = vmatpush1.msra.mxu0 0.0
  %838 = vmatprep.subr.mxu0 0.0
  %839 = vmatpush1.msra.mxu0 0.0
  %840 = vmatprep.subr.mxu0 0.0
  %841 = vmatpush1.msra.mxu0 0.0
  %842 = vmatprep.subr.mxu0 0.0
  %843 = vmatpush1.msra.mxu0 0.0
  %844 = vmatprep.subr.mxu0 0.0
  %845 = vmatpush1.msra.mxu0 0.0
  %846 = vmatprep.subr.mxu0 0.0
  %847 = vmatpush1.msra.mxu0 0.0
  %848 = vmatprep.subr.mxu0 0.0
  %849 = vmatpush1.msra.mxu0 0.0
  %850 = vmatprep.mubr.f32.mxu0 0.0
  %851 = vmatmul.mubr.f32.gmra.mrb[0].mxu0 %v784
  %v852 = vpop.f32.mrb[0].mxu0
  %v853 = vadd.f32 0.0, %v852
  %v854 = vpop.f32.mrb[0].mxu0
  %v855 = vadd.f32 0.0, %v854
  %856 = vdwg.mxu0
  %v857 = vadd.f32 %v781, %v853
  %v858 = vadd.f32 %v782, %v855
  %v859 = vxor.u32 %v857, 2147483648
  %v860 = vxor.u32 %v858, 2147483648
  %v861 = vmul.f32 %v859, 1.442695
  %v862 = vpow.pop %v861
  %v863 = vmul.f32 %v860, 1.442695
  %v864 = vpow.pop %v863
  %v865 = vadd.f32 %v862, 1.0
  %v866 = vadd.f32 %v864, 1.0
  %v867 = vrcp.pop %v865
  %v868 = vmul.f32 1.0, %v867
  %v869 = vrcp.pop %v866
  %v870 = vmul.f32 1.0, %v869
  %v871 = vtanh.pop %v858
  %v872 = vmul.f32 %v868, 0.0
  %v873 = vmul.f32 %v868, %v871
  %875 = vrot.lane.b32.xlu0 %v873, 64
  %v876 = vpop.permute.xlu0 %875
  %v878 = vadd.f32 %v872, %v876
  %v879 = vtanh.pop %v878
  %v880 = vmul.f32 %v870, %v879
  %v881 = vld [vmem:[#allocation2] sm:$0xc]
  %v882 = vld [vmem:[#allocation2 + $0x8] sm:$0xc]
  %v883 = vld [vmem:[#allocation2 + $0x30] sm:$0x30]
  %v884 = vld [vmem:[#allocation2 + $0x38] sm:$0x30]
  %v887 = vrot.slane %v883, 2
  %v888 = vrot.slane %v884, 2
  %v891 = vadd.f32 %v881, %v887
  %v892 = vadd.f32 %v882, %v888
  %894 = vrot.lane.b32.xlu0 %v880, 64
  %v895 = vpop.permute.xlu0 %894
  %v896 = vsel %vm57, %v895, 0
  %898 = vmatprep.subr.mxu0 %v756
  %899 = vmatpush1.msra.mxu0 %v755
  %900 = vmatprep.subr.mxu0 %v758
  %901 = vmatpush1.msra.mxu0 %v757
  %902 = vmatprep.subr.mxu0 %v760
  %903 = vmatpush1.msra.mxu0 %v759
  %904 = vmatprep.subr.mxu0 %v762
  %905 = vmatpush1.msra.mxu0 %v761
  %906 = vmatprep.subr.mxu0 %v764
  %907 = vmatpush1.msra.mxu0 %v763
  %908 = vmatprep.subr.mxu0 %v766
  %909 = vmatpush1.msra.mxu0 %v765
  %910 = vmatprep.subr.mxu0 %v768
  %911 = vmatpush1.msra.mxu0 %v767
  %912 = vmatprep.subr.mxu0 %v770
  %913 = vmatpush1.msra.mxu0 %v769
  %914 = vmatprep.subr.mxu0 0.0
  %915 = vmatpush1.msra.mxu0 0.0
  %916 = vmatprep.subr.mxu0 0.0
  %917 = vmatpush1.msra.mxu0 0.0
  %918 = vmatprep.subr.mxu0 0.0
  %919 = vmatpush1.msra.mxu0 0.0
  %920 = vmatprep.subr.mxu0 0.0
  %921 = vmatpush1.msra.mxu0 0.0
  %922 = vmatprep.subr.mxu0 0.0
  %923 = vmatpush1.msra.mxu0 0.0
  %924 = vmatprep.subr.mxu0 0.0
  %925 = vmatpush1.msra.mxu0 0.0
  %926 = vmatprep.subr.mxu0 0.0
  %927 = vmatpush1.msra.mxu0 0.0
  %928 = vmatprep.subr.mxu0 0.0
  %929 = vmatpush1.msra.mxu0 0.0
  %930 = vmatprep.subr.mxu0 0.0
  %931 = vmatpush1.msra.mxu0 0.0
  %932 = vmatprep.subr.mxu0 0.0
  %933 = vmatpush1.msra.mxu0 0.0
  %934 = vmatprep.subr.mxu0 0.0
  %935 = vmatpush1.msra.mxu0 0.0
  %936 = vmatprep.subr.mxu0 0.0
  %937 = vmatpush1.msra.mxu0 0.0
  %938 = vmatprep.subr.mxu0 0.0
  %939 = vmatpush1.msra.mxu0 0.0
  %940 = vmatprep.subr.mxu0 0.0
  %941 = vmatpush1.msra.mxu0 0.0
  %942 = vmatprep.subr.mxu0 0.0
  %943 = vmatpush1.msra.mxu0 0.0
  %944 = vmatprep.subr.mxu0 0.0
  %945 = vmatpush1.msra.mxu0 0.0
  %946 = vmatprep.subr.mxu0 0.0
  %947 = vmatpush1.msra.mxu0 0.0
  %948 = vmatprep.subr.mxu0 0.0
  %949 = vmatpush1.msra.mxu0 0.0
  %950 = vmatprep.subr.mxu0 0.0
  %951 = vmatpush1.msra.mxu0 0.0
  %952 = vmatprep.subr.mxu0 0.0
  %953 = vmatpush1.msra.mxu0 0.0
  %954 = vmatprep.subr.mxu0 0.0
  %955 = vmatpush1.msra.mxu0 0.0
  %956 = vmatprep.subr.mxu0 0.0
  %957 = vmatpush1.msra.mxu0 0.0
  %958 = vmatprep.subr.mxu0 0.0
  %959 = vmatpush1.msra.mxu0 0.0
  %960 = vmatprep.subr.mxu0 0.0
  %961 = vmatpush1.msra.mxu0 0.0
  %962 = vmatprep.mubr.f32.mxu0 0.0
  %963 = vmatmul.mubr.f32.gmra.mrb[0].mxu0 %v896
  %v964 = vpop.f32.mrb[0].mxu0
  %v965 = vadd.f32 0.0, %v964
  %v966 = vpop.f32.mrb[0].mxu0
  %v967 = vadd.f32 0.0, %v966
  %968 = vdwg.mxu0
  %v971 = vrot.slane %v965, 6
  %v972 = vrot.slane %v967, 6
  %v975 = vadd.f32 %v891, %v971
  %v976 = vadd.f32 %v892, %v972
  %v977 = vxor.u32 %v975, 2147483648
  %v978 = vxor.u32 %v976, 2147483648
  %v979 = vmul.f32 %v977, 1.442695
  %v980 = vpow.pop %v979
  %v981 = vmul.f32 %v978, 1.442695
  %v982 = vpow.pop %v981
  %v983 = vadd.f32 %v980, 1.0
  %v984 = vadd.f32 %v982, 1.0
  %v985 = vrcp.pop %v983
  %v986 = vmul.f32 1.0, %v985
  %v987 = vrcp.pop %v984
  %v988 = vmul.f32 1.0, %v987
  %v989 = vtanh.pop %v976
  %v991 = vrot.slane %v878, 6
  %v993 = vmul.f32 %v986, %v991
  %v994 = vmul.f32 %v986, %v989
  %996 = vrot.lane.b32.xlu0 %v994, 64
  %v997 = vpop.permute.xlu0 %996
  %v999 = vadd.f32 %v993, %v997
  %v1000 = vtanh.pop %v999
  %v1001 = vmul.f32 %v988, %v1000
  %v1002 = vld [vmem:[#allocation2] sm:$0x30]
  %v1003 = vld [vmem:[#allocation2 + $0x8] sm:$0x30]
  %v1004 = vld [vmem:[#allocation2 + $0x30] sm:$0xc]
  %v1005 = vld [vmem:[#allocation2 + $0x38] sm:$0xc]
  %v1008 = vrot.slane %v1004, 6
  %v1009 = vrot.slane %v1005, 6
  %v1012 = vadd.f32 %v1002, %v1008
  %v1013 = vadd.f32 %v1003, %v1009
  %v1015 = vrot.slane %v1001, 2
  %1016 = vrot.lane.b32.xlu0 %v1015, 64
  %v1017 = vpop.permute.xlu0 %1016
  %v1018 = vsel %vm57, %v1017, 0
  %1020 = vmatprep.subr.mxu0 %v756
  %1021 = vmatpush1.msra.mxu0 %v755
  %1022 = vmatprep.subr.mxu0 %v758
  %1023 = vmatpush1.msra.mxu0 %v757
  %1024 = vmatprep.subr.mxu0 %v760
  %1025 = vmatpush1.msra.mxu0 %v759
  %1026 = vmatprep.subr.mxu0 %v762
  %1027 = vmatpush1.msra.mxu0 %v761
  %1028 = vmatprep.subr.mxu0 %v764
  %1029 = vmatpush1.msra.mxu0 %v763
  %1030 = vmatprep.subr.mxu0 %v766
  %1031 = vmatpush1.msra.mxu0 %v765
  %1032 = vmatprep.subr.mxu0 %v768
  %1033 = vmatpush1.msra.mxu0 %v767
  %1034 = vmatprep.subr.mxu0 %v770
  %1035 = vmatpush1.msra.mxu0 %v769
  %1036 = vmatprep.subr.mxu0 0.0
  %1037 = vmatpush1.msra.mxu0 0.0
  %1038 = vmatprep.subr.mxu0 0.0
  %1039 = vmatpush1.msra.mxu0 0.0
  %1040 = vmatprep.subr.mxu0 0.0
  %1041 = vmatpush1.msra.mxu0 0.0
  %1042 = vmatprep.subr.mxu0 0.0
  %1043 = vmatpush1.msra.mxu0 0.0
  %1044 = vmatprep.subr.mxu0 0.0
  %1045 = vmatpush1.msra.mxu0 0.0
  %1046 = vmatprep.subr.mxu0 0.0
  %1047 = vmatpush1.msra.mxu0 0.0
  %1048 = vmatprep.subr.mxu0 0.0
  %1049 = vmatpush1.msra.mxu0 0.0
  %1050 = vmatprep.subr.mxu0 0.0
  %1051 = vmatpush1.msra.mxu0 0.0
  %1052 = vmatprep.subr.mxu0 0.0
  %1053 = vmatpush1.msra.mxu0 0.0
  %1054 = vmatprep.subr.mxu0 0.0
  %1055 = vmatpush1.msra.mxu0 0.0
  %1056 = vmatprep.subr.mxu0 0.0
  %1057 = vmatpush1.msra.mxu0 0.0
  %1058 = vmatprep.subr.mxu0 0.0
  %1059 = vmatpush1.msra.mxu0 0.0
  %1060 = vmatprep.subr.mxu0 0.0
  %1061 = vmatpush1.msra.mxu0 0.0
  %1062 = vmatprep.subr.mxu0 0.0
  %1063 = vmatpush1.msra.mxu0 0.0
  %1064 = vmatprep.subr.mxu0 0.0
  %1065 = vmatpush1.msra.mxu0 0.0
  %1066 = vmatprep.subr.mxu0 0.0
  %1067 = vmatpush1.msra.mxu0 0.0
  %1068 = vmatprep.subr.mxu0 0.0
  %1069 = vmatpush1.msra.mxu0 0.0
  %1070 = vmatprep.subr.mxu0 0.0
  %1071 = vmatpush1.msra.mxu0 0.0
  %1072 = vmatprep.subr.mxu0 0.0
  %1073 = vmatpush1.msra.mxu0 0.0
  %1074 = vmatprep.subr.mxu0 0.0
  %1075 = vmatpush1.msra.mxu0 0.0
  %1076 = vmatprep.subr.mxu0 0.0
  %1077 = vmatpush1.msra.mxu0 0.0
  %1078 = vmatprep.subr.mxu0 0.0
  %1079 = vmatpush1.msra.mxu0 0.0
  %1080 = vmatprep.subr.mxu0 0.0
  %1081 = vmatpush1.msra.mxu0 0.0
  %1082 = vmatprep.subr.mxu0 0.0
  %1083 = vmatpush1.msra.mxu0 0.0
  %1084 = vmatprep.mubr.f32.mxu0 0.0
  %1085 = vmatmul.mubr.f32.gmra.mrb[0].mxu0 %v1018
  %v1086 = vpop.f32.mrb[0].mxu0
  %v1087 = vadd.f32 0.0, %v1086
  %v1088 = vpop.f32.mrb[0].mxu0
  %v1089 = vadd.f32 0.0, %v1088
  %1090 = vdwg.mxu0
  %v1093 = vrot.slane %v1087, 4
  %v1094 = vrot.slane %v1089, 4
  %v1097 = vadd.f32 %v1012, %v1093
  %v1098 = vadd.f32 %v1013, %v1094
  %v1099 = vxor.u32 %v1097, 2147483648
  %v1100 = vxor.u32 %v1098, 2147483648
  %v1101 = vmul.f32 %v1099, 1.442695
  %v1102 = vpow.pop %v1101
  %v1103 = vmul.f32 %v1100, 1.442695
  %v1104 = vpow.pop %v1103
  %v1105 = vadd.f32 %v1102, 1.0
  %v1106 = vadd.f32 %v1104, 1.0
  %v1107 = vrcp.pop %v1105
  %v1108 = vmul.f32 1.0, %v1107
  %v1109 = vrcp.pop %v1106
  %v1110 = vmul.f32 1.0, %v1109
  %v1111 = vtanh.pop %v1098
  %v1113 = vrot.slane %v999, 6
  %v1115 = vmul.f32 %v1108, %v1113
  %v1116 = vmul.f32 %v1108, %v1111
  %1118 = vrot.lane.b32.xlu0 %v1116, 64
  %v1119 = vpop.permute.xlu0 %1118
  %v1121 = vadd.f32 %v1115, %v1119
  %v1122 = vtanh.pop %v1121
  %v1123 = vmul.f32 %v1110, %v1122
  %v1124 = vld [vmem:[#allocation2] sm:$0xc0]
  %v1125 = vld [vmem:[#allocation2 + $0x8] sm:$0xc0]
  %v1126 = vld [vmem:[#allocation2 + $0x30] sm:$0x3]
  %v1127 = vld [vmem:[#allocation2 + $0x38] sm:$0x3]
  %v1130 = vrot.slane %v1126, 2
  %v1131 = vrot.slane %v1127, 2
  %v1134 = vadd.f32 %v1124, %v1130
  %v1135 = vadd.f32 %v1125, %v1131
  %v1137 = vrot.slane %v1123, 4
  %1138 = vrot.lane.b32.xlu0 %v1137, 64
  %v1139 = vpop.permute.xlu0 %1138
  %v1140 = vsel %vm57, %v1139, 0
  %1142 = vmatprep.subr.mxu0 %v756
  %1143 = vmatpush1.msra.mxu0 %v755
  %1144 = vmatprep.subr.mxu0 %v758
  %1145 = vmatpush1.msra.mxu0 %v757
  %1146 = vmatprep.subr.mxu0 %v760
  %1147 = vmatpush1.msra.mxu0 %v759
  %1148 = vmatprep.subr.mxu0 %v762
  %1149 = vmatpush1.msra.mxu0 %v761
  %1150 = vmatprep.subr.mxu0 %v764
  %1151 = vmatpush1.msra.mxu0 %v763
  %1152 = vmatprep.subr.mxu0 %v766
  %1153 = vmatpush1.msra.mxu0 %v765
  %1154 = vmatprep.subr.mxu0 %v768
  %1155 = vmatpush1.msra.mxu0 %v767
  %1156 = vmatprep.subr.mxu0 %v770
  %1157 = vmatpush1.msra.mxu0 %v769
  %1158 = vmatprep.subr.mxu0 0.0
  %1159 = vmatpush1.msra.mxu0 0.0
  %1160 = vmatprep.subr.mxu0 0.0
  %1161 = vmatpush1.msra.mxu0 0.0
  %1162 = vmatprep.subr.mxu0 0.0
  %1163 = vmatpush1.msra.mxu0 0.0
  %1164 = vmatprep.subr.mxu0 0.0
  %1165 = vmatpush1.msra.mxu0 0.0
  %1166 = vmatprep.subr.mxu0 0.0
  %1167 = vmatpush1.msra.mxu0 0.0
  %1168 = vmatprep.subr.mxu0 0.0
  %1169 = vmatpush1.msra.mxu0 0.0
  %1170 = vmatprep.subr.mxu0 0.0
  %1171 = vmatpush1.msra.mxu0 0.0
  %1172 = vmatprep.subr.mxu0 0.0
  %1173 = vmatpush1.msra.mxu0 0.0
  %1174 = vmatprep.subr.mxu0 0.0
  %1175 = vmatpush1.msra.mxu0 0.0
  %1176 = vmatprep.subr.mxu0 0.0
  %1177 = vmatpush1.msra.mxu0 0.0
  %1178 = vmatprep.subr.mxu0 0.0
  %1179 = vmatpush1.msra.mxu0 0.0
  %1180 = vmatprep.subr.mxu0 0.0
  %1181 = vmatpush1.msra.mxu0 0.0
  %1182 = vmatprep.subr.mxu0 0.0
  %1183 = vmatpush1.msra.mxu0 0.0
  %1184 = vmatprep.subr.mxu0 0.0
  %1185 = vmatpush1.msra.mxu0 0.0
  %1186 = vmatprep.subr.mxu0 0.0
  %1187 = vmatpush1.msra.mxu0 0.0
  %1188 = vmatprep.subr.mxu0 0.0
  %1189 = vmatpush1.msra.mxu0 0.0
  %1190 = vmatprep.subr.mxu0 0.0
  %1191 = vmatpush1.msra.mxu0 0.0
  %1192 = vmatprep.subr.mxu0 0.0
  %1193 = vmatpush1.msra.mxu0 0.0
  %1194 = vmatprep.subr.mxu0 0.0
  %1195 = vmatpush1.msra.mxu0 0.0
  %1196 = vmatprep.subr.mxu0 0.0
  %1197 = vmatpush1.msra.mxu0 0.0
  %1198 = vmatprep.subr.mxu0 0.0
  %1199 = vmatpush1.msra.mxu0 0.0
  %1200 = vmatprep.subr.mxu0 0.0
  %1201 = vmatpush1.msra.mxu0 0.0
  %1202 = vmatprep.subr.mxu0 0.0
  %1203 = vmatpush1.msra.mxu0 0.0
  %1204 = vmatprep.subr.mxu0 0.0
  %1205 = vmatpush1.msra.mxu0 0.0
  %1206 = vmatprep.mubr.f32.mxu0 0.0
  %1207 = vmatmul.mubr.f32.gmra.mrb[0].mxu0 %v1140
  %v1208 = vpop.f32.mrb[0].mxu0
  %v1209 = vadd.f32 0.0, %v1208
  %v1210 = vpop.f32.mrb[0].mxu0
  %v1211 = vadd.f32 0.0, %v1210
  %1212 = vdwg.mxu0
  %v1215 = vrot.slane %v1209, 2
  %v1216 = vrot.slane %v1211, 2
  %v1219 = vadd.f32 %v1134, %v1215
  %v1220 = vadd.f32 %v1135, %v1216
  %v1221 = vxor.u32 %v1219, 2147483648
  %v1222 = vxor.u32 %v1220, 2147483648
  %v1223 = vmul.f32 %v1221, 1.442695
  %v1224 = vpow.pop %v1223
  %v1225 = vmul.f32 %v1222, 1.442695
  %v1226 = vpow.pop %v1225
  %v1227 = vadd.f32 %v1224, 1.0
  %v1228 = vadd.f32 %v1226, 1.0
  %v1229 = vrcp.pop %v1227
  %v1230 = vmul.f32 1.0, %v1229
  %v1231 = vrcp.pop %v1228
  %v1232 = vmul.f32 1.0, %v1231
  %v1233 = vtanh.pop %v1220
  %v1235 = vrot.slane %v1121, 6
  %v1237 = vmul.f32 %v1230, %v1235
  %v1238 = vmul.f32 %v1230, %v1233
  %1240 = vrot.lane.b32.xlu0 %v1238, 64
  %v1241 = vpop.permute.xlu0 %1240
  %v1243 = vadd.f32 %v1237, %v1241
  %v1244 = vtanh.pop %v1243
  %v1245 = vmul.f32 %v1232, %v1244
  %v1246 = vld [vmem:[#allocation2 + $0x20] sm:$0x3]
  %v1247 = vld [vmem:[#allocation2 + $0x28] sm:$0x3]
  %v1248 = vld [vmem:[#allocation2 + $0x10] sm:$0xc0]
  %v1249 = vld [vmem:[#allocation2 + $0x18] sm:$0xc0]
  %v1252 = vrot.slane %v1248, 6
  %v1253 = vrot.slane %v1249, 6
  %v1256 = vadd.f32 %v1246, %v1252
  %v1257 = vadd.f32 %v1247, %v1253
  %v1259 = vrot.slane %v1245, 6
  %1260 = vrot.lane.b32.xlu0 %v1259, 64
  %v1261 = vpop.permute.xlu0 %1260
  %v1262 = vsel %vm57, %v1261, 0
  %1264 = vmatprep.subr.mxu0 %v756
  %1265 = vmatpush1.msra.mxu0 %v755
  %1266 = vmatprep.subr.mxu0 %v758
  %1267 = vmatpush1.msra.mxu0 %v757
  %1268 = vmatprep.subr.mxu0 %v760
  %1269 = vmatpush1.msra.mxu0 %v759
  %1270 = vmatprep.subr.mxu0 %v762
  %1271 = vmatpush1.msra.mxu0 %v761
  %1272 = vmatprep.subr.mxu0 %v764
  %1273 = vmatpush1.msra.mxu0 %v763
  %1274 = vmatprep.subr.mxu0 %v766
  %1275 = vmatpush1.msra.mxu0 %v765
  %1276 = vmatprep.subr.mxu0 %v768
  %1277 = vmatpush1.msra.mxu0 %v767
  %1278 = vmatprep.subr.mxu0 %v770
  %1279 = vmatpush1.msra.mxu0 %v769
  %1280 = vmatprep.subr.mxu0 0.0
  %1281 = vmatpush1.msra.mxu0 0.0
  %1282 = vmatprep.subr.mxu0 0.0
  %1283 = vmatpush1.msra.mxu0 0.0
  %1284 = vmatprep.subr.mxu0 0.0
  %1285 = vmatpush1.msra.mxu0 0.0
  %1286 = vmatprep.subr.mxu0 0.0
  %1287 = vmatpush1.msra.mxu0 0.0
  %1288 = vmatprep.subr.mxu0 0.0
  %1289 = vmatpush1.msra.mxu0 0.0
  %1290 = vmatprep.subr.mxu0 0.0
  %1291 = vmatpush1.msra.mxu0 0.0
  %1292 = vmatprep.subr.mxu0 0.0
  %1293 = vmatpush1.msra.mxu0 0.0
  %1294 = vmatprep.subr.mxu0 0.0
  %1295 = vmatpush1.msra.mxu0 0.0
  %1296 = vmatprep.subr.mxu0 0.0
  %1297 = vmatpush1.msra.mxu0 0.0
  %1298 = vmatprep.subr.mxu0 0.0
  %1299 = vmatpush1.msra.mxu0 0.0
  %1300 = vmatprep.subr.mxu0 0.0
  %1301 = vmatpush1.msra.mxu0 0.0
  %1302 = vmatprep.subr.mxu0 0.0
  %1303 = vmatpush1.msra.mxu0 0.0
  %1304 = vmatprep.subr.mxu0 0.0
  %1305 = vmatpush1.msra.mxu0 0.0
  %1306 = vmatprep.subr.mxu0 0.0
  %1307 = vmatpush1.msra.mxu0 0.0
  %1308 = vmatprep.subr.mxu0 0.0
  %1309 = vmatpush1.msra.mxu0 0.0
  %1310 = vmatprep.subr.mxu0 0.0
  %1311 = vmatpush1.msra.mxu0 0.0
  %1312 = vmatprep.subr.mxu0 0.0
  %1313 = vmatpush1.msra.mxu0 0.0
  %1314 = vmatprep.subr.mxu0 0.0
  %1315 = vmatpush1.msra.mxu0 0.0
  %1316 = vmatprep.subr.mxu0 0.0
  %1317 = vmatpush1.msra.mxu0 0.0
  %1318 = vmatprep.subr.mxu0 0.0
  %1319 = vmatpush1.msra.mxu0 0.0
  %1320 = vmatprep.subr.mxu0 0.0
  %1321 = vmatpush1.msra.mxu0 0.0
  %1322 = vmatprep.subr.mxu0 0.0
  %1323 = vmatpush1.msra.mxu0 0.0
  %1324 = vmatprep.subr.mxu0 0.0
  %1325 = vmatpush1.msra.mxu0 0.0
  %1326 = vmatprep.subr.mxu0 0.0
  %1327 = vmatpush1.msra.mxu0 0.0
  %1328 = vmatprep.mubr.f32.mxu0 0.0
  %1329 = vmatmul.mubr.f32.gmra.mrb[0].mxu0 %v1262
  %v1330 = vpop.f32.mrb[0].mxu0
  %v1331 = vadd.f32 0.0, %v1330
  %v1332 = vpop.f32.mrb[0].mxu0
  %v1333 = vadd.f32 0.0, %v1332
  %1334 = vdwg.mxu0
  %v1335 = vadd.f32 %v1256, %v1331
  %v1336 = vadd.f32 %v1257, %v1333
  %v1337 = vxor.u32 %v1335, 2147483648
  %v1338 = vxor.u32 %v1336, 2147483648
  %v1339 = vmul.f32 %v1337, 1.442695
  %v1340 = vpow.pop %v1339
  %v1341 = vmul.f32 %v1338, 1.442695
  %v1342 = vpow.pop %v1341
  %v1343 = vadd.f32 %v1340, 1.0
  %v1344 = vadd.f32 %v1342, 1.0
  %v1345 = vrcp.pop %v1343
  %v1346 = vmul.f32 1.0, %v1345
  %v1347 = vrcp.pop %v1344
  %v1348 = vmul.f32 1.0, %v1347
  %v1349 = vtanh.pop %v1336
  %v1351 = vrot.slane %v1243, 6
  %v1353 = vmul.f32 %v1346, %v1351
  %v1354 = vmul.f32 %v1346, %v1349
  %1356 = vrot.lane.b32.xlu0 %v1354, 64
  %v1357 = vpop.permute.xlu0 %1356
  %v1359 = vadd.f32 %v1353, %v1357
  %v1360 = vtanh.pop %v1359
  %v1361 = vmul.f32 %v1348, %v1360
  %v1362 = vld [vmem:[#allocation2 + $0x20] sm:$0xc]
  %v1363 = vld [vmem:[#allocation2 + $0x28] sm:$0xc]
  %v1364 = vld [vmem:[#allocation2 + $0x10] sm:$0x30]
  %v1365 = vld [vmem:[#allocation2 + $0x18] sm:$0x30]
  %v1368 = vrot.slane %v1364, 2
  %v1369 = vrot.slane %v1365, 2
  %v1372 = vadd.f32 %v1362, %v1368
  %v1373 = vadd.f32 %v1363, %v1369
  %1375 = vrot.lane.b32.xlu0 %v1361, 64
  %v1376 = vpop.permute.xlu0 %1375
  %v1377 = vsel %vm57, %v1376, 0
  %1379 = vmatprep.subr.mxu0 %v756
  %1380 = vmatpush1.msra.mxu0 %v755
  %1381 = vmatprep.subr.mxu0 %v758
  %1382 = vmatpush1.msra.mxu0 %v757
  %1383 = vmatprep.subr.mxu0 %v760
  %1384 = vmatpush1.msra.mxu0 %v759
  %1385 = vmatprep.subr.mxu0 %v762
  %1386 = vmatpush1.msra.mxu0 %v761
  %1387 = vmatprep.subr.mxu0 %v764
  %1388 = vmatpush1.msra.mxu0 %v763
  %1389 = vmatprep.subr.mxu0 %v766
  %1390 = vmatpush1.msra.mxu0 %v765
  %1391 = vmatprep.subr.mxu0 %v768
  %1392 = vmatpush1.msra.mxu0 %v767
  %1393 = vmatprep.subr.mxu0 %v770
  %1394 = vmatpush1.msra.mxu0 %v769
  %1395 = vmatprep.subr.mxu0 0.0
  %1396 = vmatpush1.msra.mxu0 0.0
  %1397 = vmatprep.subr.mxu0 0.0
  %1398 = vmatpush1.msra.mxu0 0.0
  %1399 = vmatprep.subr.mxu0 0.0
  %1400 = vmatpush1.msra.mxu0 0.0
  %1401 = vmatprep.subr.mxu0 0.0
  %1402 = vmatpush1.msra.mxu0 0.0
  %1403 = vmatprep.subr.mxu0 0.0
  %1404 = vmatpush1.msra.mxu0 0.0
  %1405 = vmatprep.subr.mxu0 0.0
  %1406 = vmatpush1.msra.mxu0 0.0
  %1407 = vmatprep.subr.mxu0 0.0
  %1408 = vmatpush1.msra.mxu0 0.0
  %1409 = vmatprep.subr.mxu0 0.0
  %1410 = vmatpush1.msra.mxu0 0.0
  %1411 = vmatprep.subr.mxu0 0.0
  %1412 = vmatpush1.msra.mxu0 0.0
  %1413 = vmatprep.subr.mxu0 0.0
  %1414 = vmatpush1.msra.mxu0 0.0
  %1415 = vmatprep.subr.mxu0 0.0
  %1416 = vmatpush1.msra.mxu0 0.0
  %1417 = vmatprep.subr.mxu0 0.0
  %1418 = vmatpush1.msra.mxu0 0.0
  %1419 = vmatprep.subr.mxu0 0.0
  %1420 = vmatpush1.msra.mxu0 0.0
  %1421 = vmatprep.subr.mxu0 0.0
  %1422 = vmatpush1.msra.mxu0 0.0
  %1423 = vmatprep.subr.mxu0 0.0
  %1424 = vmatpush1.msra.mxu0 0.0
  %1425 = vmatprep.subr.mxu0 0.0
  %1426 = vmatpush1.msra.mxu0 0.0
  %1427 = vmatprep.subr.mxu0 0.0
  %1428 = vmatpush1.msra.mxu0 0.0
  %1429 = vmatprep.subr.mxu0 0.0
  %1430 = vmatpush1.msra.mxu0 0.0
  %1431 = vmatprep.subr.mxu0 0.0
  %1432 = vmatpush1.msra.mxu0 0.0
  %1433 = vmatprep.subr.mxu0 0.0
  %1434 = vmatpush1.msra.mxu0 0.0
  %1435 = vmatprep.subr.mxu0 0.0
  %1436 = vmatpush1.msra.mxu0 0.0
  %1437 = vmatprep.subr.mxu0 0.0
  %1438 = vmatpush1.msra.mxu0 0.0
  %1439 = vmatprep.subr.mxu0 0.0
  %1440 = vmatpush1.msra.mxu0 0.0
  %1441 = vmatprep.subr.mxu0 0.0
  %1442 = vmatpush1.msra.mxu0 0.0
  %1443 = vmatprep.mubr.f32.mxu0 0.0
  %1444 = vmatmul.mubr.f32.gmra.mrb[0].mxu0 %v1377
  %v1445 = vpop.f32.mrb[0].mxu0
  %v1446 = vadd.f32 0.0, %v1445
  %v1447 = vpop.f32.mrb[0].mxu0
  %v1448 = vadd.f32 0.0, %v1447
  %1449 = vdwg.mxu0
  %v1452 = vrot.slane %v1446, 6
  %v1453 = vrot.slane %v1448, 6
  %v1456 = vadd.f32 %v1372, %v1452
  %v1457 = vadd.f32 %v1373, %v1453
  %v1458 = vxor.u32 %v1456, 2147483648
  %v1459 = vxor.u32 %v1457, 2147483648
  %v1460 = vmul.f32 %v1458, 1.442695
  %v1461 = vpow.pop %v1460
  %v1462 = vmul.f32 %v1459, 1.442695
  %v1463 = vpow.pop %v1462
  %v1464 = vadd.f32 %v1461, 1.0
  %v1465 = vadd.f32 %v1463, 1.0
  %v1466 = vrcp.pop %v1464
  %v1467 = vmul.f32 1.0, %v1466
  %v1468 = vrcp.pop %v1465
  %v1469 = vmul.f32 1.0, %v1468
  %v1470 = vtanh.pop %v1457
  %v1472 = vrot.slane %v1359, 6
  %v1474 = vmul.f32 %v1467, %v1472
  %v1475 = vmul.f32 %v1467, %v1470
  %1477 = vrot.lane.b32.xlu0 %v1475, 64
  %v1478 = vpop.permute.xlu0 %1477
  %v1480 = vadd.f32 %v1474, %v1478
  %v1481 = vtanh.pop %v1480
  %v1482 = vmul.f32 %v1469, %v1481
  %v1483 = vld [vmem:[#allocation2 + $0x20] sm:$0x30]
  %v1484 = vld [vmem:[#allocation2 + $0x28] sm:$0x30]
  %v1485 = vld [vmem:[#allocation2 + $0x10] sm:$0xc]
  %v1486 = vld [vmem:[#allocation2 + $0x18] sm:$0xc]
  %v1489 = vrot.slane %v1485, 6
  %v1490 = vrot.slane %v1486, 6
  %v1493 = vadd.f32 %v1483, %v1489
  %v1494 = vadd.f32 %v1484, %v1490
  %v1496 = vrot.slane %v1482, 2
  %1497 = vrot.lane.b32.xlu0 %v1496, 64
  %v1498 = vpop.permute.xlu0 %1497
  %v1499 = vsel %vm57, %v1498, 0
  %1501 = vmatprep.subr.mxu0 %v756
  %1502 = vmatpush1.msra.mxu0 %v755
  %1503 = vmatprep.subr.mxu0 %v758
  %1504 = vmatpush1.msra.mxu0 %v757
  %1505 = vmatprep.subr.mxu0 %v760
  %1506 = vmatpush1.msra.mxu0 %v759
  %1507 = vmatprep.subr.mxu0 %v762
  %1508 = vmatpush1.msra.mxu0 %v761
  %1509 = vmatprep.subr.mxu0 %v764
  %1510 = vmatpush1.msra.mxu0 %v763
  %1511 = vmatprep.subr.mxu0 %v766
  %1512 = vmatpush1.msra.mxu0 %v765
  %1513 = vmatprep.subr.mxu0 %v768
  %1514 = vmatpush1.msra.mxu0 %v767
  %1515 = vmatprep.subr.mxu0 %v770
  %1516 = vmatpush1.msra.mxu0 %v769
  %1517 = vmatprep.subr.mxu0 0.0
  %1518 = vmatpush1.msra.mxu0 0.0
  %1519 = vmatprep.subr.mxu0 0.0
  %1520 = vmatpush1.msra.mxu0 0.0
  %1521 = vmatprep.subr.mxu0 0.0
  %1522 = vmatpush1.msra.mxu0 0.0
  %1523 = vmatprep.subr.mxu0 0.0
  %1524 = vmatpush1.msra.mxu0 0.0
  %1525 = vmatprep.subr.mxu0 0.0
  %1526 = vmatpush1.msra.mxu0 0.0
  %1527 = vmatprep.subr.mxu0 0.0
  %1528 = vmatpush1.msra.mxu0 0.0
  %1529 = vmatprep.subr.mxu0 0.0
  %1530 = vmatpush1.msra.mxu0 0.0
  %1531 = vmatprep.subr.mxu0 0.0
  %1532 = vmatpush1.msra.mxu0 0.0
  %1533 = vmatprep.subr.mxu0 0.0
  %1534 = vmatpush1.msra.mxu0 0.0
  %1535 = vmatprep.subr.mxu0 0.0
  %1536 = vmatpush1.msra.mxu0 0.0
  %1537 = vmatprep.subr.mxu0 0.0
  %1538 = vmatpush1.msra.mxu0 0.0
  %1539 = vmatprep.subr.mxu0 0.0
  %1540 = vmatpush1.msra.mxu0 0.0
  %1541 = vmatprep.subr.mxu0 0.0
  %1542 = vmatpush1.msra.mxu0 0.0
  %1543 = vmatprep.subr.mxu0 0.0
  %1544 = vmatpush1.msra.mxu0 0.0
  %1545 = vmatprep.subr.mxu0 0.0
  %1546 = vmatpush1.msra.mxu0 0.0
  %1547 = vmatprep.subr.mxu0 0.0
  %1548 = vmatpush1.msra.mxu0 0.0
  %1549 = vmatprep.subr.mxu0 0.0
  %1550 = vmatpush1.msra.mxu0 0.0
  %1551 = vmatprep.subr.mxu0 0.0
  %1552 = vmatpush1.msra.mxu0 0.0
  %1553 = vmatprep.subr.mxu0 0.0
  %1554 = vmatpush1.msra.mxu0 0.0
  %1555 = vmatprep.subr.mxu0 0.0
  %1556 = vmatpush1.msra.mxu0 0.0
  %1557 = vmatprep.subr.mxu0 0.0
  %1558 = vmatpush1.msra.mxu0 0.0
  %1559 = vmatprep.subr.mxu0 0.0
  %1560 = vmatpush1.msra.mxu0 0.0
  %1561 = vmatprep.subr.mxu0 0.0
  %1562 = vmatpush1.msra.mxu0 0.0
  %1563 = vmatprep.subr.mxu0 0.0
  %1564 = vmatpush1.msra.mxu0 0.0
  %1565 = vmatprep.mubr.f32.mxu0 0.0
  %1566 = vmatmul.mubr.f32.gmra.mrb[0].mxu0 %v1499
  %v1567 = vpop.f32.mrb[0].mxu0
  %v1568 = vadd.f32 0.0, %v1567
  %v1569 = vpop.f32.mrb[0].mxu0
  %v1570 = vadd.f32 0.0, %v1569
  %1571 = vdwg.mxu0
  %v1574 = vrot.slane %v1568, 4
  %v1575 = vrot.slane %v1570, 4
  %v1578 = vadd.f32 %v1493, %v1574
  %v1579 = vadd.f32 %v1494, %v1575
  %v1580 = vxor.u32 %v1578, 2147483648
  %v1581 = vxor.u32 %v1579, 2147483648
  %v1582 = vmul.f32 %v1580, 1.442695
  %v1583 = vpow.pop %v1582
  %v1584 = vmul.f32 %v1581, 1.442695
  %v1585 = vpow.pop %v1584
  %v1586 = vadd.f32 %v1583, 1.0
  %v1587 = vadd.f32 %v1585, 1.0
  %v1588 = vrcp.pop %v1586
  %v1589 = vmul.f32 1.0, %v1588
  %v1590 = vrcp.pop %v1587
  %v1591 = vmul.f32 1.0, %v1590
  %v1592 = vtanh.pop %v1579
  %v1594 = vrot.slane %v1480, 6
  %v1596 = vmul.f32 %v1589, %v1594
  %v1597 = vmul.f32 %v1589, %v1592
  %1599 = vrot.lane.b32.xlu0 %v1597, 64
  %v1600 = vpop.permute.xlu0 %1599
  %v1602 = vadd.f32 %v1596, %v1600
  %v1603 = vtanh.pop %v1602
  %v1604 = vmul.f32 %v1591, %v1603
  %v1605 = vld [vmem:[#allocation2 + $0x20] sm:$0xc0]
  %v1606 = vld [vmem:[#allocation2 + $0x28] sm:$0xc0]
  %v1607 = vld [vmem:[#allocation2 + $0x10] sm:$0x3]
  %v1608 = vld [vmem:[#allocation2 + $0x18] sm:$0x3]
  %v1611 = vrot.slane %v1607, 2
  %v1612 = vrot.slane %v1608, 2
  %v1615 = vadd.f32 %v1605, %v1611
  %v1616 = vadd.f32 %v1606, %v1612
  %v1618 = vrot.slane %v1604, 4
  %1619 = vrot.lane.b32.xlu0 %v1618, 64
  %v1620 = vpop.permute.xlu0 %1619
  %v1621 = vsel %vm57, %v1620, 0
  %1623 = vmatprep.subr.mxu0 %v756
  %1624 = vmatpush1.msra.mxu0 %v755
  %1625 = vmatprep.subr.mxu0 %v758
  %1626 = vmatpush1.msra.mxu0 %v757
  %1627 = vmatprep.subr.mxu0 %v760
  %1628 = vmatpush1.msra.mxu0 %v759
  %1629 = vmatprep.subr.mxu0 %v762
  %1630 = vmatpush1.msra.mxu0 %v761
  %1631 = vmatprep.subr.mxu0 %v764
  %1632 = vmatpush1.msra.mxu0 %v763
  %1633 = vmatprep.subr.mxu0 %v766
  %1634 = vmatpush1.msra.mxu0 %v765
  %1635 = vmatprep.subr.mxu0 %v768
  %1636 = vmatpush1.msra.mxu0 %v767
  %1637 = vmatprep.subr.mxu0 %v770
  %1638 = vmatpush1.msra.mxu0 %v769
  %1639 = vmatprep.subr.mxu0 0.0
  %1640 = vmatpush1.msra.mxu0 0.0
  %1641 = vmatprep.subr.mxu0 0.0
  %1642 = vmatpush1.msra.mxu0 0.0
  %1643 = vmatprep.subr.mxu0 0.0
  %1644 = vmatpush1.msra.mxu0 0.0
  %1645 = vmatprep.subr.mxu0 0.0
  %1646 = vmatpush1.msra.mxu0 0.0
  %1647 = vmatprep.subr.mxu0 0.0
  %1648 = vmatpush1.msra.mxu0 0.0
  %1649 = vmatprep.subr.mxu0 0.0
  %1650 = vmatpush1.msra.mxu0 0.0
  %1651 = vmatprep.subr.mxu0 0.0
  %1652 = vmatpush1.msra.mxu0 0.0
  %1653 = vmatprep.subr.mxu0 0.0
  %1654 = vmatpush1.msra.mxu0 0.0
  %1655 = vmatprep.subr.mxu0 0.0
  %1656 = vmatpush1.msra.mxu0 0.0
  %1657 = vmatprep.subr.mxu0 0.0
  %1658 = vmatpush1.msra.mxu0 0.0
  %1659 = vmatprep.subr.mxu0 0.0
  %1660 = vmatpush1.msra.mxu0 0.0
  %1661 = vmatprep.subr.mxu0 0.0
  %1662 = vmatpush1.msra.mxu0 0.0
  %1663 = vmatprep.subr.mxu0 0.0
  %1664 = vmatpush1.msra.mxu0 0.0
  %1665 = vmatprep.subr.mxu0 0.0
  %1666 = vmatpush1.msra.mxu0 0.0
  %1667 = vmatprep.subr.mxu0 0.0
  %1668 = vmatpush1.msra.mxu0 0.0
  %1669 = vmatprep.subr.mxu0 0.0
  %1670 = vmatpush1.msra.mxu0 0.0
  %1671 = vmatprep.subr.mxu0 0.0
  %1672 = vmatpush1.msra.mxu0 0.0
  %1673 = vmatprep.subr.mxu0 0.0
  %1674 = vmatpush1.msra.mxu0 0.0
  %1675 = vmatprep.subr.mxu0 0.0
  %1676 = vmatpush1.msra.mxu0 0.0
  %1677 = vmatprep.subr.mxu0 0.0
  %1678 = vmatpush1.msra.mxu0 0.0
  %1679 = vmatprep.subr.mxu0 0.0
  %1680 = vmatpush1.msra.mxu0 0.0
  %1681 = vmatprep.subr.mxu0 0.0
  %1682 = vmatpush1.msra.mxu0 0.0
  %1683 = vmatprep.subr.mxu0 0.0
  %1684 = vmatpush1.msra.mxu0 0.0
  %1685 = vmatprep.subr.mxu0 0.0
  %1686 = vmatpush1.msra.mxu0 0.0
  %1687 = vmatprep.mubr.f32.mxu0 0.0
  %1688 = vmatmul.mubr.f32.gmra.mrb[0].mxu0 %v1621
  %v1689 = vpop.f32.mrb[0].mxu0
  %v1690 = vadd.f32 0.0, %v1689
  %v1691 = vpop.f32.mrb[0].mxu0
  %v1692 = vadd.f32 0.0, %v1691
  %1693 = vdwg.mxu0
  %v1696 = vrot.slane %v1690, 2
  %v1697 = vrot.slane %v1692, 2
  %v1700 = vadd.f32 %v1615, %v1696
  %v1701 = vadd.f32 %v1616, %v1697
  %v1702 = vxor.u32 %v1700, 2147483648
  %v1703 = vxor.u32 %v1701, 2147483648
  %v1704 = vmul.f32 %v1702, 1.442695
  %v1705 = vpow.pop %v1704
  %v1706 = vmul.f32 %v1703, 1.442695
  %v1707 = vpow.pop %v1706
  %v1708 = vadd.f32 %v1705, 1.0
  %v1709 = vadd.f32 %v1707, 1.0
  %v1710 = vrcp.pop %v1708
  %v1711 = vmul.f32 1.0, %v1710
  %v1712 = vrcp.pop %v1709
  %v1713 = vmul.f32 1.0, %v1712
  %v1714 = vtanh.pop %v1701
  %v1716 = vrot.slane %v1602, 6
  %v1718 = vmul.f32 %v1711, %v1716
  %v1719 = vmul.f32 %v1711, %v1714
  %1721 = vrot.lane.b32.xlu0 %v1719, 64
  %v1722 = vpop.permute.xlu0 %1721
  %v1724 = vadd.f32 %v1718, %v1722
  %v1725 = vtanh.pop %v1724
  %v1726 = vmul.f32 %v1713, %v1725
  %v1729 = vrot.slane %v1726, 6
  %1730 = vrot.lane.b32.xlu0 %v1729, 64
  %v1731 = vpop.permute.xlu0 %1730
  %vm1733 = vcmask 261120
  %v1734 = vsel %vm1733, %v895, %v1731
  %1735 = vrot.lane.b32.xlu0 %v1001, 64
  %v1736 = vpop.permute.xlu0 %1735
  %v1738 = vrot.slane %v1604, 2
  %1739 = vrot.lane.b32.xlu0 %v1738, 64
  %v1740 = vpop.permute.xlu0 %1739
  %v1742 = vsel %vm1733, %v1736, %v1740
  %1743 = vrot.lane.b32.xlu0 %v1123, 64
  %v1744 = vpop.permute.xlu0 %1743
  %v1746 = vrot.slane %v1482, 6
  %1747 = vrot.lane.b32.xlu0 %v1746, 64
  %v1748 = vpop.permute.xlu0 %1747
  %v1750 = vsel %vm1733, %v1744, %v1748
  %1751 = vrot.lane.b32.xlu0 %v1245, 64
  %v1752 = vpop.permute.xlu0 %1751
  %v1754 = vrot.slane %v1361, 2
  %1755 = vrot.lane.b32.xlu0 %v1754, 64
  %v1756 = vpop.permute.xlu0 %1755
  %v1758 = vsel %vm1733, %v1752, %v1756
  %v1761 = vsel %vm1733, %v1376, %v1261
  %1762 = vrot.lane.b32.xlu0 %v1482, 64
  %v1763 = vpop.permute.xlu0 %1762
  %v1765 = vrot.slane %v1123, 2
  %1766 = vrot.lane.b32.xlu0 %v1765, 64
  %v1767 = vpop.permute.xlu0 %1766
  %v1769 = vsel %vm1733, %v1763, %v1767
  %1770 = vrot.lane.b32.xlu0 %v1604, 64
  %v1771 = vpop.permute.xlu0 %1770
  %v1773 = vrot.slane %v1001, 6
  %1774 = vrot.lane.b32.xlu0 %v1773, 64
  %v1775 = vpop.permute.xlu0 %1774
  %v1777 = vsel %vm1733, %v1771, %v1775
  %1778 = vrot.lane.b32.xlu0 %v1726, 64
  %v1779 = vpop.permute.xlu0 %1778
  %v1781 = vrot.slane %v880, 2
  %1782 = vrot.lane.b32.xlu0 %v1781, 64
  %v1783 = vpop.permute.xlu0 %1782
  %v1785 = vsel %vm1733, %v1779, %v1783
  %vm1786 = vcmask 1041408
  %v1787 = vsel %vm1786, %v1734, %v1742
  %vm1788 = vcmask 1043456
  %v1789 = vsel %vm1788, %v1787, %v1750
  %vm1790 = vcmask 1045504
  %v1791 = vsel %vm1790, %v1789, %v1758
  %v1792 = vsel %vm1786, %v1761, %v1769
  %v1793 = vsel %vm1788, %v1792, %v1777
  %v1794 = vsel %vm1790, %v1793, %v1785
  %v1795 = vld [vmem:[%s3 + $0xc0] sm:$0xff]
  %v1796 = vld [vmem:[%s3 + $0xc8] sm:$0xff]
  %v1797 = vld [vmem:[%s3 + $0xd0] sm:$0xff]
  %v1798 = vld [vmem:[%s3 + $0xd8] sm:$0xff]
  %v1799 = vld [vmem:[%s3 + $0xe0] sm:$0xff]
  %v1800 = vld [vmem:[%s3 + $0xe8] sm:$0xff]
  %v1801 = vld [vmem:[%s3 + $0xf0] sm:$0xff]
  %v1802 = vld [vmem:[%s3 + $0xf8] sm:$0xff]
  %v1803 = vld [vmem:[%s3 + $0x100] sm:$0xff]
  %v1804 = vld [vmem:[%s3 + $0x108] sm:$0xff]
  %v1805 = vld [vmem:[%s3 + $0x110] sm:$0xff]
  %v1806 = vld [vmem:[%s3 + $0x118] sm:$0xff]
  %v1807 = vld [vmem:[%s3 + $0x120] sm:$0xff]
  %v1808 = vld [vmem:[%s3 + $0x128] sm:$0xff]
  %v1809 = vld [vmem:[%s3 + $0x130] sm:$0xff]
  %v1810 = vld [vmem:[%s3 + $0x138] sm:$0xff]
  %v1811 = vld [vmem:[%s3 + $0x140] sm:$0xff]
  %v1812 = vld [vmem:[%s3 + $0x148] sm:$0xff]
  %v1813 = vld [vmem:[%s3 + $0x150] sm:$0xff]
  %v1814 = vld [vmem:[%s3 + $0x158] sm:$0xff]
  %v1815 = vld [vmem:[%s3 + $0x160] sm:$0xff]
  %v1816 = vld [vmem:[%s3 + $0x168] sm:$0xff]
  %v1817 = vld [vmem:[%s3 + $0x170] sm:$0xff]
  %v1818 = vld [vmem:[%s3 + $0x178] sm:$0xff]
  %v1819 = vld [vmem:[%s3 + $0x180] sm:$0xff]
  %v1820 = vld [vmem:[%s3 + $0x188] sm:$0xff]
  %v1821 = vld [vmem:[%s3 + $0x190] sm:$0xff]
  %v1822 = vld [vmem:[%s3 + $0x198] sm:$0xff]
  %v1823 = vld [vmem:[%s3 + $0x1a0] sm:$0xff]
  %v1824 = vld [vmem:[%s3 + $0x1a8] sm:$0xff]
  %v1825 = vld [vmem:[%s3 + $0x1b0] sm:$0xff]
  %v1826 = vld [vmem:[%s3 + $0x1b8] sm:$0xff]
  %s1827 = scalar_lea.vmem %s7, 1
  %v1828 = vld [vmem:[%s1827] ss:$8 sm:$0xf]
  %v1830 = vlaneseq
  %v1831 = vshrl.u32 %v1830, 7
  %v1832 = vsub.s32 0, %v1831
  %v1833 = vrot.slane %v1828, %v1832
  %v1834 = vlaneseq
  %v1835 = vshrl.u32 %v1834, 7
  %v1836 = vsub.s32 1, %v1835
  %v1837 = vrot.slane %v1828, %v1836
  %v1838 = vlaneseq
  %v1839 = vshrl.u32 %v1838, 7
  %v1840 = vsub.s32 2, %v1839
  %v1841 = vrot.slane %v1828, %v1840
  %v1842 = vlaneseq
  %v1843 = vshrl.u32 %v1842, 7
  %v1844 = vsub.s32 3, %v1843
  %v1845 = vrot.slane %v1828, %v1844
  %v1851 = vsel %vm57, %v1791, 0
  %v1854 = vsel %vm57, %v1794, 0
  %1856 = vmatprep.subr.mxu0 %v1796
  %1857 = vmatpush1.msra.mxu0 %v1795
  %1858 = vmatprep.subr.mxu0 %v1800
  %1859 = vmatpush1.msra.mxu0 %v1799
  %1860 = vmatprep.subr.mxu0 %v1804
  %1861 = vmatpush1.msra.mxu0 %v1803
  %1862 = vmatprep.subr.mxu0 %v1808
  %1863 = vmatpush1.msra.mxu0 %v1807
  %1864 = vmatprep.subr.mxu0 %v1812
  %1865 = vmatpush1.msra.mxu0 %v1811
  %1866 = vmatprep.subr.mxu0 %v1816
  %1867 = vmatpush1.msra.mxu0 %v1815
  %1868 = vmatprep.subr.mxu0 %v1820
  %1869 = vmatpush1.msra.mxu0 %v1819
  %1870 = vmatprep.subr.mxu0 %v1824
  %1871 = vmatpush1.msra.mxu0 %v1823
  %1872 = vmatprep.subr.mxu0 0.0
  %1873 = vmatpush1.msra.mxu0 0.0
  %1874 = vmatprep.subr.mxu0 0.0
  %1875 = vmatpush1.msra.mxu0 0.0
  %1876 = vmatprep.subr.mxu0 0.0
  %1877 = vmatpush1.msra.mxu0 0.0
  %1878 = vmatprep.subr.mxu0 0.0
  %1879 = vmatpush1.msra.mxu0 0.0
  %1880 = vmatprep.subr.mxu0 0.0
  %1881 = vmatpush1.msra.mxu0 0.0
  %1882 = vmatprep.subr.mxu0 0.0
  %1883 = vmatpush1.msra.mxu0 0.0
  %1884 = vmatprep.subr.mxu0 0.0
  %1885 = vmatpush1.msra.mxu0 0.0
  %1886 = vmatprep.subr.mxu0 0.0
  %1887 = vmatpush1.msra.mxu0 0.0
  %1888 = vmatprep.subr.mxu0 0.0
  %1889 = vmatpush1.msra.mxu0 0.0
  %1890 = vmatprep.subr.mxu0 0.0
  %1891 = vmatpush1.msra.mxu0 0.0
  %1892 = vmatprep.subr.mxu0 0.0
  %1893 = vmatpush1.msra.mxu0 0.0
  %1894 = vmatprep.subr.mxu0 0.0
  %1895 = vmatpush1.msra.mxu0 0.0
  %1896 = vmatprep.subr.mxu0 0.0
  %1897 = vmatpush1.msra.mxu0 0.0
  %1898 = vmatprep.subr.mxu0 0.0
  %1899 = vmatpush1.msra.mxu0 0.0
  %1900 = vmatprep.subr.mxu0 0.0
  %1901 = vmatpush1.msra.mxu0 0.0
  %1902 = vmatprep.subr.mxu0 0.0
  %1903 = vmatpush1.msra.mxu0 0.0
  %1904 = vmatprep.subr.mxu0 0.0
  %1905 = vmatpush1.msra.mxu0 0.0
  %1906 = vmatprep.subr.mxu0 0.0
  %1907 = vmatpush1.msra.mxu0 0.0
  %1908 = vmatprep.subr.mxu0 0.0
  %1909 = vmatpush1.msra.mxu0 0.0
  %1910 = vmatprep.subr.mxu0 0.0
  %1911 = vmatpush1.msra.mxu0 0.0
  %1912 = vmatprep.subr.mxu0 0.0
  %1913 = vmatpush1.msra.mxu0 0.0
  %1914 = vmatprep.subr.mxu0 0.0
  %1915 = vmatpush1.msra.mxu0 0.0
  %1916 = vmatprep.subr.mxu0 0.0
  %1917 = vmatpush1.msra.mxu0 0.0
  %1918 = vmatprep.subr.mxu0 0.0
  %1919 = vmatpush1.msra.mxu0 0.0
  %1920 = vmatprep.mubr.f32.mxu0 0.0
  %1921 = vmatmul.mubr.f32.gmra.mrb[0].mxu0 %v1851
  %v1922 = vpop.f32.mrb[0].mxu0
  %v1923 = vadd.f32 %v1833, %v1922
  %v1924 = vpop.f32.mrb[0].mxu0
  %v1925 = vadd.f32 %v1837, %v1924
  %1926 = vmatprep.mubr.f32.mxu0 0.0
  %1927 = vmatmul.mubr.f32.gmra.mrb[0].mxu0 %v1854
  %v1928 = vpop.f32.mrb[0].mxu0
  %v1929 = vadd.f32 %v1833, %v1928
  %v1930 = vpop.f32.mrb[0].mxu0
  %v1931 = vadd.f32 %v1837, %v1930
  %1932 = vdwg.mxu0
  %1933 = vmatprep.subr.mxu0 %v1798
  %1934 = vmatpush1.msra.mxu0 %v1797
  %1935 = vmatprep.subr.mxu0 %v1802
  %1936 = vmatpush1.msra.mxu0 %v1801
  %1937 = vmatprep.subr.mxu0 %v1806
  %1938 = vmatpush1.msra.mxu0 %v1805
  %1939 = vmatprep.subr.mxu0 %v1810
  %1940 = vmatpush1.msra.mxu0 %v1809
  %1941 = vmatprep.subr.mxu0 %v1814
  %1942 = vmatpush1.msra.mxu0 %v1813
  %1943 = vmatprep.subr.mxu0 %v1818
  %1944 = vmatpush1.msra.mxu0 %v1817
  %1945 = vmatprep.subr.mxu0 %v1822
  %1946 = vmatpush1.msra.mxu0 %v1821
  %1947 = vmatprep.subr.mxu0 %v1826
  %1948 = vmatpush1.msra.mxu0 %v1825
  %1949 = vmatprep.subr.mxu0 0.0
  %1950 = vmatpush1.msra.mxu0 0.0
  %1951 = vmatprep.subr.mxu0 0.0
  %1952 = vmatpush1.msra.mxu0 0.0
  %1953 = vmatprep.subr.mxu0 0.0
  %1954 = vmatpush1.msra.mxu0 0.0
  %1955 = vmatprep.subr.mxu0 0.0
  %1956 = vmatpush1.msra.mxu0 0.0
  %1957 = vmatprep.subr.mxu0 0.0
  %1958 = vmatpush1.msra.mxu0 0.0
  %1959 = vmatprep.subr.mxu0 0.0
  %1960 = vmatpush1.msra.mxu0 0.0
  %1961 = vmatprep.subr.mxu0 0.0
  %1962 = vmatpush1.msra.mxu0 0.0
  %1963 = vmatprep.subr.mxu0 0.0
  %1964 = vmatpush1.msra.mxu0 0.0
  %1965 = vmatprep.subr.mxu0 0.0
  %1966 = vmatpush1.msra.mxu0 0.0
  %1967 = vmatprep.subr.mxu0 0.0
  %1968 = vmatpush1.msra.mxu0 0.0
  %1969 = vmatprep.subr.mxu0 0.0
  %1970 = vmatpush1.msra.mxu0 0.0
  %1971 = vmatprep.subr.mxu0 0.0
  %1972 = vmatpush1.msra.mxu0 0.0
  %1973 = vmatprep.subr.mxu0 0.0
  %1974 = vmatpush1.msra.mxu0 0.0
  %1975 = vmatprep.subr.mxu0 0.0
  %1976 = vmatpush1.msra.mxu0 0.0
  %1977 = vmatprep.subr.mxu0 0.0
  %1978 = vmatpush1.msra.mxu0 0.0
  %1979 = vmatprep.subr.mxu0 0.0
  %1980 = vmatpush1.msra.mxu0 0.0
  %1981 = vmatprep.subr.mxu0 0.0
  %1982 = vmatpush1.msra.mxu0 0.0
  %1983 = vmatprep.subr.mxu0 0.0
  %1984 = vmatpush1.msra.mxu0 0.0
  %1985 = vmatprep.subr.mxu0 0.0
  %1986 = vmatpush1.msra.mxu0 0.0
  %1987 = vmatprep.subr.mxu0 0.0
  %1988 = vmatpush1.msra.mxu0 0.0
  %1989 = vmatprep.subr.mxu0 0.0
  %1990 = vmatpush1.msra.mxu0 0.0
  %1991 = vmatprep.subr.mxu0 0.0
  %1992 = vmatpush1.msra.mxu0 0.0
  %1993 = vmatprep.subr.mxu0 0.0
  %1994 = vmatpush1.msra.mxu0 0.0
  %1995 = vmatprep.subr.mxu0 0.0
  %1996 = vmatpush1.msra.mxu0 0.0
  %1997 = vmatprep.mubr.f32.mxu0 0.0
  %1998 = vmatmul.mubr.f32.gmra.mrb[0].mxu0 %v1851
  %v1999 = vpop.f32.mrb[0].mxu0
  %v2000 = vadd.f32 %v1841, %v1999
  %v2001 = vpop.f32.mrb[0].mxu0
  %v2002 = vadd.f32 %v1845, %v2001
  %2003 = vmatprep.mubr.f32.mxu0 0.0
  %2004 = vmatmul.mubr.f32.gmra.mrb[0].mxu0 %v1854
  %v2005 = vpop.f32.mrb[0].mxu0
  %v2006 = vadd.f32 %v1841, %v2005
  %v2007 = vpop.f32.mrb[0].mxu0
  %v2008 = vadd.f32 %v1845, %v2007
  %2009 = vdwg.mxu0
  %2010 = vst [vmem:[#allocation2] sm:$0xff] %v1923
  %2011 = vst [vmem:[#allocation2 + $0x8] sm:$0xff] %v1925
  %2012 = vst [vmem:[#allocation2 + $0x10] sm:$0xff] %v2000
  %2013 = vst [vmem:[#allocation2 + $0x18] sm:$0xff] %v2002
  %2014 = vst [vmem:[#allocation2 + $0x20] sm:$0xff] %v1929
  %2015 = vst [vmem:[#allocation2 + $0x28] sm:$0xff] %v1931
  %2016 = vst [vmem:[#allocation2 + $0x30] sm:$0xff] %v2006
  %2017 = vst [vmem:[#allocation2 + $0x38] sm:$0xff] %v2008
  %v2018 = vld [vmem:[%s4 + $0x80] sm:$0xff]
  %v2019 = vld [vmem:[%s4 + $0x88] sm:$0xff]
  %v2020 = vld [vmem:[%s4 + $0x90] sm:$0xff]
  %v2021 = vld [vmem:[%s4 + $0x98] sm:$0xff]
  %v2022 = vld [vmem:[%s4 + $0xa0] sm:$0xff]
  %v2023 = vld [vmem:[%s4 + $0xa8] sm:$0xff]
  %v2024 = vld [vmem:[%s4 + $0xb0] sm:$0xff]
  %v2025 = vld [vmem:[%s4 + $0xb8] sm:$0xff]
  %v2026 = vld [vmem:[%s4 + $0xc0] sm:$0xff]
  %v2027 = vld [vmem:[%s4 + $0xc8] sm:$0xff]
  %v2028 = vld [vmem:[%s4 + $0xd0] sm:$0xff]
  %v2029 = vld [vmem:[%s4 + $0xd8] sm:$0xff]
  %v2030 = vld [vmem:[%s4 + $0xe0] sm:$0xff]
  %v2031 = vld [vmem:[%s4 + $0xe8] sm:$0xff]
  %v2032 = vld [vmem:[%s4 + $0xf0] sm:$0xff]
  %v2033 = vld [vmem:[%s4 + $0xf8] sm:$0xff]
  %v2034 = vld [vmem:[#allocation2] sm:$0x3]
  %v2035 = vld [vmem:[#allocation2 + $0x8] sm:$0x3]
  %v2036 = vld [vmem:[#allocation2 + $0x30] sm:$0xc0]
  %v2037 = vld [vmem:[#allocation2 + $0x38] sm:$0xc0]
  %v2040 = vrot.slane %v2036, 6
  %v2041 = vrot.slane %v2037, 6
  %v2044 = vadd.f32 %v2034, %v2040
  %v2045 = vadd.f32 %v2035, %v2041
  %2046 = vmatprep.subr.mxu0 %v2019
  %2047 = vmatpush1.msra.mxu0 %v2018
  %2048 = vmatprep.subr.mxu0 %v2021
  %2049 = vmatpush1.msra.mxu0 %v2020
  %2050 = vmatprep.subr.mxu0 %v2023
  %2051 = vmatpush1.msra.mxu0 %v2022
  %2052 = vmatprep.subr.mxu0 %v2025
  %2053 = vmatpush1.msra.mxu0 %v2024
  %2054 = vmatprep.subr.mxu0 %v2027
  %2055 = vmatpush1.msra.mxu0 %v2026
  %2056 = vmatprep.subr.mxu0 %v2029
  %2057 = vmatpush1.msra.mxu0 %v2028
  %2058 = vmatprep.subr.mxu0 %v2031
  %2059 = vmatpush1.msra.mxu0 %v2030
  %2060 = vmatprep.subr.mxu0 %v2033
  %2061 = vmatpush1.msra.mxu0 %v2032
  %2062 = vmatprep.subr.mxu0 0.0
  %2063 = vmatpush1.msra.mxu0 0.0
  %2064 = vmatprep.subr.mxu0 0.0
  %2065 = vmatpush1.msra.mxu0 0.0
  %2066 = vmatprep.subr.mxu0 0.0
  %2067 = vmatpush1.msra.mxu0 0.0
  %2068 = vmatprep.subr.mxu0 0.0
  %2069 = vmatpush1.msra.mxu0 0.0
  %2070 = vmatprep.subr.mxu0 0.0
  %2071 = vmatpush1.msra.mxu0 0.0
  %2072 = vmatprep.subr.mxu0 0.0
  %2073 = vmatpush1.msra.mxu0 0.0
  %2074 = vmatprep.subr.mxu0 0.0
  %2075 = vmatpush1.msra.mxu0 0.0
  %2076 = vmatprep.subr.mxu0 0.0
  %2077 = vmatpush1.msra.mxu0 0.0
  %2078 = vmatprep.subr.mxu0 0.0
  %2079 = vmatpush1.msra.mxu0 0.0
  %2080 = vmatprep.subr.mxu0 0.0
  %2081 = vmatpush1.msra.mxu0 0.0
  %2082 = vmatprep.subr.mxu0 0.0
  %2083 = vmatpush1.msra.mxu0 0.0
  %2084 = vmatprep.subr.mxu0 0.0
  %2085 = vmatpush1.msra.mxu0 0.0
  %2086 = vmatprep.subr.mxu0 0.0
  %2087 = vmatpush1.msra.mxu0 0.0
  %2088 = vmatprep.subr.mxu0 0.0
  %2089 = vmatpush1.msra.mxu0 0.0
  %2090 = vmatprep.subr.mxu0 0.0
  %2091 = vmatpush1.msra.mxu0 0.0
  %2092 = vmatprep.subr.mxu0 0.0
  %2093 = vmatpush1.msra.mxu0 0.0
  %2094 = vmatprep.subr.mxu0 0.0
  %2095 = vmatpush1.msra.mxu0 0.0
  %2096 = vmatprep.subr.mxu0 0.0
  %2097 = vmatpush1.msra.mxu0 0.0
  %2098 = vmatprep.subr.mxu0 0.0
  %2099 = vmatpush1.msra.mxu0 0.0
  %2100 = vmatprep.subr.mxu0 0.0
  %2101 = vmatpush1.msra.mxu0 0.0
  %2102 = vmatprep.subr.mxu0 0.0
  %2103 = vmatpush1.msra.mxu0 0.0
  %2104 = vmatprep.subr.mxu0 0.0
  %2105 = vmatpush1.msra.mxu0 0.0
  %2106 = vmatprep.subr.mxu0 0.0
  %2107 = vmatpush1.msra.mxu0 0.0
  %2108 = vmatprep.subr.mxu0 0.0
  %2109 = vmatpush1.msra.mxu0 0.0
  %2110 = vmatprep.mubr.f32.mxu0 0.0
  %2111 = vmatmul.mubr.f32.gmra.mrb[0].mxu0 %v784
  %v2112 = vpop.f32.mrb[0].mxu0
  %v2113 = vadd.f32 0.0, %v2112
  %v2114 = vpop.f32.mrb[0].mxu0
  %v2115 = vadd.f32 0.0, %v2114
  %2116 = vdwg.mxu0
  %v2117 = vadd.f32 %v2044, %v2113
  %v2118 = vadd.f32 %v2045, %v2115
  %v2119 = vxor.u32 %v2117, 2147483648
  %v2120 = vxor.u32 %v2118, 2147483648
  %v2121 = vmul.f32 %v2119, 1.442695
  %v2122 = vpow.pop %v2121
  %v2123 = vmul.f32 %v2120, 1.442695
  %v2124 = vpow.pop %v2123
  %v2125 = vadd.f32 %v2122, 1.0
  %v2126 = vadd.f32 %v2124, 1.0
  %v2127 = vrcp.pop %v2125
  %v2128 = vmul.f32 1.0, %v2127
  %v2129 = vrcp.pop %v2126
  %v2130 = vmul.f32 1.0, %v2129
  %v2131 = vtanh.pop %v2118
  %v2132 = vmul.f32 %v2128, 0.0
  %v2133 = vmul.f32 %v2128, %v2131
  %2135 = vrot.lane.b32.xlu0 %v2133, 64
  %v2136 = vpop.permute.xlu0 %2135
  %v2138 = vadd.f32 %v2132, %v2136
  %v2139 = vtanh.pop %v2138
  %v2140 = vmul.f32 %v2130, %v2139
  %v2141 = vld [vmem:[#allocation2] sm:$0xc]
  %v2142 = vld [vmem:[#allocation2 + $0x8] sm:$0xc]
  %v2143 = vld [vmem:[#allocation2 + $0x30] sm:$0x30]
  %v2144 = vld [vmem:[#allocation2 + $0x38] sm:$0x30]
  %v2147 = vrot.slane %v2143, 2
  %v2148 = vrot.slane %v2144, 2
  %v2151 = vadd.f32 %v2141, %v2147
  %v2152 = vadd.f32 %v2142, %v2148
  %2154 = vrot.lane.b32.xlu0 %v2140, 64
  %v2155 = vpop.permute.xlu0 %2154
  %v2156 = vsel %vm57, %v2155, 0
  %2158 = vmatprep.subr.mxu0 %v2019
  %2159 = vmatpush1.msra.mxu0 %v2018
  %2160 = vmatprep.subr.mxu0 %v2021
  %2161 = vmatpush1.msra.mxu0 %v2020
  %2162 = vmatprep.subr.mxu0 %v2023
  %2163 = vmatpush1.msra.mxu0 %v2022
  %2164 = vmatprep.subr.mxu0 %v2025
  %2165 = vmatpush1.msra.mxu0 %v2024
  %2166 = vmatprep.subr.mxu0 %v2027
  %2167 = vmatpush1.msra.mxu0 %v2026
  %2168 = vmatprep.subr.mxu0 %v2029
  %2169 = vmatpush1.msra.mxu0 %v2028
  %2170 = vmatprep.subr.mxu0 %v2031
  %2171 = vmatpush1.msra.mxu0 %v2030
  %2172 = vmatprep.subr.mxu0 %v2033
  %2173 = vmatpush1.msra.mxu0 %v2032
  %2174 = vmatprep.subr.mxu0 0.0
  %2175 = vmatpush1.msra.mxu0 0.0
  %2176 = vmatprep.subr.mxu0 0.0
  %2177 = vmatpush1.msra.mxu0 0.0
  %2178 = vmatprep.subr.mxu0 0.0
  %2179 = vmatpush1.msra.mxu0 0.0
  %2180 = vmatprep.subr.mxu0 0.0
  %2181 = vmatpush1.msra.mxu0 0.0
  %2182 = vmatprep.subr.mxu0 0.0
  %2183 = vmatpush1.msra.mxu0 0.0
  %2184 = vmatprep.subr.mxu0 0.0
  %2185 = vmatpush1.msra.mxu0 0.0
  %2186 = vmatprep.subr.mxu0 0.0
  %2187 = vmatpush1.msra.mxu0 0.0
  %2188 = vmatprep.subr.mxu0 0.0
  %2189 = vmatpush1.msra.mxu0 0.0
  %2190 = vmatprep.subr.mxu0 0.0
  %2191 = vmatpush1.msra.mxu0 0.0
  %2192 = vmatprep.subr.mxu0 0.0
  %2193 = vmatpush1.msra.mxu0 0.0
  %2194 = vmatprep.subr.mxu0 0.0
  %2195 = vmatpush1.msra.mxu0 0.0
  %2196 = vmatprep.subr.mxu0 0.0
  %2197 = vmatpush1.msra.mxu0 0.0
  %2198 = vmatprep.subr.mxu0 0.0
  %2199 = vmatpush1.msra.mxu0 0.0
  %2200 = vmatprep.subr.mxu0 0.0
  %2201 = vmatpush1.msra.mxu0 0.0
  %2202 = vmatprep.subr.mxu0 0.0
  %2203 = vmatpush1.msra.mxu0 0.0
  %2204 = vmatprep.subr.mxu0 0.0
  %2205 = vmatpush1.msra.mxu0 0.0
  %2206 = vmatprep.subr.mxu0 0.0
  %2207 = vmatpush1.msra.mxu0 0.0
  %2208 = vmatprep.subr.mxu0 0.0
  %2209 = vmatpush1.msra.mxu0 0.0
  %2210 = vmatprep.subr.mxu0 0.0
  %2211 = vmatpush1.msra.mxu0 0.0
  %2212 = vmatprep.subr.mxu0 0.0
  %2213 = vmatpush1.msra.mxu0 0.0
  %2214 = vmatprep.subr.mxu0 0.0
  %2215 = vmatpush1.msra.mxu0 0.0
  %2216 = vmatprep.subr.mxu0 0.0
  %2217 = vmatpush1.msra.mxu0 0.0
  %2218 = vmatprep.subr.mxu0 0.0
  %2219 = vmatpush1.msra.mxu0 0.0
  %2220 = vmatprep.subr.mxu0 0.0
  %2221 = vmatpush1.msra.mxu0 0.0
  %2222 = vmatprep.mubr.f32.mxu0 0.0
  %2223 = vmatmul.mubr.f32.gmra.mrb[0].mxu0 %v2156
  %v2224 = vpop.f32.mrb[0].mxu0
  %v2225 = vadd.f32 0.0, %v2224
  %v2226 = vpop.f32.mrb[0].mxu0
  %v2227 = vadd.f32 0.0, %v2226
  %2228 = vdwg.mxu0
  %v2231 = vrot.slane %v2225, 6
  %v2232 = vrot.slane %v2227, 6
  %v2235 = vadd.f32 %v2151, %v2231
  %v2236 = vadd.f32 %v2152, %v2232
  %v2237 = vxor.u32 %v2235, 2147483648
  %v2238 = vxor.u32 %v2236, 2147483648
  %v2239 = vmul.f32 %v2237, 1.442695
  %v2240 = vpow.pop %v2239
  %v2241 = vmul.f32 %v2238, 1.442695
  %v2242 = vpow.pop %v2241
  %v2243 = vadd.f32 %v2240, 1.0
  %v2244 = vadd.f32 %v2242, 1.0
  %v2245 = vrcp.pop %v2243
  %v2246 = vmul.f32 1.0, %v2245
  %v2247 = vrcp.pop %v2244
  %v2248 = vmul.f32 1.0, %v2247
  %v2249 = vtanh.pop %v2236
  %v2251 = vrot.slane %v2138, 6
  %v2253 = vmul.f32 %v2246, %v2251
  %v2254 = vmul.f32 %v2246, %v2249
  %2256 = vrot.lane.b32.xlu0 %v2254, 64
  %v2257 = vpop.permute.xlu0 %2256
  %v2259 = vadd.f32 %v2253, %v2257
  %v2260 = vtanh.pop %v2259
  %v2261 = vmul.f32 %v2248, %v2260
  %v2262 = vld [vmem:[#allocation2] sm:$0x30]
  %v2263 = vld [vmem:[#allocation2 + $0x8] sm:$0x30]
  %v2264 = vld [vmem:[#allocation2 + $0x30] sm:$0xc]
  %v2265 = vld [vmem:[#allocation2 + $0x38] sm:$0xc]
  %v2268 = vrot.slane %v2264, 6
  %v2269 = vrot.slane %v2265, 6
  %v2272 = vadd.f32 %v2262, %v2268
  %v2273 = vadd.f32 %v2263, %v2269
  %v2275 = vrot.slane %v2261, 2
  %2276 = vrot.lane.b32.xlu0 %v2275, 64
  %v2277 = vpop.permute.xlu0 %2276
  %v2278 = vsel %vm57, %v2277, 0
  %2280 = vmatprep.subr.mxu0 %v2019
  %2281 = vmatpush1.msra.mxu0 %v2018
  %2282 = vmatprep.subr.mxu0 %v2021
  %2283 = vmatpush1.msra.mxu0 %v2020
  %2284 = vmatprep.subr.mxu0 %v2023
  %2285 = vmatpush1.msra.mxu0 %v2022
  %2286 = vmatprep.subr.mxu0 %v2025
  %2287 = vmatpush1.msra.mxu0 %v2024
  %2288 = vmatprep.subr.mxu0 %v2027
  %2289 = vmatpush1.msra.mxu0 %v2026
  %2290 = vmatprep.subr.mxu0 %v2029
  %2291 = vmatpush1.msra.mxu0 %v2028
  %2292 = vmatprep.subr.mxu0 %v2031
  %2293 = vmatpush1.msra.mxu0 %v2030
  %2294 = vmatprep.subr.mxu0 %v2033
  %2295 = vmatpush1.msra.mxu0 %v2032
  %2296 = vmatprep.subr.mxu0 0.0
  %2297 = vmatpush1.msra.mxu0 0.0
  %2298 = vmatprep.subr.mxu0 0.0
  %2299 = vmatpush1.msra.mxu0 0.0
  %2300 = vmatprep.subr.mxu0 0.0
  %2301 = vmatpush1.msra.mxu0 0.0
  %2302 = vmatprep.subr.mxu0 0.0
  %2303 = vmatpush1.msra.mxu0 0.0
  %2304 = vmatprep.subr.mxu0 0.0
  %2305 = vmatpush1.msra.mxu0 0.0
  %2306 = vmatprep.subr.mxu0 0.0
  %2307 = vmatpush1.msra.mxu0 0.0
  %2308 = vmatprep.subr.mxu0 0.0
  %2309 = vmatpush1.msra.mxu0 0.0
  %2310 = vmatprep.subr.mxu0 0.0
  %2311 = vmatpush1.msra.mxu0 0.0
  %2312 = vmatprep.subr.mxu0 0.0
  %2313 = vmatpush1.msra.mxu0 0.0
  %2314 = vmatprep.subr.mxu0 0.0
  %2315 = vmatpush1.msra.mxu0 0.0
  %2316 = vmatprep.subr.mxu0 0.0
  %2317 = vmatpush1.msra.mxu0 0.0
  %2318 = vmatprep.subr.mxu0 0.0
  %2319 = vmatpush1.msra.mxu0 0.0
  %2320 = vmatprep.subr.mxu0 0.0
  %2321 = vmatpush1.msra.mxu0 0.0
  %2322 = vmatprep.subr.mxu0 0.0
  %2323 = vmatpush1.msra.mxu0 0.0
  %2324 = vmatprep.subr.mxu0 0.0
  %2325 = vmatpush1.msra.mxu0 0.0
  %2326 = vmatprep.subr.mxu0 0.0
  %2327 = vmatpush1.msra.mxu0 0.0
  %2328 = vmatprep.subr.mxu0 0.0
  %2329 = vmatpush1.msra.mxu0 0.0
  %2330 = vmatprep.subr.mxu0 0.0
  %2331 = vmatpush1.msra.mxu0 0.0
  %2332 = vmatprep.subr.mxu0 0.0
  %2333 = vmatpush1.msra.mxu0 0.0
  %2334 = vmatprep.subr.mxu0 0.0
  %2335 = vmatpush1.msra.mxu0 0.0
  %2336 = vmatprep.subr.mxu0 0.0
  %2337 = vmatpush1.msra.mxu0 0.0
  %2338 = vmatprep.subr.mxu0 0.0
  %2339 = vmatpush1.msra.mxu0 0.0
  %2340 = vmatprep.subr.mxu0 0.0
  %2341 = vmatpush1.msra.mxu0 0.0
  %2342 = vmatprep.subr.mxu0 0.0
  %2343 = vmatpush1.msra.mxu0 0.0
  %2344 = vmatprep.mubr.f32.mxu0 0.0
  %2345 = vmatmul.mubr.f32.gmra.mrb[0].mxu0 %v2278
  %v2346 = vpop.f32.mrb[0].mxu0
  %v2347 = vadd.f32 0.0, %v2346
  %v2348 = vpop.f32.mrb[0].mxu0
  %v2349 = vadd.f32 0.0, %v2348
  %2350 = vdwg.mxu0
  %v2353 = vrot.slane %v2347, 4
  %v2354 = vrot.slane %v2349, 4
  %v2357 = vadd.f32 %v2272, %v2353
  %v2358 = vadd.f32 %v2273, %v2354
  %v2359 = vxor.u32 %v2357, 2147483648
  %v2360 = vxor.u32 %v2358, 2147483648
  %v2361 = vmul.f32 %v2359, 1.442695
  %v2362 = vpow.pop %v2361
  %v2363 = vmul.f32 %v2360, 1.442695
  %v2364 = vpow.pop %v2363
  %v2365 = vadd.f32 %v2362, 1.0
  %v2366 = vadd.f32 %v2364, 1.0
  %v2367 = vrcp.pop %v2365
  %v2368 = vmul.f32 1.0, %v2367
  %v2369 = vrcp.pop %v2366
  %v2370 = vmul.f32 1.0, %v2369
  %v2371 = vtanh.pop %v2358
  %v2373 = vrot.slane %v2259, 6
  %v2375 = vmul.f32 %v2368, %v2373
  %v2376 = vmul.f32 %v2368, %v2371
  %2378 = vrot.lane.b32.xlu0 %v2376, 64
  %v2379 = vpop.permute.xlu0 %2378
  %v2381 = vadd.f32 %v2375, %v2379
  %v2382 = vtanh.pop %v2381
  %v2383 = vmul.f32 %v2370, %v2382
  %v2384 = vld [vmem:[#allocation2] sm:$0xc0]
  %v2385 = vld [vmem:[#allocation2 + $0x8] sm:$0xc0]
  %v2386 = vld [vmem:[#allocation2 + $0x30] sm:$0x3]
  %v2387 = vld [vmem:[#allocation2 + $0x38] sm:$0x3]
  %v2390 = vrot.slane %v2386, 2
  %v2391 = vrot.slane %v2387, 2
  %v2394 = vadd.f32 %v2384, %v2390
  %v2395 = vadd.f32 %v2385, %v2391
  %v2397 = vrot.slane %v2383, 4
  %2398 = vrot.lane.b32.xlu0 %v2397, 64
  %v2399 = vpop.permute.xlu0 %2398
  %v2400 = vsel %vm57, %v2399, 0
  %2402 = vmatprep.subr.mxu0 %v2019
  %2403 = vmatpush1.msra.mxu0 %v2018
  %2404 = vmatprep.subr.mxu0 %v2021
  %2405 = vmatpush1.msra.mxu0 %v2020
  %2406 = vmatprep.subr.mxu0 %v2023
  %2407 = vmatpush1.msra.mxu0 %v2022
  %2408 = vmatprep.subr.mxu0 %v2025
  %2409 = vmatpush1.msra.mxu0 %v2024
  %2410 = vmatprep.subr.mxu0 %v2027
  %2411 = vmatpush1.msra.mxu0 %v2026
  %2412 = vmatprep.subr.mxu0 %v2029
  %2413 = vmatpush1.msra.mxu0 %v2028
  %2414 = vmatprep.subr.mxu0 %v2031
  %2415 = vmatpush1.msra.mxu0 %v2030
  %2416 = vmatprep.subr.mxu0 %v2033
  %2417 = vmatpush1.msra.mxu0 %v2032
  %2418 = vmatprep.subr.mxu0 0.0
  %2419 = vmatpush1.msra.mxu0 0.0
  %2420 = vmatprep.subr.mxu0 0.0
  %2421 = vmatpush1.msra.mxu0 0.0
  %2422 = vmatprep.subr.mxu0 0.0
  %2423 = vmatpush1.msra.mxu0 0.0
  %2424 = vmatprep.subr.mxu0 0.0
  %2425 = vmatpush1.msra.mxu0 0.0
  %2426 = vmatprep.subr.mxu0 0.0
  %2427 = vmatpush1.msra.mxu0 0.0
  %2428 = vmatprep.subr.mxu0 0.0
  %2429 = vmatpush1.msra.mxu0 0.0
  %2430 = vmatprep.subr.mxu0 0.0
  %2431 = vmatpush1.msra.mxu0 0.0
  %2432 = vmatprep.subr.mxu0 0.0
  %2433 = vmatpush1.msra.mxu0 0.0
  %2434 = vmatprep.subr.mxu0 0.0
  %2435 = vmatpush1.msra.mxu0 0.0
  %2436 = vmatprep.subr.mxu0 0.0
  %2437 = vmatpush1.msra.mxu0 0.0
  %2438 = vmatprep.subr.mxu0 0.0
  %2439 = vmatpush1.msra.mxu0 0.0
  %2440 = vmatprep.subr.mxu0 0.0
  %2441 = vmatpush1.msra.mxu0 0.0
  %2442 = vmatprep.subr.mxu0 0.0
  %2443 = vmatpush1.msra.mxu0 0.0
  %2444 = vmatprep.subr.mxu0 0.0
  %2445 = vmatpush1.msra.mxu0 0.0
  %2446 = vmatprep.subr.mxu0 0.0
  %2447 = vmatpush1.msra.mxu0 0.0
  %2448 = vmatprep.subr.mxu0 0.0
  %2449 = vmatpush1.msra.mxu0 0.0
  %2450 = vmatprep.subr.mxu0 0.0
  %2451 = vmatpush1.msra.mxu0 0.0
  %2452 = vmatprep.subr.mxu0 0.0
  %2453 = vmatpush1.msra.mxu0 0.0
  %2454 = vmatprep.subr.mxu0 0.0
  %2455 = vmatpush1.msra.mxu0 0.0
  %2456 = vmatprep.subr.mxu0 0.0
  %2457 = vmatpush1.msra.mxu0 0.0
  %2458 = vmatprep.subr.mxu0 0.0
  %2459 = vmatpush1.msra.mxu0 0.0
  %2460 = vmatprep.subr.mxu0 0.0
  %2461 = vmatpush1.msra.mxu0 0.0
  %2462 = vmatprep.subr.mxu0 0.0
  %2463 = vmatpush1.msra.mxu0 0.0
  %2464 = vmatprep.subr.mxu0 0.0
  %2465 = vmatpush1.msra.mxu0 0.0
  %2466 = vmatprep.mubr.f32.mxu0 0.0
  %2467 = vmatmul.mubr.f32.gmra.mrb[0].mxu0 %v2400
  %v2468 = vpop.f32.mrb[0].mxu0
  %v2469 = vadd.f32 0.0, %v2468
  %v2470 = vpop.f32.mrb[0].mxu0
  %v2471 = vadd.f32 0.0, %v2470
  %2472 = vdwg.mxu0
  %v2475 = vrot.slane %v2469, 2
  %v2476 = vrot.slane %v2471, 2
  %v2479 = vadd.f32 %v2394, %v2475
  %v2480 = vadd.f32 %v2395, %v2476
  %v2481 = vxor.u32 %v2479, 2147483648
  %v2482 = vxor.u32 %v2480, 2147483648
  %v2483 = vmul.f32 %v2481, 1.442695
  %v2484 = vpow.pop %v2483
  %v2485 = vmul.f32 %v2482, 1.442695
  %v2486 = vpow.pop %v2485
  %v2487 = vadd.f32 %v2484, 1.0
  %v2488 = vadd.f32 %v2486, 1.0
  %v2489 = vrcp.pop %v2487
  %v2490 = vmul.f32 1.0, %v2489
  %v2491 = vrcp.pop %v2488
  %v2492 = vmul.f32 1.0, %v2491
  %v2493 = vtanh.pop %v2480
  %v2495 = vrot.slane %v2381, 6
  %v2497 = vmul.f32 %v2490, %v2495
  %v2498 = vmul.f32 %v2490, %v2493
  %2500 = vrot.lane.b32.xlu0 %v2498, 64
  %v2501 = vpop.permute.xlu0 %2500
  %v2503 = vadd.f32 %v2497, %v2501
  %v2504 = vtanh.pop %v2503
  %v2505 = vmul.f32 %v2492, %v2504
  %v2506 = vld [vmem:[#allocation2 + $0x20] sm:$0x3]
  %v2507 = vld [vmem:[#allocation2 + $0x28] sm:$0x3]
  %v2508 = vld [vmem:[#allocation2 + $0x10] sm:$0xc0]
  %v2509 = vld [vmem:[#allocation2 + $0x18] sm:$0xc0]
  %v2512 = vrot.slane %v2508, 6
  %v2513 = vrot.slane %v2509, 6
  %v2516 = vadd.f32 %v2506, %v2512
  %v2517 = vadd.f32 %v2507, %v2513
  %v2519 = vrot.slane %v2505, 6
  %2520 = vrot.lane.b32.xlu0 %v2519, 64
  %v2521 = vpop.permute.xlu0 %2520
  %v2522 = vsel %vm57, %v2521, 0
  %2524 = vmatprep.subr.mxu0 %v2019
  %2525 = vmatpush1.msra.mxu0 %v2018
  %2526 = vmatprep.subr.mxu0 %v2021
  %2527 = vmatpush1.msra.mxu0 %v2020
  %2528 = vmatprep.subr.mxu0 %v2023
  %2529 = vmatpush1.msra.mxu0 %v2022
  %2530 = vmatprep.subr.mxu0 %v2025
  %2531 = vmatpush1.msra.mxu0 %v2024
  %2532 = vmatprep.subr.mxu0 %v2027
  %2533 = vmatpush1.msra.mxu0 %v2026
  %2534 = vmatprep.subr.mxu0 %v2029
  %2535 = vmatpush1.msra.mxu0 %v2028
  %2536 = vmatprep.subr.mxu0 %v2031
  %2537 = vmatpush1.msra.mxu0 %v2030
  %2538 = vmatprep.subr.mxu0 %v2033
  %2539 = vmatpush1.msra.mxu0 %v2032
  %2540 = vmatprep.subr.mxu0 0.0
  %2541 = vmatpush1.msra.mxu0 0.0
  %2542 = vmatprep.subr.mxu0 0.0
  %2543 = vmatpush1.msra.mxu0 0.0
  %2544 = vmatprep.subr.mxu0 0.0
  %2545 = vmatpush1.msra.mxu0 0.0
  %2546 = vmatprep.subr.mxu0 0.0
  %2547 = vmatpush1.msra.mxu0 0.0
  %2548 = vmatprep.subr.mxu0 0.0
  %2549 = vmatpush1.msra.mxu0 0.0
  %2550 = vmatprep.subr.mxu0 0.0
  %2551 = vmatpush1.msra.mxu0 0.0
  %2552 = vmatprep.subr.mxu0 0.0
  %2553 = vmatpush1.msra.mxu0 0.0
  %2554 = vmatprep.subr.mxu0 0.0
  %2555 = vmatpush1.msra.mxu0 0.0
  %2556 = vmatprep.subr.mxu0 0.0
  %2557 = vmatpush1.msra.mxu0 0.0
  %2558 = vmatprep.subr.mxu0 0.0
  %2559 = vmatpush1.msra.mxu0 0.0
  %2560 = vmatprep.subr.mxu0 0.0
  %2561 = vmatpush1.msra.mxu0 0.0
  %2562 = vmatprep.subr.mxu0 0.0
  %2563 = vmatpush1.msra.mxu0 0.0
  %2564 = vmatprep.subr.mxu0 0.0
  %2565 = vmatpush1.msra.mxu0 0.0
  %2566 = vmatprep.subr.mxu0 0.0
  %2567 = vmatpush1.msra.mxu0 0.0
  %2568 = vmatprep.subr.mxu0 0.0
  %2569 = vmatpush1.msra.mxu0 0.0
  %2570 = vmatprep.subr.mxu0 0.0
  %2571 = vmatpush1.msra.mxu0 0.0
  %2572 = vmatprep.subr.mxu0 0.0
  %2573 = vmatpush1.msra.mxu0 0.0
  %2574 = vmatprep.subr.mxu0 0.0
  %2575 = vmatpush1.msra.mxu0 0.0
  %2576 = vmatprep.subr.mxu0 0.0
  %2577 = vmatpush1.msra.mxu0 0.0
  %2578 = vmatprep.subr.mxu0 0.0
  %2579 = vmatpush1.msra.mxu0 0.0
  %2580 = vmatprep.subr.mxu0 0.0
  %2581 = vmatpush1.msra.mxu0 0.0
  %2582 = vmatprep.subr.mxu0 0.0
  %2583 = vmatpush1.msra.mxu0 0.0
  %2584 = vmatprep.subr.mxu0 0.0
  %2585 = vmatpush1.msra.mxu0 0.0
  %2586 = vmatprep.subr.mxu0 0.0
  %2587 = vmatpush1.msra.mxu0 0.0
  %2588 = vmatprep.mubr.f32.mxu0 0.0
  %2589 = vmatmul.mubr.f32.gmra.mrb[0].mxu0 %v2522
  %v2590 = vpop.f32.mrb[0].mxu0
  %v2591 = vadd.f32 0.0, %v2590
  %v2592 = vpop.f32.mrb[0].mxu0
  %v2593 = vadd.f32 0.0, %v2592
  %2594 = vdwg.mxu0
  %v2595 = vadd.f32 %v2516, %v2591
  %v2596 = vadd.f32 %v2517, %v2593
  %v2597 = vxor.u32 %v2595, 2147483648
  %v2598 = vxor.u32 %v2596, 2147483648
  %v2599 = vmul.f32 %v2597, 1.442695
  %v2600 = vpow.pop %v2599
  %v2601 = vmul.f32 %v2598, 1.442695
  %v2602 = vpow.pop %v2601
  %v2603 = vadd.f32 %v2600, 1.0
  %v2604 = vadd.f32 %v2602, 1.0
  %v2605 = vrcp.pop %v2603
  %v2606 = vmul.f32 1.0, %v2605
  %v2607 = vrcp.pop %v2604
  %v2608 = vmul.f32 1.0, %v2607
  %v2609 = vtanh.pop %v2596
  %v2611 = vrot.slane %v2503, 6
  %v2613 = vmul.f32 %v2606, %v2611
  %v2614 = vmul.f32 %v2606, %v2609
  %2616 = vrot.lane.b32.xlu0 %v2614, 64
  %v2617 = vpop.permute.xlu0 %2616
  %v2619 = vadd.f32 %v2613, %v2617
  %v2620 = vtanh.pop %v2619
  %v2621 = vmul.f32 %v2608, %v2620
  %v2622 = vld [vmem:[#allocation2 + $0x20] sm:$0xc]
  %v2623 = vld [vmem:[#allocation2 + $0x28] sm:$0xc]
  %v2624 = vld [vmem:[#allocation2 + $0x10] sm:$0x30]
  %v2625 = vld [vmem:[#allocation2 + $0x18] sm:$0x30]
  %v2628 = vrot.slane %v2624, 2
  %v2629 = vrot.slane %v2625, 2
  %v2632 = vadd.f32 %v2622, %v2628
  %v2633 = vadd.f32 %v2623, %v2629
  %2635 = vrot.lane.b32.xlu0 %v2621, 64
  %v2636 = vpop.permute.xlu0 %2635
  %v2637 = vsel %vm57, %v2636, 0
  %2639 = vmatprep.subr.mxu0 %v2019
  %2640 = vmatpush1.msra.mxu0 %v2018
  %2641 = vmatprep.subr.mxu0 %v2021
  %2642 = vmatpush1.msra.mxu0 %v2020
  %2643 = vmatprep.subr.mxu0 %v2023
  %2644 = vmatpush1.msra.mxu0 %v2022
  %2645 = vmatprep.subr.mxu0 %v2025
  %2646 = vmatpush1.msra.mxu0 %v2024
  %2647 = vmatprep.subr.mxu0 %v2027
  %2648 = vmatpush1.msra.mxu0 %v2026
  %2649 = vmatprep.subr.mxu0 %v2029
  %2650 = vmatpush1.msra.mxu0 %v2028
  %2651 = vmatprep.subr.mxu0 %v2031
  %2652 = vmatpush1.msra.mxu0 %v2030
  %2653 = vmatprep.subr.mxu0 %v2033
  %2654 = vmatpush1.msra.mxu0 %v2032
  %2655 = vmatprep.subr.mxu0 0.0
  %2656 = vmatpush1.msra.mxu0 0.0
  %2657 = vmatprep.subr.mxu0 0.0
  %2658 = vmatpush1.msra.mxu0 0.0
  %2659 = vmatprep.subr.mxu0 0.0
  %2660 = vmatpush1.msra.mxu0 0.0
  %2661 = vmatprep.subr.mxu0 0.0
  %2662 = vmatpush1.msra.mxu0 0.0
  %2663 = vmatprep.subr.mxu0 0.0
  %2664 = vmatpush1.msra.mxu0 0.0
  %2665 = vmatprep.subr.mxu0 0.0
  %2666 = vmatpush1.msra.mxu0 0.0
  %2667 = vmatprep.subr.mxu0 0.0
  %2668 = vmatpush1.msra.mxu0 0.0
  %2669 = vmatprep.subr.mxu0 0.0
  %2670 = vmatpush1.msra.mxu0 0.0
  %2671 = vmatprep.subr.mxu0 0.0
  %2672 = vmatpush1.msra.mxu0 0.0
  %2673 = vmatprep.subr.mxu0 0.0
  %2674 = vmatpush1.msra.mxu0 0.0
  %2675 = vmatprep.subr.mxu0 0.0
  %2676 = vmatpush1.msra.mxu0 0.0
  %2677 = vmatprep.subr.mxu0 0.0
  %2678 = vmatpush1.msra.mxu0 0.0
  %2679 = vmatprep.subr.mxu0 0.0
  %2680 = vmatpush1.msra.mxu0 0.0
  %2681 = vmatprep.subr.mxu0 0.0
  %2682 = vmatpush1.msra.mxu0 0.0
  %2683 = vmatprep.subr.mxu0 0.0
  %2684 = vmatpush1.msra.mxu0 0.0
  %2685 = vmatprep.subr.mxu0 0.0
  %2686 = vmatpush1.msra.mxu0 0.0
  %2687 = vmatprep.subr.mxu0 0.0
  %2688 = vmatpush1.msra.mxu0 0.0
  %2689 = vmatprep.subr.mxu0 0.0
  %2690 = vmatpush1.msra.mxu0 0.0
  %2691 = vmatprep.subr.mxu0 0.0
  %2692 = vmatpush1.msra.mxu0 0.0
  %2693 = vmatprep.subr.mxu0 0.0
  %2694 = vmatpush1.msra.mxu0 0.0
  %2695 = vmatprep.subr.mxu0 0.0
  %2696 = vmatpush1.msra.mxu0 0.0
  %2697 = vmatprep.subr.mxu0 0.0
  %2698 = vmatpush1.msra.mxu0 0.0
  %2699 = vmatprep.subr.mxu0 0.0
  %2700 = vmatpush1.msra.mxu0 0.0
  %2701 = vmatprep.subr.mxu0 0.0
  %2702 = vmatpush1.msra.mxu0 0.0
  %2703 = vmatprep.mubr.f32.mxu0 0.0
  %2704 = vmatmul.mubr.f32.gmra.mrb[0].mxu0 %v2637
  %v2705 = vpop.f32.mrb[0].mxu0
  %v2706 = vadd.f32 0.0, %v2705
  %v2707 = vpop.f32.mrb[0].mxu0
  %v2708 = vadd.f32 0.0, %v2707
  %2709 = vdwg.mxu0
  %v2712 = vrot.slane %v2706, 6
  %v2713 = vrot.slane %v2708, 6
  %v2716 = vadd.f32 %v2632, %v2712
  %v2717 = vadd.f32 %v2633, %v2713
  %v2718 = vxor.u32 %v2716, 2147483648
  %v2719 = vxor.u32 %v2717, 2147483648
  %v2720 = vmul.f32 %v2718, 1.442695
  %v2721 = vpow.pop %v2720
  %v2722 = vmul.f32 %v2719, 1.442695
  %v2723 = vpow.pop %v2722
  %v2724 = vadd.f32 %v2721, 1.0
  %v2725 = vadd.f32 %v2723, 1.0
  %v2726 = vrcp.pop %v2724
  %v2727 = vmul.f32 1.0, %v2726
  %v2728 = vrcp.pop %v2725
  %v2729 = vmul.f32 1.0, %v2728
  %v2730 = vtanh.pop %v2717
  %v2732 = vrot.slane %v2619, 6
  %v2734 = vmul.f32 %v2727, %v2732
  %v2735 = vmul.f32 %v2727, %v2730
  %2737 = vrot.lane.b32.xlu0 %v2735, 64
  %v2738 = vpop.permute.xlu0 %2737
  %v2740 = vadd.f32 %v2734, %v2738
  %v2741 = vtanh.pop %v2740
  %v2742 = vmul.f32 %v2729, %v2741
  %v2743 = vld [vmem:[#allocation2 + $0x20] sm:$0x30]
  %v2744 = vld [vmem:[#allocation2 + $0x28] sm:$0x30]
  %v2745 = vld [vmem:[#allocation2 + $0x10] sm:$0xc]
  %v2746 = vld [vmem:[#allocation2 + $0x18] sm:$0xc]
  %v2749 = vrot.slane %v2745, 6
  %v2750 = vrot.slane %v2746, 6
  %v2753 = vadd.f32 %v2743, %v2749
  %v2754 = vadd.f32 %v2744, %v2750
  %v2756 = vrot.slane %v2742, 2
  %2757 = vrot.lane.b32.xlu0 %v2756, 64
  %v2758 = vpop.permute.xlu0 %2757
  %v2759 = vsel %vm57, %v2758, 0
  %2761 = vmatprep.subr.mxu0 %v2019
  %2762 = vmatpush1.msra.mxu0 %v2018
  %2763 = vmatprep.subr.mxu0 %v2021
  %2764 = vmatpush1.msra.mxu0 %v2020
  %2765 = vmatprep.subr.mxu0 %v2023
  %2766 = vmatpush1.msra.mxu0 %v2022
  %2767 = vmatprep.subr.mxu0 %v2025
  %2768 = vmatpush1.msra.mxu0 %v2024
  %2769 = vmatprep.subr.mxu0 %v2027
  %2770 = vmatpush1.msra.mxu0 %v2026
  %2771 = vmatprep.subr.mxu0 %v2029
  %2772 = vmatpush1.msra.mxu0 %v2028
  %2773 = vmatprep.subr.mxu0 %v2031
  %2774 = vmatpush1.msra.mxu0 %v2030
  %2775 = vmatprep.subr.mxu0 %v2033
  %2776 = vmatpush1.msra.mxu0 %v2032
  %2777 = vmatprep.subr.mxu0 0.0
  %2778 = vmatpush1.msra.mxu0 0.0
  %2779 = vmatprep.subr.mxu0 0.0
  %2780 = vmatpush1.msra.mxu0 0.0
  %2781 = vmatprep.subr.mxu0 0.0
  %2782 = vmatpush1.msra.mxu0 0.0
  %2783 = vmatprep.subr.mxu0 0.0
  %2784 = vmatpush1.msra.mxu0 0.0
  %2785 = vmatprep.subr.mxu0 0.0
  %2786 = vmatpush1.msra.mxu0 0.0
  %2787 = vmatprep.subr.mxu0 0.0
  %2788 = vmatpush1.msra.mxu0 0.0
  %2789 = vmatprep.subr.mxu0 0.0
  %2790 = vmatpush1.msra.mxu0 0.0
  %2791 = vmatprep.subr.mxu0 0.0
  %2792 = vmatpush1.msra.mxu0 0.0
  %2793 = vmatprep.subr.mxu0 0.0
  %2794 = vmatpush1.msra.mxu0 0.0
  %2795 = vmatprep.subr.mxu0 0.0
  %2796 = vmatpush1.msra.mxu0 0.0
  %2797 = vmatprep.subr.mxu0 0.0
  %2798 = vmatpush1.msra.mxu0 0.0
  %2799 = vmatprep.subr.mxu0 0.0
  %2800 = vmatpush1.msra.mxu0 0.0
  %2801 = vmatprep.subr.mxu0 0.0
  %2802 = vmatpush1.msra.mxu0 0.0
  %2803 = vmatprep.subr.mxu0 0.0
  %2804 = vmatpush1.msra.mxu0 0.0
  %2805 = vmatprep.subr.mxu0 0.0
  %2806 = vmatpush1.msra.mxu0 0.0
  %2807 = vmatprep.subr.mxu0 0.0
  %2808 = vmatpush1.msra.mxu0 0.0
  %2809 = vmatprep.subr.mxu0 0.0
  %2810 = vmatpush1.msra.mxu0 0.0
  %2811 = vmatprep.subr.mxu0 0.0
  %2812 = vmatpush1.msra.mxu0 0.0
  %2813 = vmatprep.subr.mxu0 0.0
  %2814 = vmatpush1.msra.mxu0 0.0
  %2815 = vmatprep.subr.mxu0 0.0
  %2816 = vmatpush1.msra.mxu0 0.0
  %2817 = vmatprep.subr.mxu0 0.0
  %2818 = vmatpush1.msra.mxu0 0.0
  %2819 = vmatprep.subr.mxu0 0.0
  %2820 = vmatpush1.msra.mxu0 0.0
  %2821 = vmatprep.subr.mxu0 0.0
  %2822 = vmatpush1.msra.mxu0 0.0
  %2823 = vmatprep.subr.mxu0 0.0
  %2824 = vmatpush1.msra.mxu0 0.0
  %2825 = vmatprep.mubr.f32.mxu0 0.0
  %2826 = vmatmul.mubr.f32.gmra.mrb[0].mxu0 %v2759
  %v2827 = vpop.f32.mrb[0].mxu0
  %v2828 = vadd.f32 0.0, %v2827
  %v2829 = vpop.f32.mrb[0].mxu0
  %v2830 = vadd.f32 0.0, %v2829
  %2831 = vdwg.mxu0
  %v2834 = vrot.slane %v2828, 4
  %v2835 = vrot.slane %v2830, 4
  %v2838 = vadd.f32 %v2753, %v2834
  %v2839 = vadd.f32 %v2754, %v2835
  %v2840 = vxor.u32 %v2838, 2147483648
  %v2841 = vxor.u32 %v2839, 2147483648
  %v2842 = vmul.f32 %v2840, 1.442695
  %v2843 = vpow.pop %v2842
  %v2844 = vmul.f32 %v2841, 1.442695
  %v2845 = vpow.pop %v2844
  %v2846 = vadd.f32 %v2843, 1.0
  %v2847 = vadd.f32 %v2845, 1.0
  %v2848 = vrcp.pop %v2846
  %v2849 = vmul.f32 1.0, %v2848
  %v2850 = vrcp.pop %v2847
  %v2851 = vmul.f32 1.0, %v2850
  %v2852 = vtanh.pop %v2839
  %v2854 = vrot.slane %v2740, 6
  %v2856 = vmul.f32 %v2849, %v2854
  %v2857 = vmul.f32 %v2849, %v2852
  %2859 = vrot.lane.b32.xlu0 %v2857, 64
  %v2860 = vpop.permute.xlu0 %2859
  %v2862 = vadd.f32 %v2856, %v2860
  %v2863 = vtanh.pop %v2862
  %v2864 = vmul.f32 %v2851, %v2863
  %v2865 = vld [vmem:[#allocation2 + $0x20] sm:$0xc0]
  %v2866 = vld [vmem:[#allocation2 + $0x28] sm:$0xc0]
  %v2867 = vld [vmem:[#allocation2 + $0x10] sm:$0x3]
  %v2868 = vld [vmem:[#allocation2 + $0x18] sm:$0x3]
  %v2871 = vrot.slane %v2867, 2
  %v2872 = vrot.slane %v2868, 2
  %v2875 = vadd.f32 %v2865, %v2871
  %v2876 = vadd.f32 %v2866, %v2872
  %v2878 = vrot.slane %v2864, 4
  %2879 = vrot.lane.b32.xlu0 %v2878, 64
  %v2880 = vpop.permute.xlu0 %2879
  %v2881 = vsel %vm57, %v2880, 0
  %2883 = vmatprep.subr.mxu0 %v2019
  %2884 = vmatpush1.msra.mxu0 %v2018
  %2885 = vmatprep.subr.mxu0 %v2021
  %2886 = vmatpush1.msra.mxu0 %v2020
  %2887 = vmatprep.subr.mxu0 %v2023
  %2888 = vmatpush1.msra.mxu0 %v2022
  %2889 = vmatprep.subr.mxu0 %v2025
  %2890 = vmatpush1.msra.mxu0 %v2024
  %2891 = vmatprep.subr.mxu0 %v2027
  %2892 = vmatpush1.msra.mxu0 %v2026
  %2893 = vmatprep.subr.mxu0 %v2029
  %2894 = vmatpush1.msra.mxu0 %v2028
  %2895 = vmatprep.subr.mxu0 %v2031
  %2896 = vmatpush1.msra.mxu0 %v2030
  %2897 = vmatprep.subr.mxu0 %v2033
  %2898 = vmatpush1.msra.mxu0 %v2032
  %2899 = vmatprep.subr.mxu0 0.0
  %2900 = vmatpush1.msra.mxu0 0.0
  %2901 = vmatprep.subr.mxu0 0.0
  %2902 = vmatpush1.msra.mxu0 0.0
  %2903 = vmatprep.subr.mxu0 0.0
  %2904 = vmatpush1.msra.mxu0 0.0
  %2905 = vmatprep.subr.mxu0 0.0
  %2906 = vmatpush1.msra.mxu0 0.0
  %2907 = vmatprep.subr.mxu0 0.0
  %2908 = vmatpush1.msra.mxu0 0.0
  %2909 = vmatprep.subr.mxu0 0.0
  %2910 = vmatpush1.msra.mxu0 0.0
  %2911 = vmatprep.subr.mxu0 0.0
  %2912 = vmatpush1.msra.mxu0 0.0
  %2913 = vmatprep.subr.mxu0 0.0
  %2914 = vmatpush1.msra.mxu0 0.0
  %2915 = vmatprep.subr.mxu0 0.0
  %2916 = vmatpush1.msra.mxu0 0.0
  %2917 = vmatprep.subr.mxu0 0.0
  %2918 = vmatpush1.msra.mxu0 0.0
  %2919 = vmatprep.subr.mxu0 0.0
  %2920 = vmatpush1.msra.mxu0 0.0
  %2921 = vmatprep.subr.mxu0 0.0
  %2922 = vmatpush1.msra.mxu0 0.0
  %2923 = vmatprep.subr.mxu0 0.0
  %2924 = vmatpush1.msra.mxu0 0.0
  %2925 = vmatprep.subr.mxu0 0.0
  %2926 = vmatpush1.msra.mxu0 0.0
  %2927 = vmatprep.subr.mxu0 0.0
  %2928 = vmatpush1.msra.mxu0 0.0
  %2929 = vmatprep.subr.mxu0 0.0
  %2930 = vmatpush1.msra.mxu0 0.0
  %2931 = vmatprep.subr.mxu0 0.0
  %2932 = vmatpush1.msra.mxu0 0.0
  %2933 = vmatprep.subr.mxu0 0.0
  %2934 = vmatpush1.msra.mxu0 0.0
  %2935 = vmatprep.subr.mxu0 0.0
  %2936 = vmatpush1.msra.mxu0 0.0
  %2937 = vmatprep.subr.mxu0 0.0
  %2938 = vmatpush1.msra.mxu0 0.0
  %2939 = vmatprep.subr.mxu0 0.0
  %2940 = vmatpush1.msra.mxu0 0.0
  %2941 = vmatprep.subr.mxu0 0.0
  %2942 = vmatpush1.msra.mxu0 0.0
  %2943 = vmatprep.subr.mxu0 0.0
  %2944 = vmatpush1.msra.mxu0 0.0
  %2945 = vmatprep.subr.mxu0 0.0
  %2946 = vmatpush1.msra.mxu0 0.0
  %2947 = vmatprep.mubr.f32.mxu0 0.0
  %2948 = vmatmul.mubr.f32.gmra.mrb[0].mxu0 %v2881
  %v2949 = vpop.f32.mrb[0].mxu0
  %v2950 = vadd.f32 0.0, %v2949
  %v2951 = vpop.f32.mrb[0].mxu0
  %v2952 = vadd.f32 0.0, %v2951
  %2953 = vdwg.mxu0
  %v2956 = vrot.slane %v2950, 2
  %v2957 = vrot.slane %v2952, 2
  %v2960 = vadd.f32 %v2875, %v2956
  %v2961 = vadd.f32 %v2876, %v2957
  %v2962 = vxor.u32 %v2960, 2147483648
  %v2963 = vxor.u32 %v2961, 2147483648
  %v2964 = vmul.f32 %v2962, 1.442695
  %v2965 = vpow.pop %v2964
  %v2966 = vmul.f32 %v2963, 1.442695
  %v2967 = vpow.pop %v2966
  %v2968 = vadd.f32 %v2965, 1.0
  %v2969 = vadd.f32 %v2967, 1.0
  %v2970 = vrcp.pop %v2968
  %v2971 = vmul.f32 1.0, %v2970
  %v2972 = vrcp.pop %v2969
  %v2973 = vmul.f32 1.0, %v2972
  %v2974 = vtanh.pop %v2961
  %v2976 = vrot.slane %v2862, 6
  %v2978 = vmul.f32 %v2971, %v2976
  %v2979 = vmul.f32 %v2971, %v2974
  %2981 = vrot.lane.b32.xlu0 %v2979, 64
  %v2982 = vpop.permute.xlu0 %2981
  %v2984 = vadd.f32 %v2978, %v2982
  %v2985 = vtanh.pop %v2984
  %v2986 = vmul.f32 %v2973, %v2985
  %v2989 = vrot.slane %v2986, 6
  %2990 = vrot.lane.b32.xlu0 %v2989, 64
  %v2991 = vpop.permute.xlu0 %2990
  %v2993 = vsel %vm1733, %v2155, %v2991
  %2994 = vrot.lane.b32.xlu0 %v2261, 64
  %v2995 = vpop.permute.xlu0 %2994
  %v2997 = vrot.slane %v2864, 2
  %2998 = vrot.lane.b32.xlu0 %v2997, 64
  %v2999 = vpop.permute.xlu0 %2998
  %v3001 = vsel %vm1733, %v2995, %v2999
  %3002 = vrot.lane.b32.xlu0 %v2383, 64
  %v3003 = vpop.permute.xlu0 %3002
  %v3005 = vrot.slane %v2742, 6
  %3006 = vrot.lane.b32.xlu0 %v3005, 64
  %v3007 = vpop.permute.xlu0 %3006
  %v3009 = vsel %vm1733, %v3003, %v3007
  %3010 = vrot.lane.b32.xlu0 %v2505, 64
  %v3011 = vpop.permute.xlu0 %3010
  %v3013 = vrot.slane %v2621, 2
  %3014 = vrot.lane.b32.xlu0 %v3013, 64
  %v3015 = vpop.permute.xlu0 %3014
  %v3017 = vsel %vm1733, %v3011, %v3015
  %v3020 = vsel %vm1733, %v2636, %v2521
  %3021 = vrot.lane.b32.xlu0 %v2742, 64
  %v3022 = vpop.permute.xlu0 %3021
  %v3024 = vrot.slane %v2383, 2
  %3025 = vrot.lane.b32.xlu0 %v3024, 64
  %v3026 = vpop.permute.xlu0 %3025
  %v3028 = vsel %vm1733, %v3022, %v3026
  %3029 = vrot.lane.b32.xlu0 %v2864, 64
  %v3030 = vpop.permute.xlu0 %3029
  %v3032 = vrot.slane %v2261, 6
  %3033 = vrot.lane.b32.xlu0 %v3032, 64
  %v3034 = vpop.permute.xlu0 %3033
  %v3036 = vsel %vm1733, %v3030, %v3034
  %3037 = vrot.lane.b32.xlu0 %v2986, 64
  %v3038 = vpop.permute.xlu0 %3037
  %v3040 = vrot.slane %v2140, 2
  %3041 = vrot.lane.b32.xlu0 %v3040, 64
  %v3042 = vpop.permute.xlu0 %3041
  %v3044 = vsel %vm1733, %v3038, %v3042
  %v3045 = vsel %vm1786, %v2993, %v3001
  %v3046 = vsel %vm1788, %v3045, %v3009
  %v3047 = vsel %vm1790, %v3046, %v3017
  %v3048 = vsel %vm1786, %v3020, %v3028
  %v3049 = vsel %vm1788, %v3048, %v3036
  %v3050 = vsel %vm1790, %v3049, %v3044
  %v3051 = vld [vmem:[%s6] sm:$0xff]
  %v3052 = vld [vmem:[%s6 + $0x8] sm:$0xff]
  %v3053 = vld [vmem:[%s6 + $0x10] sm:$0xff]
  %v3054 = vld [vmem:[%s6 + $0x18] sm:$0xff]
  %v3055 = vld [vmem:[%s6 + $0x20] sm:$0xff]
  %v3056 = vld [vmem:[%s6 + $0x28] sm:$0xff]
  %v3057 = vld [vmem:[%s6 + $0x30] sm:$0xff]
  %v3058 = vld [vmem:[%s6 + $0x38] sm:$0xff]
  %v3059 = vld [vmem:[%s7 + $0x2] ss:$0 sm:$0xff]
  %v3061 = vsel %vm57, %v3047, 0
  %v3064 = vsel %vm57, %v3050, 0
  %3066 = vmatprep.subr.mxu0 0.0
  %3067 = vmatpush1.msra.mxu0 %v3051
  %3068 = vmatprep.subr.mxu0 0.0
  %3069 = vmatpush1.msra.mxu0 %v3052
  %3070 = vmatprep.subr.mxu0 0.0
  %3071 = vmatpush1.msra.mxu0 %v3053
  %3072 = vmatprep.subr.mxu0 0.0
  %3073 = vmatpush1.msra.mxu0 %v3054
  %3074 = vmatprep.subr.mxu0 0.0
  %3075 = vmatpush1.msra.mxu0 %v3055
  %3076 = vmatprep.subr.mxu0 0.0
  %3077 = vmatpush1.msra.mxu0 %v3056
  %3078 = vmatprep.subr.mxu0 0.0
  %3079 = vmatpush1.msra.mxu0 %v3057
  %3080 = vmatprep.subr.mxu0 0.0
  %3081 = vmatpush1.msra.mxu0 %v3058
  %3082 = vmatprep.subr.mxu0 0.0
  %3083 = vmatpush1.msra.mxu0 0.0
  %3084 = vmatprep.subr.mxu0 0.0
  %3085 = vmatpush1.msra.mxu0 0.0
  %3086 = vmatprep.subr.mxu0 0.0
  %3087 = vmatpush1.msra.mxu0 0.0
  %3088 = vmatprep.subr.mxu0 0.0
  %3089 = vmatpush1.msra.mxu0 0.0
  %3090 = vmatprep.subr.mxu0 0.0
  %3091 = vmatpush1.msra.mxu0 0.0
  %3092 = vmatprep.subr.mxu0 0.0
  %3093 = vmatpush1.msra.mxu0 0.0
  %3094 = vmatprep.subr.mxu0 0.0
  %3095 = vmatpush1.msra.mxu0 0.0
  %3096 = vmatprep.subr.mxu0 0.0
  %3097 = vmatpush1.msra.mxu0 0.0
  %3098 = vmatprep.subr.mxu0 0.0
  %3099 = vmatpush1.msra.mxu0 0.0
  %3100 = vmatprep.subr.mxu0 0.0
  %3101 = vmatpush1.msra.mxu0 0.0
  %3102 = vmatprep.subr.mxu0 0.0
  %3103 = vmatpush1.msra.mxu0 0.0
  %3104 = vmatprep.subr.mxu0 0.0
  %3105 = vmatpush1.msra.mxu0 0.0
  %3106 = vmatprep.subr.mxu0 0.0
  %3107 = vmatpush1.msra.mxu0 0.0
  %3108 = vmatprep.subr.mxu0 0.0
  %3109 = vmatpush1.msra.mxu0 0.0
  %3110 = vmatprep.subr.mxu0 0.0
  %3111 = vmatpush1.msra.mxu0 0.0
  %3112 = vmatprep.subr.mxu0 0.0
  %3113 = vmatpush1.msra.mxu0 0.0
  %3114 = vmatprep.subr.mxu0 0.0
  %3115 = vmatpush1.msra.mxu0 0.0
  %3116 = vmatprep.subr.mxu0 0.0
  %3117 = vmatpush1.msra.mxu0 0.0
  %3118 = vmatprep.subr.mxu0 0.0
  %3119 = vmatpush1.msra.mxu0 0.0
  %3120 = vmatprep.subr.mxu0 0.0
  %3121 = vmatpush1.msra.mxu0 0.0
  %3122 = vmatprep.subr.mxu0 0.0
  %3123 = vmatpush1.msra.mxu0 0.0
  %3124 = vmatprep.subr.mxu0 0.0
  %3125 = vmatpush1.msra.mxu0 0.0
  %3126 = vmatprep.subr.mxu0 0.0
  %3127 = vmatpush1.msra.mxu0 0.0
  %3128 = vmatprep.subr.mxu0 0.0
  %3129 = vmatpush1.msra.mxu0 0.0
  %3130 = vmatprep.mubr.f32.mxu0 0.0
  %3131 = vmatmul.mubr.f32.gmra.mrb[0].mxu0 %v3061
  %v3132 = vpop.f32.mrb[0].mxu0
  %v3133 = vadd.f32 %v3059, %v3132
  %v3134 = vpop.f32.mrb[0].mxu0
  %3135 = vmatprep.mubr.f32.mxu0 0.0
  %3136 = vmatmul.mubr.f32.gmra.mrb[0].mxu0 %v3064
  %v3137 = vpop.f32.mrb[0].mxu0
  %v3138 = vadd.f32 %v3059, %v3137
  %v3139 = vpop.f32.mrb[0].mxu0
  %3140 = vdwg.mxu0
  %v3141 = vld [vmem:[%s6 + $0x40] sm:$0xff]
  %v3142 = vld [vmem:[%s6 + $0x48] sm:$0xff]
  %v3143 = vld [vmem:[%s6 + $0x50] sm:$0xff]
  %v3144 = vld [vmem:[%s6 + $0x58] sm:$0xff]
  %v3145 = vld [vmem:[%s6 + $0x60] sm:$0xff]
  %v3146 = vld [vmem:[%s6 + $0x68] sm:$0xff]
  %v3147 = vld [vmem:[%s6 + $0x70] sm:$0xff]
  %v3148 = vld [vmem:[%s6 + $0x78] sm:$0xff]
  %v3149 = vld [vmem:[%s6 + $0x80] sm:$0xff]
  %v3150 = vld [vmem:[%s6 + $0x88] sm:$0xff]
  %v3151 = vld [vmem:[%s6 + $0x90] sm:$0xff]
  %v3152 = vld [vmem:[%s6 + $0x98] sm:$0xff]
  %v3153 = vld [vmem:[%s6 + $0xa0] sm:$0xff]
  %v3154 = vld [vmem:[%s6 + $0xa8] sm:$0xff]
  %v3155 = vld [vmem:[%s6 + $0xb0] sm:$0xff]
  %v3156 = vld [vmem:[%s6 + $0xb8] sm:$0xff]
  %v3157 = vld [vmem:[%s7 + $0x3] ss:$0 sm:$0xff]
  %3158 = vmatprep.subr.mxu0 0.0
  %3159 = vmatpush1.msra.mxu0 %v3141
  %3160 = vmatprep.subr.mxu0 0.0
  %3161 = vmatpush1.msra.mxu0 %v3142
  %3162 = vmatprep.subr.mxu0 0.0
  %3163 = vmatpush1.msra.mxu0 %v3143
  %3164 = vmatprep.subr.mxu0 0.0
  %3165 = vmatpush1.msra.mxu0 %v3144
  %3166 = vmatprep.subr.mxu0 0.0
  %3167 = vmatpush1.msra.mxu0 %v3145
  %3168 = vmatprep.subr.mxu0 0.0
  %3169 = vmatpush1.msra.mxu0 %v3146
  %3170 = vmatprep.subr.mxu0 0.0
  %3171 = vmatpush1.msra.mxu0 %v3147
  %3172 = vmatprep.subr.mxu0 0.0
  %3173 = vmatpush1.msra.mxu0 %v3148
  %3174 = vmatprep.subr.mxu0 0.0
  %3175 = vmatpush1.msra.mxu0 %v3149
  %3176 = vmatprep.subr.mxu0 0.0
  %3177 = vmatpush1.msra.mxu0 %v3150
  %3178 = vmatprep.subr.mxu0 0.0
  %3179 = vmatpush1.msra.mxu0 %v3151
  %3180 = vmatprep.subr.mxu0 0.0
  %3181 = vmatpush1.msra.mxu0 %v3152
  %3182 = vmatprep.subr.mxu0 0.0
  %3183 = vmatpush1.msra.mxu0 %v3153
  %3184 = vmatprep.subr.mxu0 0.0
  %3185 = vmatpush1.msra.mxu0 %v3154
  %3186 = vmatprep.subr.mxu0 0.0
  %3187 = vmatpush1.msra.mxu0 %v3155
  %3188 = vmatprep.subr.mxu0 0.0
  %3189 = vmatpush1.msra.mxu0 %v3156
  %3190 = vmatprep.subr.mxu0 0.0
  %3191 = vmatpush1.msra.mxu0 0.0
  %3192 = vmatprep.subr.mxu0 0.0
  %3193 = vmatpush1.msra.mxu0 0.0
  %3194 = vmatprep.subr.mxu0 0.0
  %3195 = vmatpush1.msra.mxu0 0.0
  %3196 = vmatprep.subr.mxu0 0.0
  %3197 = vmatpush1.msra.mxu0 0.0
  %3198 = vmatprep.subr.mxu0 0.0
  %3199 = vmatpush1.msra.mxu0 0.0
  %3200 = vmatprep.subr.mxu0 0.0
  %3201 = vmatpush1.msra.mxu0 0.0
  %3202 = vmatprep.subr.mxu0 0.0
  %3203 = vmatpush1.msra.mxu0 0.0
  %3204 = vmatprep.subr.mxu0 0.0
  %3205 = vmatpush1.msra.mxu0 0.0
  %3206 = vmatprep.subr.mxu0 0.0
  %3207 = vmatpush1.msra.mxu0 0.0
  %3208 = vmatprep.subr.mxu0 0.0
  %3209 = vmatpush1.msra.mxu0 0.0
  %3210 = vmatprep.subr.mxu0 0.0
  %3211 = vmatpush1.msra.mxu0 0.0
  %3212 = vmatprep.subr.mxu0 0.0
  %3213 = vmatpush1.msra.mxu0 0.0
  %3214 = vmatprep.subr.mxu0 0.0
  %3215 = vmatpush1.msra.mxu0 0.0
  %3216 = vmatprep.subr.mxu0 0.0
  %3217 = vmatpush1.msra.mxu0 0.0
  %3218 = vmatprep.subr.mxu0 0.0
  %3219 = vmatpush1.msra.mxu0 0.0
  %3220 = vmatprep.subr.mxu0 0.0
  %3221 = vmatpush1.msra.mxu0 0.0
  %3222 = vmatprep.mubr.f32.mxu0 0.0
  %3223 = vmatmul.mubr.f32.gmra.mrb[0].mxu0 %v3133
  %v3224 = vpop.f32.mrb[0].mxu0
  %v3225 = vadd.f32 %v3157, %v3224
  %v3226 = vpop.f32.mrb[0].mxu0
  %3227 = vmatprep.mubr.f32.mxu0 0.0
  %3228 = vmatmul.mubr.f32.gmra.mrb[0].mxu0 %v3138
  %v3229 = vpop.f32.mrb[0].mxu0
  %v3230 = vadd.f32 %v3157, %v3229
  %v3231 = vpop.f32.mrb[0].mxu0
  %3232 = vdwg.mxu0
  %3233 = vst [vmem:[%s8] sm:$0xff] %v3225
  %3234 = vst [vmem:[%s8 + $0x8] sm:$0xff] %v3230
  // Predicated region
  $region34: #{entity_extraction_forward.1} parent=0 // pred_check
    _
  $region35: #{entity_extraction_forward.1} parent=0 // pred_check_branch
    %3236 = sbr.rel (0) target = $region37
  $region36: #{entity_extraction_forward.1} parent=0 // pred_region
    _
  $region37: #{entity_extraction_forward.1} parent=0 // pred_fallthru
    _
  // Predicated region
  $region38: #{entity_extraction_forward.1} parent=0 // pred_check
    _
  $region39: #{entity_extraction_forward.1} parent=0 // pred_check_branch
    %3238 = sbr.rel (0) target = $region41
  $region40: #{entity_extraction_forward.1} parent=0 // pred_region
    _
  $region41: #{entity_extraction_forward.1} parent=0 // pred_fallthru
    _

</llo_original>
